<compile_context>
chip_gen: v7x
topology: tpu7x:2x2x1
jax: 0.10.0
libtpu: 0.0.40
codegen_flags: <defaults>
</compile_context>

<pallas_src>
import functools
import math

import jax
import jax.numpy as jnp
from jax.experimental import pallas as pl
from jax.experimental.pallas import tpu as pltpu

# ---- small synthetic BERT config ----
VOCAB = 128
HIDDEN = 32
N_LAYERS = 2
N_HEADS = 4
HEAD_DIM = HIDDEN // N_HEADS
INTERMEDIATE = 64
MAX_POS = 16
TYPE_VOCAB = 2
LN_EPS = 1e-12
B = 2
S = 8
LANES = 128


# --------------------------- weight-slab layout --------------------------------

def _round8(n):
    return (n + 7) // 8 * 8


def _build_layout():
    """Static layout of every parameter inside the packed [R, 128] slab."""
    layout = {}
    cur = 0

    def add(name, rows, cols):
        nonlocal cur
        layout[name] = (cur, rows, cols)
        cur += _round8(rows)          # keep every section sublane-aligned

    H, I = HIDDEN, INTERMEDIATE
    add("word_emb", VOCAB, H)
    add("pos_emb", MAX_POS, H)
    add("type_emb", TYPE_VOCAB, H)
    add("emb_ln_g", 1, H)
    add("emb_ln_b", 1, H)
    for l in range(N_LAYERS):
        add(f"wqkv{l}", H, 3 * H)
        add(f"bqkv{l}", 1, 3 * H)
        add(f"wo{l}", H, H)
        add(f"bo{l}", 1, H)
        add(f"ln1_g{l}", 1, H)
        add(f"ln1_b{l}", 1, H)
        add(f"w1{l}", H, I)
        add(f"b1{l}", 1, I)
        add(f"w2{l}", I, H)
        add(f"b2{l}", 1, H)
        add(f"ln2_g{l}", 1, H)
        add(f"ln2_b{l}", 1, H)
    add("pool_w", H, H)
    add("pool_b", 1, H)
    return layout, _round8(cur)


_LAYOUT, _SLAB_ROWS = _build_layout()


# --------------------------- fused Pallas kernel --------------------------------

def _layernorm(x, g, b, eps=LN_EPS):
    mu = jnp.mean(x, axis=-1, keepdims=True)
    var = jnp.mean(jnp.square(x - mu), axis=-1, keepdims=True)
    return (x - mu) * jax.lax.rsqrt(var + eps) * g + b


def _gelu(x):
    # TODO(synk): HF's exact erf-GELU needs lax.erf, which does not lower
    # reliably in Mosaic; use the tanh approximation (BERT "gelu_new").
    c = math.sqrt(2.0 / math.pi)
    return 0.5 * x * (1.0 + jnp.tanh(c * (x + 0.044715 * x * x * x)))


def _bert_fused_kernel(ids_ref, mask_ref, w_ref,
                       hidden_out_ref, pooled_out_ref,
                       *, batch, seq, n_layers, n_heads, head_dim, vocab, layout):
    hidden = n_heads * head_dim
    tokens = batch * seq
    scale = 1.0 / math.sqrt(head_dim)

    def get(name):
        r0, rows, cols = layout[name]
        return w_ref[r0:r0 + rows, 0:cols]          # static slice: free view

    # ---- embeddings: gather as a one-hot MXU matmul, done fully in-kernel ----
    ids = ids_ref[...]                                            # [T, 1] int32
    iota = jax.lax.broadcasted_iota(jnp.int32, (tokens, vocab), 1)
    onehot = (iota == ids).astype(jnp.float32)                    # [T, vocab]
    word_e = jnp.dot(onehot, get("word_emb"),
                     preferred_element_type=jnp.float32)          # [T, H]
    pos_rows = get("pos_emb")[0:seq, :]                           # [S, H]
    pos_e = jnp.concatenate([pos_rows] * batch, axis=0)           # [T, H]
    type_e = get("type_emb")[0:1, :]                              # token_type_ids == 0
    h = _layernorm(word_e + pos_e + type_e, get("emb_ln_g"), get("emb_ln_b"))

    # ---- attention-mask bias, built once and shared by all layers/heads ----
    maskf = mask_ref[...].astype(jnp.float32)                     # [B, S]
    bias = ((1.0 - maskf) * -10000.0)[:, None, :]                 # [B, 1, S]
    bias_hb = jnp.concatenate([bias] * n_heads, axis=0)           # [nH*B, 1, S]

    for layer in range(n_layers):
        # ---- self-attention: fused QKV projection (single MXU pass, N = 3H) ----
        qkv = (jnp.dot(h, get(f"wqkv{layer}"),
                       preferred_element_type=jnp.float32)
               + get(f"bqkv{layer}"))                             # [T, 3H]

        def split_heads(block):
            # -> [nH*B, S, Dh], batch index = head * B + b
            parts = []
            for hd in range(n_heads):
                off = block * hidden + hd * head_dim
                parts.append(qkv[:, off:off + head_dim]
                             .reshape(batch, seq, head_dim))
            return jnp.concatenate(parts, axis=0)

        q_h = split_heads(0)
        k_h = split_heads(1)
        v_h = split_heads(2)

        # batched scores / softmax / context over all (head, batch) at once
        s = jnp.einsum("bqd,bkd->bqk", q_h, k_h,
                       preferred_element_type=jnp.float32) * scale + bias_hb
        m = jnp.max(s, axis=-1, keepdims=True)
        p = jnp.exp(s - m)
        p = p * pl.reciprocal(jnp.sum(p, axis=-1, keepdims=True), approx=True)
        ctx = jnp.einsum("bqk,bkd->bqd", p, v_h,
                         preferred_element_type=jnp.float32)      # [nH*B, S, Dh]

        # merge heads back along the hidden axis, then ONE output projection
        merged = jnp.concatenate(
            [ctx[hd * batch:(hd + 1) * batch].reshape(tokens, head_dim)
             for hd in range(n_heads)], axis=-1)                  # [T, H]
        attn = (jnp.dot(merged, get(f"wo{layer}"),
                        preferred_element_type=jnp.float32)
                + get(f"bo{layer}"))
        h = _layernorm(attn + h, get(f"ln1_g{layer}"), get(f"ln1_b{layer}"))

        # ---- feed-forward ----
        ffn = (jnp.dot(h, get(f"w1{layer}"),
                       preferred_element_type=jnp.float32)
               + get(f"b1{layer}"))
        ffn = _gelu(ffn)
        ffn = (jnp.dot(ffn, get(f"w2{layer}"),
                       preferred_element_type=jnp.float32)
               + get(f"b2{layer}"))
        h = _layernorm(ffn + h, get(f"ln2_g{layer}"), get(f"ln2_b{layer}"))

    # [B*S, H] slab written once at the end.
    hidden_out_ref[...] = h.astype(hidden_out_ref.dtype)

    # ---- pooler: tanh(CLS @ Wp + bp); CLS rows are still resident in VMEM ----
    cls = jnp.concatenate([h[b * seq:b * seq + 1, :] for b in range(batch)],
                          axis=0)                                 # [B, H]
    pooled = jnp.tanh(
        jnp.dot(cls, get("pool_w"), preferred_element_type=jnp.float32)
        + get("pool_b"))
    pooled_out_ref[...] = pooled.astype(pooled_out_ref.dtype)


# --------------------------- parameters (packed once, outside jit) --------------

def init_packed_params(key):
    keys = iter(jax.random.split(key, 64))

    def w(shape):
        return 0.02 * jax.random.normal(next(keys), shape, dtype=jnp.float32)

    H, I = HIDDEN, INTERMEDIATE
    p = {
        "word_emb": w((VOCAB, H)),
        "pos_emb": w((MAX_POS, H)),
        "type_emb": w((TYPE_VOCAB, H)),
        "emb_ln_g": jnp.ones((1, H), jnp.float32),
        "emb_ln_b": jnp.zeros((1, H), jnp.float32),
        "pool_w": w((H, H)),
        "pool_b": jnp.zeros((1, H), jnp.float32),
    }
    for l in range(N_LAYERS):
        p[f"wqkv{l}"] = w((H, 3 * H))
        p[f"bqkv{l}"] = jnp.zeros((1, 3 * H), jnp.float32)
        p[f"wo{l}"] = w((H, H))
        p[f"bo{l}"] = jnp.zeros((1, H), jnp.float32)
        p[f"ln1_g{l}"] = jnp.ones((1, H), jnp.float32)
        p[f"ln1_b{l}"] = jnp.zeros((1, H), jnp.float32)
        p[f"w1{l}"] = w((H, I))
        p[f"b1{l}"] = jnp.zeros((1, I), jnp.float32)
        p[f"w2{l}"] = w((I, H))
        p[f"b2{l}"] = jnp.zeros((1, H), jnp.float32)
        p[f"ln2_g{l}"] = jnp.ones((1, H), jnp.float32)
        p[f"ln2_b{l}"] = jnp.zeros((1, H), jnp.float32)

    slab = jnp.zeros((_SLAB_ROWS, LANES), jnp.float32)
    for name, (r0, rows, cols) in _LAYOUT.items():
        slab = slab.at[r0:r0 + rows, 0:cols].set(p[name])
    return slab


# --------------------------- model forward --------------------------------------

def _full_spec(shape):
    zeros = (0,) * len(shape)
    return pl.BlockSpec(shape, lambda i, _z=zeros: _z)


def bert_with_pooler_forward(weight_slab, input_ids, attention_mask):
    """Returns (last_hidden_state [B,S,H], pooler_output [B,H])."""
    Bsz, Ssz = input_ids.shape
    ids_flat = input_ids.reshape(Bsz * Ssz, 1).astype(jnp.int32)
    mask = attention_mask.astype(jnp.int32)

    kernel = functools.partial(
        _bert_fused_kernel,
        batch=Bsz, seq=Ssz, n_layers=N_LAYERS,
        n_heads=N_HEADS, head_dim=HEAD_DIM, vocab=VOCAB, layout=_LAYOUT)

    hidden_flat, pooled = pl.pallas_call(
        kernel,
        out_shape=(jax.ShapeDtypeStruct((Bsz * Ssz, HIDDEN), jnp.float32),
                   jax.ShapeDtypeStruct((Bsz, HIDDEN), jnp.float32)),
        grid=(1,),
        in_specs=[_full_spec(ids_flat.shape),
                  _full_spec(mask.shape),
                  _full_spec(weight_slab.shape)],
        out_specs=(_full_spec((Bsz * Ssz, HIDDEN)),
                   _full_spec((Bsz, HIDDEN))),
        compiler_params=pltpu.CompilerParams(
            dimension_semantics=("arbitrary",)),
    )(ids_flat, mask, weight_slab)

    return hidden_flat.reshape(Bsz, Ssz, HIDDEN), pooled


# --------------------------- main ------------------------------------------------

if __name__ == "__main__":
    key = jax.random.PRNGKey(0)
    pkey, ikey = jax.random.split(key)
    weight_slab = init_packed_params(pkey)

    input_ids = jax.random.randint(ikey, (B, S), 0, VOCAB, dtype=jnp.int32)
    attention_mask = jnp.array([[1] * S,
                                [1] * 6 + [0] * 2], dtype=jnp.int32)

    fwd = jax.jit(bert_with_pooler_forward)
    last_hidden, pooled = fwd(weight_slab, input_ids, attention_mask)
    jax.block_until_ready((last_hidden, pooled))

    assert last_hidden.shape == (B, S, HIDDEN)
    assert pooled.shape == (B, HIDDEN)
    print("KERNEL_OK")
</pallas_src>

<mosaic_0001>
module attributes {stable_mosaic.version = 11 : i64} {
  func.func @_bert_fused_kernel(%arg0: i32, %arg1: memref<16x1xi32, #tpu.memory_space<vmem>>, %arg2: memref<2x8xi32, #tpu.memory_space<vmem>>, %arg3: memref<656x128xf32, #tpu.memory_space<vmem>>, %arg4: memref<16x32xf32, #tpu.memory_space<vmem>>, %arg5: memref<2x32xf32, #tpu.memory_space<vmem>>) attributes {dimension_semantics = [#tpu.dimension_semantics<arbitrary>], iteration_bounds = array<i64: 1>, scalar_prefetch = 0 : i64, scratch_operands = 0 : i64, tpu.core_type = #tpu.core_type<tc>, window_params = [{pipeline_mode = #tpu.pipeline_mode<synchronous>, transform_indices = @transform_0, window_bounds = array<i64: 16, 1>}, {pipeline_mode = #tpu.pipeline_mode<synchronous>, transform_indices = @transform_1, window_bounds = array<i64: 2, 8>}, {pipeline_mode = #tpu.pipeline_mode<synchronous>, transform_indices = @transform_2, window_bounds = array<i64: 656, 128>}, {pipeline_mode = #tpu.pipeline_mode<synchronous>, transform_indices = @transform_3, window_bounds = array<i64: 16, 32>}, {pipeline_mode = #tpu.pipeline_mode<synchronous>, transform_indices = @transform_4, window_bounds = array<i64: 2, 32>}]} {
    %c0 = arith.constant 0 : index
    %c0_0 = arith.constant 0 : index
    %0 = vector.load %arg1[%c0, %c0_0] : memref<16x1xi32, #tpu.memory_space<vmem>>, vector<16x1xi32>
    %1 = tpu.iota {dimensions = array<i32: 1>} : vector<16x128xi32>
    %2 = vector.broadcast %0 : vector<16x1xi32> to vector<16x128xi32>
    %3 = arith.cmpi eq, %1, %2 : vector<16x128xi32>
    %4 = arith.extui %3 : vector<16x128xi1> to vector<16x128xi32>
    %5 = arith.sitofp %4 : vector<16x128xi32> to vector<16x128xf32>
    %c0_1 = arith.constant 0 : index
    %c0_2 = arith.constant 0 : index
    %6 = vector.load %arg3[%c0_1, %c0_2] : memref<656x128xf32, #tpu.memory_space<vmem>>, vector<128x32xf32>
    %cst = arith.constant dense<0.000000e+00> : vector<16x32xf32>
    %7 = tpu.matmul %5, %6, %cst {dimension_numbers = #tpu.dot_dimension_numbers<[1], [0], [0], [1], [0, 0, 1, 1], [], []>} : vector<16x128xf32>, vector<128x32xf32>, vector<16x32xf32> -> vector<16x32xf32>
    %c128 = arith.constant 128 : index
    %c0_3 = arith.constant 0 : index
    %8 = vector.load %arg3[%c128, %c0_3] : memref<656x128xf32, #tpu.memory_space<vmem>>, vector<16x32xf32>
    %9 = vector.extract_strided_slice %8 {offsets = [0, 0], sizes = [8, 32], strides = [1, 1]} : vector<16x32xf32> to vector<8x32xf32>
    %10 = tpu.concatenate %9, %9 in 0 : vector<8x32xf32>, vector<8x32xf32> -> vector<16x32xf32>
    %c144 = arith.constant 144 : index
    %c0_4 = arith.constant 0 : index
    %11 = vector.load %arg3[%c144, %c0_4] : memref<656x128xf32, #tpu.memory_space<vmem>>, vector<2x32xf32>
    %12 = vector.extract_strided_slice %11 {offsets = [0, 0], sizes = [1, 32], strides = [1, 1]} : vector<2x32xf32> to vector<1x32xf32>
    %13 = arith.addf %7, %10 : vector<16x32xf32>
    %14 = vector.broadcast %12 : vector<1x32xf32> to vector<16x32xf32>
    %15 = arith.addf %13, %14 : vector<16x32xf32>
    %c152 = arith.constant 152 : index
    %c0_5 = arith.constant 0 : index
    %16 = vector.load %arg3[%c152, %c0_5] : memref<656x128xf32, #tpu.memory_space<vmem>>, vector<1x32xf32>
    %c160 = arith.constant 160 : index
    %c0_6 = arith.constant 0 : index
    %17 = vector.load %arg3[%c160, %c0_6] : memref<656x128xf32, #tpu.memory_space<vmem>>, vector<1x32xf32>
    %cst_7 = arith.constant dense<0.000000e+00> : vector<16xf32>
    %18 = vector.multi_reduction <add>, %15, %cst_7 [1] : vector<16x32xf32> to vector<16xf32>
    %19 = vector.shape_cast %18 : vector<16xf32> to vector<16x1xf32>
    %cst_8 = arith.constant 3.200000e+01 : f32
    %20 = vector.broadcast %cst_8 : f32 to vector<16x1xf32>
    %21 = arith.divf %19, %20 : vector<16x1xf32>
    %22 = vector.broadcast %21 : vector<16x1xf32> to vector<16x32xf32>
    %23 = arith.subf %15, %22 : vector<16x32xf32>
    %24 = arith.mulf %23, %23 : vector<16x32xf32>
    %cst_9 = arith.constant dense<0.000000e+00> : vector<16xf32>
    %25 = vector.multi_reduction <add>, %24, %cst_9 [1] : vector<16x32xf32> to vector<16xf32>
    %26 = vector.shape_cast %25 : vector<16xf32> to vector<16x1xf32>
    %cst_10 = arith.constant 3.200000e+01 : f32
    %27 = vector.broadcast %cst_10 : f32 to vector<16x1xf32>
    %28 = arith.divf %26, %27 : vector<16x1xf32>
    %29 = vector.broadcast %21 : vector<16x1xf32> to vector<16x32xf32>
    %30 = arith.subf %15, %29 : vector<16x32xf32>
    %cst_11 = arith.constant 9.99999996E-13 : f32
    %31 = vector.broadcast %cst_11 : f32 to vector<16x1xf32>
    %32 = arith.addf %28, %31 : vector<16x1xf32>
    %33 = math.rsqrt %32 : vector<16x1xf32>
    %34 = vector.broadcast %33 : vector<16x1xf32> to vector<16x32xf32>
    %35 = arith.mulf %30, %34 : vector<16x32xf32>
    %36 = vector.broadcast %16 : vector<1x32xf32> to vector<16x32xf32>
    %37 = arith.mulf %35, %36 : vector<16x32xf32>
    %38 = vector.broadcast %17 : vector<1x32xf32> to vector<16x32xf32>
    %39 = arith.addf %37, %38 : vector<16x32xf32>
    %c0_12 = arith.constant 0 : index
    %c0_13 = arith.constant 0 : index
    %40 = vector.load %arg2[%c0_12, %c0_13] : memref<2x8xi32, #tpu.memory_space<vmem>>, vector<2x8xi32>
    %41 = arith.sitofp %40 : vector<2x8xi32> to vector<2x8xf32>
    %cst_14 = arith.constant 1.000000e+00 : f32
    %42 = vector.broadcast %cst_14 : f32 to vector<2x8xf32>
    %43 = arith.subf %42, %41 : vector<2x8xf32>
    %cst_15 = arith.constant -1.000000e+04 : f32
    %44 = vector.broadcast %cst_15 : f32 to vector<2x8xf32>
    %45 = arith.mulf %43, %44 : vector<2x8xf32>
    %46 = vector.shape_cast %45 : vector<2x8xf32> to vector<2x1x8xf32>
    %47 = tpu.concatenate %46, %46, %46, %46 in 0 : vector<2x1x8xf32>, vector<2x1x8xf32>, vector<2x1x8xf32>, vector<2x1x8xf32> -> vector<8x1x8xf32>
    %c168 = arith.constant 168 : index
    %c0_16 = arith.constant 0 : index
    %48 = vector.load %arg3[%c168, %c0_16] : memref<656x128xf32, #tpu.memory_space<vmem>>, vector<32x96xf32>
    %cst_17 = arith.constant dense<0.000000e+00> : vector<16x96xf32>
    %49 = tpu.matmul %39, %48, %cst_17 {dimension_numbers = #tpu.dot_dimension_numbers<[1], [0], [0], [1], [0, 0, 1, 1], [], []>} : vector<16x32xf32>, vector<32x96xf32>, vector<16x96xf32> -> vector<16x96xf32>
    %c200 = arith.constant 200 : index
    %c0_18 = arith.constant 0 : index
    %50 = vector.load %arg3[%c200, %c0_18] : memref<656x128xf32, #tpu.memory_space<vmem>>, vector<1x96xf32>
    %51 = vector.broadcast %50 : vector<1x96xf32> to vector<16x96xf32>
    %52 = arith.addf %49, %51 : vector<16x96xf32>
    %53 = vector.extract_strided_slice %52 {offsets = [0, 0], sizes = [16, 8], strides = [1, 1]} : vector<16x96xf32> to vector<16x8xf32>
    %54 = vector.shape_cast %53 : vector<16x8xf32> to vector<2x8x8xf32>
    %55 = vector.extract_strided_slice %52 {offsets = [0, 8], sizes = [16, 8], strides = [1, 1]} : vector<16x96xf32> to vector<16x8xf32>
    %56 = vector.shape_cast %55 : vector<16x8xf32> to vector<2x8x8xf32>
    %57 = vector.extract_strided_slice %52 {offsets = [0, 16], sizes = [16, 8], strides = [1, 1]} : vector<16x96xf32> to vector<16x8xf32>
    %58 = vector.shape_cast %57 : vector<16x8xf32> to vector<2x8x8xf32>
    %59 = vector.extract_strided_slice %52 {offsets = [0, 24], sizes = [16, 8], strides = [1, 1]} : vector<16x96xf32> to vector<16x8xf32>
    %60 = vector.shape_cast %59 : vector<16x8xf32> to vector<2x8x8xf32>
    %61 = tpu.concatenate %54, %56, %58, %60 in 0 : vector<2x8x8xf32>, vector<2x8x8xf32>, vector<2x8x8xf32>, vector<2x8x8xf32> -> vector<8x8x8xf32>
    %62 = vector.extract_strided_slice %52 {offsets = [0, 32], sizes = [16, 8], strides = [1, 1]} : vector<16x96xf32> to vector<16x8xf32>
    %63 = vector.shape_cast %62 : vector<16x8xf32> to vector<2x8x8xf32>
    %64 = vector.extract_strided_slice %52 {offsets = [0, 40], sizes = [16, 8], strides = [1, 1]} : vector<16x96xf32> to vector<16x8xf32>
    %65 = vector.shape_cast %64 : vector<16x8xf32> to vector<2x8x8xf32>
    %66 = vector.extract_strided_slice %52 {offsets = [0, 48], sizes = [16, 8], strides = [1, 1]} : vector<16x96xf32> to vector<16x8xf32>
    %67 = vector.shape_cast %66 : vector<16x8xf32> to vector<2x8x8xf32>
    %68 = vector.extract_strided_slice %52 {offsets = [0, 56], sizes = [16, 8], strides = [1, 1]} : vector<16x96xf32> to vector<16x8xf32>
    %69 = vector.shape_cast %68 : vector<16x8xf32> to vector<2x8x8xf32>
    %70 = tpu.concatenate %63, %65, %67, %69 in 0 : vector<2x8x8xf32>, vector<2x8x8xf32>, vector<2x8x8xf32>, vector<2x8x8xf32> -> vector<8x8x8xf32>
    %71 = vector.extract_strided_slice %52 {offsets = [0, 64], sizes = [16, 8], strides = [1, 1]} : vector<16x96xf32> to vector<16x8xf32>
    %72 = vector.shape_cast %71 : vector<16x8xf32> to vector<2x8x8xf32>
    %73 = vector.extract_strided_slice %52 {offsets = [0, 72], sizes = [16, 8], strides = [1, 1]} : vector<16x96xf32> to vector<16x8xf32>
    %74 = vector.shape_cast %73 : vector<16x8xf32> to vector<2x8x8xf32>
    %75 = vector.extract_strided_slice %52 {offsets = [0, 80], sizes = [16, 8], strides = [1, 1]} : vector<16x96xf32> to vector<16x8xf32>
    %76 = vector.shape_cast %75 : vector<16x8xf32> to vector<2x8x8xf32>
    %77 = vector.extract_strided_slice %52 {offsets = [0, 88], sizes = [16, 8], strides = [1, 1]} : vector<16x96xf32> to vector<16x8xf32>
    %78 = vector.shape_cast %77 : vector<16x8xf32> to vector<2x8x8xf32>
    %79 = tpu.concatenate %72, %74, %76, %78 in 0 : vector<2x8x8xf32>, vector<2x8x8xf32>, vector<2x8x8xf32>, vector<2x8x8xf32> -> vector<8x8x8xf32>
    "tpu.trace_start"() <{level = 10 : i32, message = "bqd,bkd->bqk"}> : () -> ()
    %cst_19 = arith.constant dense<0.000000e+00> : vector<8x8x8xf32>
    %80 = tpu.matmul %61, %70, %cst_19 {dimension_numbers = #tpu.dot_dimension_numbers<[2], [2], [1], [1], [0, 0, 0, 1, 1, 1], [0], [0]>} : vector<8x8x8xf32>, vector<8x8x8xf32>, vector<8x8x8xf32> -> vector<8x8x8xf32>
    "tpu.trace_stop"() : () -> ()
    %cst_20 = arith.constant 0.353553385 : f32
    %81 = vector.broadcast %cst_20 : f32 to vector<8x8x8xf32>
    %82 = arith.mulf %80, %81 : vector<8x8x8xf32>
    %83 = vector.broadcast %47 : vector<8x1x8xf32> to vector<8x8x8xf32>
    %84 = arith.addf %82, %83 : vector<8x8x8xf32>
    %cst_21 = arith.constant dense<0xFF800000> : vector<8x8xf32>
    %85 = vector.multi_reduction <maximumf>, %84, %cst_21 [2] : vector<8x8x8xf32> to vector<8x8xf32>
    %86 = vector.shape_cast %85 : vector<8x8xf32> to vector<8x8x1xf32>
    %87 = vector.broadcast %86 : vector<8x8x1xf32> to vector<8x8x8xf32>
    %88 = arith.subf %84, %87 : vector<8x8x8xf32>
    %89 = math.exp %88 : vector<8x8x8xf32>
    %cst_22 = arith.constant dense<0.000000e+00> : vector<8x8xf32>
    %90 = vector.multi_reduction <add>, %89, %cst_22 [2] : vector<8x8x8xf32> to vector<8x8xf32>
    %91 = vector.shape_cast %90 : vector<8x8xf32> to vector<8x8x1xf32>
    %92 = tpu.reciprocal %91 {approx = true} : vector<8x8x1xf32> -> vector<8x8x1xf32>
    %93 = vector.broadcast %92 : vector<8x8x1xf32> to vector<8x8x8xf32>
    %94 = arith.mulf %89, %93 : vector<8x8x8xf32>
    "tpu.trace_start"() <{level = 10 : i32, message = "bqk,bkd->bqd"}> : () -> ()
    %cst_23 = arith.constant dense<0.000000e+00> : vector<8x8x8xf32>
    %95 = tpu.matmul %94, %79, %cst_23 {dimension_numbers = #tpu.dot_dimension_numbers<[2], [1], [1], [2], [0, 0, 0, 1, 1, 2], [0], [0]>} : vector<8x8x8xf32>, vector<8x8x8xf32>, vector<8x8x8xf32> -> vector<8x8x8xf32>
    "tpu.trace_stop"() : () -> ()
    %96 = vector.extract_strided_slice %95 {offsets = [0, 0, 0], sizes = [2, 8, 8], strides = [1, 1, 1]} : vector<8x8x8xf32> to vector<2x8x8xf32>
    %97 = vector.shape_cast %96 : vector<2x8x8xf32> to vector<16x8xf32>
    %98 = vector.extract_strided_slice %95 {offsets = [2, 0, 0], sizes = [2, 8, 8], strides = [1, 1, 1]} : vector<8x8x8xf32> to vector<2x8x8xf32>
    %99 = vector.shape_cast %98 : vector<2x8x8xf32> to vector<16x8xf32>
    %100 = vector.extract_strided_slice %95 {offsets = [4, 0, 0], sizes = [2, 8, 8], strides = [1, 1, 1]} : vector<8x8x8xf32> to vector<2x8x8xf32>
    %101 = vector.shape_cast %100 : vector<2x8x8xf32> to vector<16x8xf32>
    %102 = vector.extract_strided_slice %95 {offsets = [6, 0, 0], sizes = [2, 8, 8], strides = [1, 1, 1]} : vector<8x8x8xf32> to vector<2x8x8xf32>
    %103 = vector.shape_cast %102 : vector<2x8x8xf32> to vector<16x8xf32>
    %104 = tpu.concatenate %97, %99, %101, %103 in 1 : vector<16x8xf32>, vector<16x8xf32>, vector<16x8xf32>, vector<16x8xf32> -> vector<16x32xf32>
    %c208 = arith.constant 208 : index
    %c0_24 = arith.constant 0 : index
    %105 = vector.load %arg3[%c208, %c0_24] : memref<656x128xf32, #tpu.memory_space<vmem>>, vector<32x32xf32>
    %cst_25 = arith.constant dense<0.000000e+00> : vector<16x32xf32>
    %106 = tpu.matmul %104, %105, %cst_25 {dimension_numbers = #tpu.dot_dimension_numbers<[1], [0], [0], [1], [0, 0, 1, 1], [], []>} : vector<16x32xf32>, vector<32x32xf32>, vector<16x32xf32> -> vector<16x32xf32>
    %c240 = arith.constant 240 : index
    %c0_26 = arith.constant 0 : index
    %107 = vector.load %arg3[%c240, %c0_26] : memref<656x128xf32, #tpu.memory_space<vmem>>, vector<1x32xf32>
    %108 = vector.broadcast %107 : vector<1x32xf32> to vector<16x32xf32>
    %109 = arith.addf %106, %108 : vector<16x32xf32>
    %110 = arith.addf %109, %39 : vector<16x32xf32>
    %c248 = arith.constant 248 : index
    %c0_27 = arith.constant 0 : index
    %111 = vector.load %arg3[%c248, %c0_27] : memref<656x128xf32, #tpu.memory_space<vmem>>, vector<1x32xf32>
    %c256 = arith.constant 256 : index
    %c0_28 = arith.constant 0 : index
    %112 = vector.load %arg3[%c256, %c0_28] : memref<656x128xf32, #tpu.memory_space<vmem>>, vector<1x32xf32>
    %cst_29 = arith.constant dense<0.000000e+00> : vector<16xf32>
    %113 = vector.multi_reduction <add>, %110, %cst_29 [1] : vector<16x32xf32> to vector<16xf32>
    %114 = vector.shape_cast %113 : vector<16xf32> to vector<16x1xf32>
    %cst_30 = arith.constant 3.200000e+01 : f32
    %115 = vector.broadcast %cst_30 : f32 to vector<16x1xf32>
    %116 = arith.divf %114, %115 : vector<16x1xf32>
    %117 = vector.broadcast %116 : vector<16x1xf32> to vector<16x32xf32>
    %118 = arith.subf %110, %117 : vector<16x32xf32>
    %119 = arith.mulf %118, %118 : vector<16x32xf32>
    %cst_31 = arith.constant dense<0.000000e+00> : vector<16xf32>
    %120 = vector.multi_reduction <add>, %119, %cst_31 [1] : vector<16x32xf32> to vector<16xf32>
    %121 = vector.shape_cast %120 : vector<16xf32> to vector<16x1xf32>
    %cst_32 = arith.constant 3.200000e+01 : f32
    %122 = vector.broadcast %cst_32 : f32 to vector<16x1xf32>
    %123 = arith.divf %121, %122 : vector<16x1xf32>
    %124 = vector.broadcast %116 : vector<16x1xf32> to vector<16x32xf32>
    %125 = arith.subf %110, %124 : vector<16x32xf32>
    %cst_33 = arith.constant 9.99999996E-13 : f32
    %126 = vector.broadcast %cst_33 : f32 to vector<16x1xf32>
    %127 = arith.addf %123, %126 : vector<16x1xf32>
    %128 = math.rsqrt %127 : vector<16x1xf32>
    %129 = vector.broadcast %128 : vector<16x1xf32> to vector<16x32xf32>
    %130 = arith.mulf %125, %129 : vector<16x32xf32>
    %131 = vector.broadcast %111 : vector<1x32xf32> to vector<16x32xf32>
    %132 = arith.mulf %130, %131 : vector<16x32xf32>
    %133 = vector.broadcast %112 : vector<1x32xf32> to vector<16x32xf32>
    %134 = arith.addf %132, %133 : vector<16x32xf32>
    %c264 = arith.constant 264 : index
    %c0_34 = arith.constant 0 : index
    %135 = vector.load %arg3[%c264, %c0_34] : memref<656x128xf32, #tpu.memory_space<vmem>>, vector<32x64xf32>
    %cst_35 = arith.constant dense<0.000000e+00> : vector<16x64xf32>
    %136 = tpu.matmul %134, %135, %cst_35 {dimension_numbers = #tpu.dot_dimension_numbers<[1], [0], [0], [1], [0, 0, 1, 1], [], []>} : vector<16x32xf32>, vector<32x64xf32>, vector<16x64xf32> -> vector<16x64xf32>
    %c296 = arith.constant 296 : index
    %c0_36 = arith.constant 0 : index
    %137 = vector.load %arg3[%c296, %c0_36] : memref<656x128xf32, #tpu.memory_space<vmem>>, vector<1x64xf32>
    %138 = vector.broadcast %137 : vector<1x64xf32> to vector<16x64xf32>
    %139 = arith.addf %136, %138 : vector<16x64xf32>
    %cst_37 = arith.constant 5.000000e-01 : f32
    %140 = vector.broadcast %cst_37 : f32 to vector<16x64xf32>
    %141 = arith.mulf %140, %139 : vector<16x64xf32>
    %cst_38 = arith.constant 4.471500e-02 : f32
    %142 = vector.broadcast %cst_38 : f32 to vector<16x64xf32>
    %143 = arith.mulf %142, %139 : vector<16x64xf32>
    %144 = arith.mulf %143, %139 : vector<16x64xf32>
    %145 = arith.mulf %144, %139 : vector<16x64xf32>
    %146 = arith.addf %139, %145 : vector<16x64xf32>
    %cst_39 = arith.constant 0.797884583 : f32
    %147 = vector.broadcast %cst_39 : f32 to vector<16x64xf32>
    %148 = arith.mulf %147, %146 : vector<16x64xf32>
    %149 = math.tanh %148 : vector<16x64xf32>
    %cst_40 = arith.constant 1.000000e+00 : f32
    %150 = vector.broadcast %cst_40 : f32 to vector<16x64xf32>
    %151 = arith.addf %150, %149 : vector<16x64xf32>
    %152 = arith.mulf %141, %151 : vector<16x64xf32>
    %c304 = arith.constant 304 : index
    %c0_41 = arith.constant 0 : index
    %153 = vector.load %arg3[%c304, %c0_41] : memref<656x128xf32, #tpu.memory_space<vmem>>, vector<64x32xf32>
    %cst_42 = arith.constant dense<0.000000e+00> : vector<16x32xf32>
    %154 = tpu.matmul %152, %153, %cst_42 {dimension_numbers = #tpu.dot_dimension_numbers<[1], [0], [0], [1], [0, 0, 1, 1], [], []>} : vector<16x64xf32>, vector<64x32xf32>, vector<16x32xf32> -> vector<16x32xf32>
    %c368 = arith.constant 368 : index
    %c0_43 = arith.constant 0 : index
    %155 = vector.load %arg3[%c368, %c0_43] : memref<656x128xf32, #tpu.memory_space<vmem>>, vector<1x32xf32>
    %156 = vector.broadcast %155 : vector<1x32xf32> to vector<16x32xf32>
    %157 = arith.addf %154, %156 : vector<16x32xf32>
    %158 = arith.addf %157, %134 : vector<16x32xf32>
    %c376 = arith.constant 376 : index
    %c0_44 = arith.constant 0 : index
    %159 = vector.load %arg3[%c376, %c0_44] : memref<656x128xf32, #tpu.memory_space<vmem>>, vector<1x32xf32>
    %c384 = arith.constant 384 : index
    %c0_45 = arith.constant 0 : index
    %160 = vector.load %arg3[%c384, %c0_45] : memref<656x128xf32, #tpu.memory_space<vmem>>, vector<1x32xf32>
    %cst_46 = arith.constant dense<0.000000e+00> : vector<16xf32>
    %161 = vector.multi_reduction <add>, %158, %cst_46 [1] : vector<16x32xf32> to vector<16xf32>
    %162 = vector.shape_cast %161 : vector<16xf32> to vector<16x1xf32>
    %cst_47 = arith.constant 3.200000e+01 : f32
    %163 = vector.broadcast %cst_47 : f32 to vector<16x1xf32>
    %164 = arith.divf %162, %163 : vector<16x1xf32>
    %165 = vector.broadcast %164 : vector<16x1xf32> to vector<16x32xf32>
    %166 = arith.subf %158, %165 : vector<16x32xf32>
    %167 = arith.mulf %166, %166 : vector<16x32xf32>
    %cst_48 = arith.constant dense<0.000000e+00> : vector<16xf32>
    %168 = vector.multi_reduction <add>, %167, %cst_48 [1] : vector<16x32xf32> to vector<16xf32>
    %169 = vector.shape_cast %168 : vector<16xf32> to vector<16x1xf32>
    %cst_49 = arith.constant 3.200000e+01 : f32
    %170 = vector.broadcast %cst_49 : f32 to vector<16x1xf32>
    %171 = arith.divf %169, %170 : vector<16x1xf32>
    %172 = vector.broadcast %164 : vector<16x1xf32> to vector<16x32xf32>
    %173 = arith.subf %158, %172 : vector<16x32xf32>
    %cst_50 = arith.constant 9.99999996E-13 : f32
    %174 = vector.broadcast %cst_50 : f32 to vector<16x1xf32>
    %175 = arith.addf %171, %174 : vector<16x1xf32>
    %176 = math.rsqrt %175 : vector<16x1xf32>
    %177 = vector.broadcast %176 : vector<16x1xf32> to vector<16x32xf32>
    %178 = arith.mulf %173, %177 : vector<16x32xf32>
    %179 = vector.broadcast %159 : vector<1x32xf32> to vector<16x32xf32>
    %180 = arith.mulf %178, %179 : vector<16x32xf32>
    %181 = vector.broadcast %160 : vector<1x32xf32> to vector<16x32xf32>
    %182 = arith.addf %180, %181 : vector<16x32xf32>
    %c392 = arith.constant 392 : index
    %c0_51 = arith.constant 0 : index
    %183 = vector.load %arg3[%c392, %c0_51] : memref<656x128xf32, #tpu.memory_space<vmem>>, vector<32x96xf32>
    %cst_52 = arith.constant dense<0.000000e+00> : vector<16x96xf32>
    %184 = tpu.matmul %182, %183, %cst_52 {dimension_numbers = #tpu.dot_dimension_numbers<[1], [0], [0], [1], [0, 0, 1, 1], [], []>} : vector<16x32xf32>, vector<32x96xf32>, vector<16x96xf32> -> vector<16x96xf32>
    %c424 = arith.constant 424 : index
    %c0_53 = arith.constant 0 : index
    %185 = vector.load %arg3[%c424, %c0_53] : memref<656x128xf32, #tpu.memory_space<vmem>>, vector<1x96xf32>
    %186 = vector.broadcast %185 : vector<1x96xf32> to vector<16x96xf32>
    %187 = arith.addf %184, %186 : vector<16x96xf32>
    %188 = vector.extract_strided_slice %187 {offsets = [0, 0], sizes = [16, 8], strides = [1, 1]} : vector<16x96xf32> to vector<16x8xf32>
    %189 = vector.shape_cast %188 : vector<16x8xf32> to vector<2x8x8xf32>
    %190 = vector.extract_strided_slice %187 {offsets = [0, 8], sizes = [16, 8], strides = [1, 1]} : vector<16x96xf32> to vector<16x8xf32>
    %191 = vector.shape_cast %190 : vector<16x8xf32> to vector<2x8x8xf32>
    %192 = vector.extract_strided_slice %187 {offsets = [0, 16], sizes = [16, 8], strides = [1, 1]} : vector<16x96xf32> to vector<16x8xf32>
    %193 = vector.shape_cast %192 : vector<16x8xf32> to vector<2x8x8xf32>
    %194 = vector.extract_strided_slice %187 {offsets = [0, 24], sizes = [16, 8], strides = [1, 1]} : vector<16x96xf32> to vector<16x8xf32>
    %195 = vector.shape_cast %194 : vector<16x8xf32> to vector<2x8x8xf32>
    %196 = tpu.concatenate %189, %191, %193, %195 in 0 : vector<2x8x8xf32>, vector<2x8x8xf32>, vector<2x8x8xf32>, vector<2x8x8xf32> -> vector<8x8x8xf32>
    %197 = vector.extract_strided_slice %187 {offsets = [0, 32], sizes = [16, 8], strides = [1, 1]} : vector<16x96xf32> to vector<16x8xf32>
    %198 = vector.shape_cast %197 : vector<16x8xf32> to vector<2x8x8xf32>
    %199 = vector.extract_strided_slice %187 {offsets = [0, 40], sizes = [16, 8], strides = [1, 1]} : vector<16x96xf32> to vector<16x8xf32>
    %200 = vector.shape_cast %199 : vector<16x8xf32> to vector<2x8x8xf32>
    %201 = vector.extract_strided_slice %187 {offsets = [0, 48], sizes = [16, 8], strides = [1, 1]} : vector<16x96xf32> to vector<16x8xf32>
    %202 = vector.shape_cast %201 : vector<16x8xf32> to vector<2x8x8xf32>
    %203 = vector.extract_strided_slice %187 {offsets = [0, 56], sizes = [16, 8], strides = [1, 1]} : vector<16x96xf32> to vector<16x8xf32>
    %204 = vector.shape_cast %203 : vector<16x8xf32> to vector<2x8x8xf32>
    %205 = tpu.concatenate %198, %200, %202, %204 in 0 : vector<2x8x8xf32>, vector<2x8x8xf32>, vector<2x8x8xf32>, vector<2x8x8xf32> -> vector<8x8x8xf32>
    %206 = vector.extract_strided_slice %187 {offsets = [0, 64], sizes = [16, 8], strides = [1, 1]} : vector<16x96xf32> to vector<16x8xf32>
    %207 = vector.shape_cast %206 : vector<16x8xf32> to vector<2x8x8xf32>
    %208 = vector.extract_strided_slice %187 {offsets = [0, 72], sizes = [16, 8], strides = [1, 1]} : vector<16x96xf32> to vector<16x8xf32>
    %209 = vector.shape_cast %208 : vector<16x8xf32> to vector<2x8x8xf32>
    %210 = vector.extract_strided_slice %187 {offsets = [0, 80], sizes = [16, 8], strides = [1, 1]} : vector<16x96xf32> to vector<16x8xf32>
    %211 = vector.shape_cast %210 : vector<16x8xf32> to vector<2x8x8xf32>
    %212 = vector.extract_strided_slice %187 {offsets = [0, 88], sizes = [16, 8], strides = [1, 1]} : vector<16x96xf32> to vector<16x8xf32>
    %213 = vector.shape_cast %212 : vector<16x8xf32> to vector<2x8x8xf32>
    %214 = tpu.concatenate %207, %209, %211, %213 in 0 : vector<2x8x8xf32>, vector<2x8x8xf32>, vector<2x8x8xf32>, vector<2x8x8xf32> -> vector<8x8x8xf32>
    "tpu.trace_start"() <{level = 10 : i32, message = "bqd,bkd->bqk"}> : () -> ()
    %cst_54 = arith.constant dense<0.000000e+00> : vector<8x8x8xf32>
    %215 = tpu.matmul %196, %205, %cst_54 {dimension_numbers = #tpu.dot_dimension_numbers<[2], [2], [1], [1], [0, 0, 0, 1, 1, 1], [0], [0]>} : vector<8x8x8xf32>, vector<8x8x8xf32>, vector<8x8x8xf32> -> vector<8x8x8xf32>
    "tpu.trace_stop"() : () -> ()
    %cst_55 = arith.constant 0.353553385 : f32
    %216 = vector.broadcast %cst_55 : f32 to vector<8x8x8xf32>
    %217 = arith.mulf %215, %216 : vector<8x8x8xf32>
    %218 = vector.broadcast %47 : vector<8x1x8xf32> to vector<8x8x8xf32>
    %219 = arith.addf %217, %218 : vector<8x8x8xf32>
    %cst_56 = arith.constant dense<0xFF800000> : vector<8x8xf32>
    %220 = vector.multi_reduction <maximumf>, %219, %cst_56 [2] : vector<8x8x8xf32> to vector<8x8xf32>
    %221 = vector.shape_cast %220 : vector<8x8xf32> to vector<8x8x1xf32>
    %222 = vector.broadcast %221 : vector<8x8x1xf32> to vector<8x8x8xf32>
    %223 = arith.subf %219, %222 : vector<8x8x8xf32>
    %224 = math.exp %223 : vector<8x8x8xf32>
    %cst_57 = arith.constant dense<0.000000e+00> : vector<8x8xf32>
    %225 = vector.multi_reduction <add>, %224, %cst_57 [2] : vector<8x8x8xf32> to vector<8x8xf32>
    %226 = vector.shape_cast %225 : vector<8x8xf32> to vector<8x8x1xf32>
    %227 = tpu.reciprocal %226 {approx = true} : vector<8x8x1xf32> -> vector<8x8x1xf32>
    %228 = vector.broadcast %227 : vector<8x8x1xf32> to vector<8x8x8xf32>
    %229 = arith.mulf %224, %228 : vector<8x8x8xf32>
    "tpu.trace_start"() <{level = 10 : i32, message = "bqk,bkd->bqd"}> : () -> ()
    %cst_58 = arith.constant dense<0.000000e+00> : vector<8x8x8xf32>
    %230 = tpu.matmul %229, %214, %cst_58 {dimension_numbers = #tpu.dot_dimension_numbers<[2], [1], [1], [2], [0, 0, 0, 1, 1, 2], [0], [0]>} : vector<8x8x8xf32>, vector<8x8x8xf32>, vector<8x8x8xf32> -> vector<8x8x8xf32>
    "tpu.trace_stop"() : () -> ()
    %231 = vector.extract_strided_slice %230 {offsets = [0, 0, 0], sizes = [2, 8, 8], strides = [1, 1, 1]} : vector<8x8x8xf32> to vector<2x8x8xf32>
    %232 = vector.shape_cast %231 : vector<2x8x8xf32> to vector<16x8xf32>
    %233 = vector.extract_strided_slice %230 {offsets = [2, 0, 0], sizes = [2, 8, 8], strides = [1, 1, 1]} : vector<8x8x8xf32> to vector<2x8x8xf32>
    %234 = vector.shape_cast %233 : vector<2x8x8xf32> to vector<16x8xf32>
    %235 = vector.extract_strided_slice %230 {offsets = [4, 0, 0], sizes = [2, 8, 8], strides = [1, 1, 1]} : vector<8x8x8xf32> to vector<2x8x8xf32>
    %236 = vector.shape_cast %235 : vector<2x8x8xf32> to vector<16x8xf32>
    %237 = vector.extract_strided_slice %230 {offsets = [6, 0, 0], sizes = [2, 8, 8], strides = [1, 1, 1]} : vector<8x8x8xf32> to vector<2x8x8xf32>
    %238 = vector.shape_cast %237 : vector<2x8x8xf32> to vector<16x8xf32>
    %239 = tpu.concatenate %232, %234, %236, %238 in 1 : vector<16x8xf32>, vector<16x8xf32>, vector<16x8xf32>, vector<16x8xf32> -> vector<16x32xf32>
    %c432 = arith.constant 432 : index
    %c0_59 = arith.constant 0 : index
    %240 = vector.load %arg3[%c432, %c0_59] : memref<656x128xf32, #tpu.memory_space<vmem>>, vector<32x32xf32>
    %cst_60 = arith.constant dense<0.000000e+00> : vector<16x32xf32>
    %241 = tpu.matmul %239, %240, %cst_60 {dimension_numbers = #tpu.dot_dimension_numbers<[1], [0], [0], [1], [0, 0, 1, 1], [], []>} : vector<16x32xf32>, vector<32x32xf32>, vector<16x32xf32> -> vector<16x32xf32>
    %c464 = arith.constant 464 : index
    %c0_61 = arith.constant 0 : index
    %242 = vector.load %arg3[%c464, %c0_61] : memref<656x128xf32, #tpu.memory_space<vmem>>, vector<1x32xf32>
    %243 = vector.broadcast %242 : vector<1x32xf32> to vector<16x32xf32>
    %244 = arith.addf %241, %243 : vector<16x32xf32>
    %245 = arith.addf %244, %182 : vector<16x32xf32>
    %c472 = arith.constant 472 : index
    %c0_62 = arith.constant 0 : index
    %246 = vector.load %arg3[%c472, %c0_62] : memref<656x128xf32, #tpu.memory_space<vmem>>, vector<1x32xf32>
    %c480 = arith.constant 480 : index
    %c0_63 = arith.constant 0 : index
    %247 = vector.load %arg3[%c480, %c0_63] : memref<656x128xf32, #tpu.memory_space<vmem>>, vector<1x32xf32>
    %cst_64 = arith.constant dense<0.000000e+00> : vector<16xf32>
    %248 = vector.multi_reduction <add>, %245, %cst_64 [1] : vector<16x32xf32> to vector<16xf32>
    %249 = vector.shape_cast %248 : vector<16xf32> to vector<16x1xf32>
    %cst_65 = arith.constant 3.200000e+01 : f32
    %250 = vector.broadcast %cst_65 : f32 to vector<16x1xf32>
    %251 = arith.divf %249, %250 : vector<16x1xf32>
    %252 = vector.broadcast %251 : vector<16x1xf32> to vector<16x32xf32>
    %253 = arith.subf %245, %252 : vector<16x32xf32>
    %254 = arith.mulf %253, %253 : vector<16x32xf32>
    %cst_66 = arith.constant dense<0.000000e+00> : vector<16xf32>
    %255 = vector.multi_reduction <add>, %254, %cst_66 [1] : vector<16x32xf32> to vector<16xf32>
    %256 = vector.shape_cast %255 : vector<16xf32> to vector<16x1xf32>
    %cst_67 = arith.constant 3.200000e+01 : f32
    %257 = vector.broadcast %cst_67 : f32 to vector<16x1xf32>
    %258 = arith.divf %256, %257 : vector<16x1xf32>
    %259 = vector.broadcast %251 : vector<16x1xf32> to vector<16x32xf32>
    %260 = arith.subf %245, %259 : vector<16x32xf32>
    %cst_68 = arith.constant 9.99999996E-13 : f32
    %261 = vector.broadcast %cst_68 : f32 to vector<16x1xf32>
    %262 = arith.addf %258, %261 : vector<16x1xf32>
    %263 = math.rsqrt %262 : vector<16x1xf32>
    %264 = vector.broadcast %263 : vector<16x1xf32> to vector<16x32xf32>
    %265 = arith.mulf %260, %264 : vector<16x32xf32>
    %266 = vector.broadcast %246 : vector<1x32xf32> to vector<16x32xf32>
    %267 = arith.mulf %265, %266 : vector<16x32xf32>
    %268 = vector.broadcast %247 : vector<1x32xf32> to vector<16x32xf32>
    %269 = arith.addf %267, %268 : vector<16x32xf32>
    %c488 = arith.constant 488 : index
    %c0_69 = arith.constant 0 : index
    %270 = vector.load %arg3[%c488, %c0_69] : memref<656x128xf32, #tpu.memory_space<vmem>>, vector<32x64xf32>
    %cst_70 = arith.constant dense<0.000000e+00> : vector<16x64xf32>
    %271 = tpu.matmul %269, %270, %cst_70 {dimension_numbers = #tpu.dot_dimension_numbers<[1], [0], [0], [1], [0, 0, 1, 1], [], []>} : vector<16x32xf32>, vector<32x64xf32>, vector<16x64xf32> -> vector<16x64xf32>
    %c520 = arith.constant 520 : index
    %c0_71 = arith.constant 0 : index
    %272 = vector.load %arg3[%c520, %c0_71] : memref<656x128xf32, #tpu.memory_space<vmem>>, vector<1x64xf32>
    %273 = vector.broadcast %272 : vector<1x64xf32> to vector<16x64xf32>
    %274 = arith.addf %271, %273 : vector<16x64xf32>
    %cst_72 = arith.constant 5.000000e-01 : f32
    %275 = vector.broadcast %cst_72 : f32 to vector<16x64xf32>
    %276 = arith.mulf %275, %274 : vector<16x64xf32>
    %cst_73 = arith.constant 4.471500e-02 : f32
    %277 = vector.broadcast %cst_73 : f32 to vector<16x64xf32>
    %278 = arith.mulf %277, %274 : vector<16x64xf32>
    %279 = arith.mulf %278, %274 : vector<16x64xf32>
    %280 = arith.mulf %279, %274 : vector<16x64xf32>
    %281 = arith.addf %274, %280 : vector<16x64xf32>
    %cst_74 = arith.constant 0.797884583 : f32
    %282 = vector.broadcast %cst_74 : f32 to vector<16x64xf32>
    %283 = arith.mulf %282, %281 : vector<16x64xf32>
    %284 = math.tanh %283 : vector<16x64xf32>
    %cst_75 = arith.constant 1.000000e+00 : f32
    %285 = vector.broadcast %cst_75 : f32 to vector<16x64xf32>
    %286 = arith.addf %285, %284 : vector<16x64xf32>
    %287 = arith.mulf %276, %286 : vector<16x64xf32>
    %c528 = arith.constant 528 : index
    %c0_76 = arith.constant 0 : index
    %288 = vector.load %arg3[%c528, %c0_76] : memref<656x128xf32, #tpu.memory_space<vmem>>, vector<64x32xf32>
    %cst_77 = arith.constant dense<0.000000e+00> : vector<16x32xf32>
    %289 = tpu.matmul %287, %288, %cst_77 {dimension_numbers = #tpu.dot_dimension_numbers<[1], [0], [0], [1], [0, 0, 1, 1], [], []>} : vector<16x64xf32>, vector<64x32xf32>, vector<16x32xf32> -> vector<16x32xf32>
    %c592 = arith.constant 592 : index
    %c0_78 = arith.constant 0 : index
    %290 = vector.load %arg3[%c592, %c0_78] : memref<656x128xf32, #tpu.memory_space<vmem>>, vector<1x32xf32>
    %291 = vector.broadcast %290 : vector<1x32xf32> to vector<16x32xf32>
    %292 = arith.addf %289, %291 : vector<16x32xf32>
    %293 = arith.addf %292, %269 : vector<16x32xf32>
    %c600 = arith.constant 600 : index
    %c0_79 = arith.constant 0 : index
    %294 = vector.load %arg3[%c600, %c0_79] : memref<656x128xf32, #tpu.memory_space<vmem>>, vector<1x32xf32>
    %c608 = arith.constant 608 : index
    %c0_80 = arith.constant 0 : index
    %295 = vector.load %arg3[%c608, %c0_80] : memref<656x128xf32, #tpu.memory_space<vmem>>, vector<1x32xf32>
    %cst_81 = arith.constant dense<0.000000e+00> : vector<16xf32>
    %296 = vector.multi_reduction <add>, %293, %cst_81 [1] : vector<16x32xf32> to vector<16xf32>
    %297 = vector.shape_cast %296 : vector<16xf32> to vector<16x1xf32>
    %cst_82 = arith.constant 3.200000e+01 : f32
    %298 = vector.broadcast %cst_82 : f32 to vector<16x1xf32>
    %299 = arith.divf %297, %298 : vector<16x1xf32>
    %300 = vector.broadcast %299 : vector<16x1xf32> to vector<16x32xf32>
    %301 = arith.subf %293, %300 : vector<16x32xf32>
    %302 = arith.mulf %301, %301 : vector<16x32xf32>
    %cst_83 = arith.constant dense<0.000000e+00> : vector<16xf32>
    %303 = vector.multi_reduction <add>, %302, %cst_83 [1] : vector<16x32xf32> to vector<16xf32>
    %304 = vector.shape_cast %303 : vector<16xf32> to vector<16x1xf32>
    %cst_84 = arith.constant 3.200000e+01 : f32
    %305 = vector.broadcast %cst_84 : f32 to vector<16x1xf32>
    %306 = arith.divf %304, %305 : vector<16x1xf32>
    %307 = vector.broadcast %299 : vector<16x1xf32> to vector<16x32xf32>
    %308 = arith.subf %293, %307 : vector<16x32xf32>
    %cst_85 = arith.constant 9.99999996E-13 : f32
    %309 = vector.broadcast %cst_85 : f32 to vector<16x1xf32>
    %310 = arith.addf %306, %309 : vector<16x1xf32>
    %311 = math.rsqrt %310 : vector<16x1xf32>
    %312 = vector.broadcast %311 : vector<16x1xf32> to vector<16x32xf32>
    %313 = arith.mulf %308, %312 : vector<16x32xf32>
    %314 = vector.broadcast %294 : vector<1x32xf32> to vector<16x32xf32>
    %315 = arith.mulf %313, %314 : vector<16x32xf32>
    %316 = vector.broadcast %295 : vector<1x32xf32> to vector<16x32xf32>
    %317 = arith.addf %315, %316 : vector<16x32xf32>
    %c0_86 = arith.constant 0 : index
    %c0_87 = arith.constant 0 : index
    %318 = vector.load %arg4[%c0_86, %c0_87] : memref<16x32xf32, #tpu.memory_space<vmem>>, vector<16x32xf32>
    tpu.vector_store %arg4[%c0_86, %c0_87], %317 {strides = array<i32>} : memref<16x32xf32, #tpu.memory_space<vmem>>, vector<16x32xf32>,
    %319 = vector.extract_strided_slice %317 {offsets = [0, 0], sizes = [1, 32], strides = [1, 1]} : vector<16x32xf32> to vector<1x32xf32>
    %320 = vector.extract_strided_slice %317 {offsets = [8, 0], sizes = [1, 32], strides = [1, 1]} : vector<16x32xf32> to vector<1x32xf32>
    %321 = tpu.concatenate %319, %320 in 0 : vector<1x32xf32>, vector<1x32xf32> -> vector<2x32xf32>
    %c616 = arith.constant 616 : index
    %c0_88 = arith.constant 0 : index
    %322 = vector.load %arg3[%c616, %c0_88] : memref<656x128xf32, #tpu.memory_space<vmem>>, vector<32x32xf32>
    %cst_89 = arith.constant dense<0.000000e+00> : vector<2x32xf32>
    %323 = tpu.matmul %321, %322, %cst_89 {dimension_numbers = #tpu.dot_dimension_numbers<[1], [0], [0], [1], [0, 0, 1, 1], [], []>} : vector<2x32xf32>, vector<32x32xf32>, vector<2x32xf32> -> vector<2x32xf32>
    %c648 = arith.constant 648 : index
    %c0_90 = arith.constant 0 : index
    %324 = vector.load %arg3[%c648, %c0_90] : memref<656x128xf32, #tpu.memory_space<vmem>>, vector<1x32xf32>
    %325 = vector.broadcast %324 : vector<1x32xf32> to vector<2x32xf32>
    %326 = arith.addf %323, %325 : vector<2x32xf32>
    %327 = math.tanh %326 : vector<2x32xf32>
    %c0_91 = arith.constant 0 : index
    %c0_92 = arith.constant 0 : index
    %328 = vector.load %arg5[%c0_91, %c0_92] : memref<2x32xf32, #tpu.memory_space<vmem>>, vector<2x32xf32>
    tpu.vector_store %arg5[%c0_91, %c0_92], %327 {strides = array<i32>} : memref<2x32xf32, #tpu.memory_space<vmem>>, vector<2x32xf32>,
    return
  }
  func.func @transform_0(%arg0: i32) -> (i32, i32) {
    %c0_i32 = arith.constant 0 : i32
    %c0_i32_0 = arith.constant 0 : i32
    %c0_i32_1 = arith.constant 0 : i32
    return %c0_i32, %c0_i32_0 : i32, i32
  }
  func.func @transform_1(%arg0: i32) -> (i32, i32) {
    %c0_i32 = arith.constant 0 : i32
    %c0_i32_0 = arith.constant 0 : i32
    %c0_i32_1 = arith.constant 0 : i32
    return %c0_i32, %c0_i32_0 : i32, i32
  }
  func.func @transform_2(%arg0: i32) -> (i32, i32) {
    %c0_i32 = arith.constant 0 : i32
    %c0_i32_0 = arith.constant 0 : i32
    %c0_i32_1 = arith.constant 0 : i32
    return %c0_i32, %c0_i32_0 : i32, i32
  }
  func.func @transform_3(%arg0: i32) -> (i32, i32) {
    %c0_i32 = arith.constant 0 : i32
    %c0_i32_0 = arith.constant 0 : i32
    %c0_i32_1 = arith.constant 0 : i32
    return %c0_i32, %c0_i32_0 : i32, i32
  }
  func.func @transform_4(%arg0: i32) -> (i32, i32) {
    %c0_i32 = arith.constant 0 : i32
    %c0_i32_0 = arith.constant 0 : i32
    %c0_i32_1 = arith.constant 0 : i32
    return %c0_i32, %c0_i32_0 : i32, i32
  }
}

</mosaic_0001>

<llo_original>
// kernel: bert_with_pooler_forward.1
$region0: #{bert_with_pooler_forward.1}
  #allocation0 [shape = 'u32[]', space=smem, size = 0x4, offset = 0x4, fixed_abs, tag = 'smem constant byte address 0x4 - core index']
  #allocation1 [shape = 'u32[144,128]{1,0:T(1,128)}', space=vmem, size = 0x12000, scoped, tag = 'internal scratch']
  %s0 = inlined_call_operand.vmem [shape: s32[16,1], index: 0, kind: input, shape index: {}]
  %s1 = inlined_call_operand.vmem [shape: s32[2,8], index: 1, kind: input, shape index: {}]
  %s2 = inlined_call_operand.hbm [shape: f32[656,128], index: 2, kind: input, shape index: {}]
  %s3 = inlined_call_operand.hbm [shape: f32[16,32], index: 3, kind: output, shape index: {0}]
  %s4 = inlined_call_operand.hbm [shape: f32[2,32], index: 4, kind: output, shape index: {1}]
  %5 = xla_tuple %s3, %s4
  %s6 = sld [smem:[#allocation0]]
  $region34: #{bert_with_pooler_forward.1} parent=0
    _
  %s8 = ssub.s32 1, %s6
  %s9 = scalar_select 0, %s8, %s6
  $region1: #{bert_with_pooler_forward.1} parent=0
    #allocation2 [shape = 'u8[335872]{0}', space=vmem, size = 0x52000, scoped, tag = 'input window, operand 2, single buffered']
    #allocation3 [shape = 's32[1]{0}', space=sflag, size = 0x4, scoped, tag = 'scoped memory for bert_with_pooler_forward.1']
    #allocation4 [shape = 's32[1]{0}', space=sflag, size = 0x4, scoped, tag = 'scoped memory for bert_with_pooler_forward.1']
    #allocation5 [shape = 'u8[8192]{0}', space=vmem, size = 0x2000, scoped, tag = 'output window, operand 0, single buffered']
    #allocation6 [shape = 'u8[1024]{0}', space=vmem, size = 0x400, scoped, tag = 'output window, operand 1, single buffered']
    #allocation7 [shape = 's32[1]{0}', space=sflag, size = 0x4, scoped, tag = 'scoped memory for bert_with_pooler_forward.1']
    %10 = vsyncpa [#allocation3], 0
    %11 = vsyncpa [#allocation4], 0
    %12 = vsyncpa [#allocation7], 0
    // Predicated region
    $region2: #{bert_with_pooler_forward.1} parent=1 // pred_check
      _
    $region3: #{bert_with_pooler_forward.1} parent=1 // pred_check_branch
      %14 = sbr.rel (0) target = $region5
    $region4: #{bert_with_pooler_forward.1} parent=1 // pred_region
      _
    $region5: #{bert_with_pooler_forward.1} parent=1 // pred_fallthru
      _
    // Predicated region
    $region6: #{bert_with_pooler_forward.1} parent=1 // pred_check
      _
    $region7: #{bert_with_pooler_forward.1} parent=1 // pred_check_branch
      %16 = sbr.rel (0) target = $region9
    $region8: #{bert_with_pooler_forward.1} parent=1 // pred_region
      _
    $region9: #{bert_with_pooler_forward.1} parent=1 // pred_fallthru
      _
    // Predicated region
    $region10: #{bert_with_pooler_forward.1} parent=1 // pred_check
      _
    $region11: #{bert_with_pooler_forward.1} parent=1 // pred_check_branch
      %18 = sbr.rel (0) target = $region13
    $region12: #{bert_with_pooler_forward.1} parent=1 // pred_region
      %s20 = ssub.s32 10496, 10496
      %21 = vsyncadd [#allocation3], %s20
      %s22 = sshll.u32 [#allocation2], 4
      %s23 = int_to_ptr.vmem [resolvable:$true] %s22
      %28 = dma.hbm_to_vmem [thread:$0]  %s2, 10496, %s23, [#allocation3], 128, 128, 8
    $region13: #{bert_with_pooler_forward.1} parent=1 // pred_fallthru
      _
    // Predicated region
    $region14: #{bert_with_pooler_forward.1} parent=1 // pred_check
      _
    $region15: #{bert_with_pooler_forward.1} parent=1 // pred_check_branch
      %30 = sbr.rel (0) target = $region17
    $region16: #{bert_with_pooler_forward.1} parent=1 // pred_region
      %31 = dma.done [#allocation3], 10496
    $region17: #{bert_with_pooler_forward.1} parent=1 // pred_fallthru
      _
    %v32 = vld [vmem:[%s0] sm:$0xff]
    %v33 = vld [vmem:[%s0 + $0x8] sm:$0xff]
    %v34 = vlaneseq
    %v35 = vand.u32 %v34, 127
    %36 = vset.pattern.permute.xlu0 0
    %37 = vperm.xlu0 %36, %v32
    %v38 = vpop.permute.xlu0 %37
    %39 = vset.pattern.permute.xlu0 0
    %40 = vperm.xlu0 %39, %v33
    %v41 = vpop.permute.xlu0 %40
    %vm42 = vcmp.eq.s32.totalorder %v35, %v38
    %vm43 = vcmp.eq.s32.totalorder %v35, %v41
    %v44 = vsel %vm42, 1, 0
    %v45 = vsel %vm43, 1, 0
    %v46 = vcvt.s32.f32 %v44
    %v47 = vcvt.s32.f32 %v45
    %v48 = vld [vmem:[#allocation2] sm:$0xff]
    %v49 = vld [vmem:[#allocation2 + $0x8] sm:$0xff]
    %v50 = vld [vmem:[#allocation2 + $0x10] sm:$0xff]
    %v51 = vld [vmem:[#allocation2 + $0x18] sm:$0xff]
    %v52 = vld [vmem:[#allocation2 + $0x20] sm:$0xff]
    %v53 = vld [vmem:[#allocation2 + $0x28] sm:$0xff]
    %v54 = vld [vmem:[#allocation2 + $0x30] sm:$0xff]
    %v55 = vld [vmem:[#allocation2 + $0x38] sm:$0xff]
    %v56 = vld [vmem:[#allocation2 + $0x40] sm:$0xff]
    %v57 = vld [vmem:[#allocation2 + $0x48] sm:$0xff]
    %v58 = vld [vmem:[#allocation2 + $0x50] sm:$0xff]
    %v59 = vld [vmem:[#allocation2 + $0x58] sm:$0xff]
    %v60 = vld [vmem:[#allocation2 + $0x60] sm:$0xff]
    %v61 = vld [vmem:[#allocation2 + $0x68] sm:$0xff]
    %v62 = vld [vmem:[#allocation2 + $0x70] sm:$0xff]
    %v63 = vld [vmem:[#allocation2 + $0x78] sm:$0xff]
    %v64 = vld [vmem:[#allocation2 + $0x80] sm:$0xff]
    %v65 = vld [vmem:[#allocation2 + $0x90] sm:$0x3]
    %66 = vmatprep.subr.mxu0 0.0
    %67 = vmatpush1.msra.mxu0 %v48
    %68 = vmatprep.subr.mxu0 0.0
    %69 = vmatpush1.msra.mxu0 %v49
    %70 = vmatprep.subr.mxu0 0.0
    %71 = vmatpush1.msra.mxu0 %v50
    %72 = vmatprep.subr.mxu0 0.0
    %73 = vmatpush1.msra.mxu0 %v51
    %74 = vmatprep.subr.mxu0 0.0
    %75 = vmatpush1.msra.mxu0 %v52
    %76 = vmatprep.subr.mxu0 0.0
    %77 = vmatpush1.msra.mxu0 %v53
    %78 = vmatprep.subr.mxu0 0.0
    %79 = vmatpush1.msra.mxu0 %v54
    %80 = vmatprep.subr.mxu0 0.0
    %81 = vmatpush1.msra.mxu0 %v55
    %82 = vmatprep.subr.mxu0 0.0
    %83 = vmatpush1.msra.mxu0 %v56
    %84 = vmatprep.subr.mxu0 0.0
    %85 = vmatpush1.msra.mxu0 %v57
    %86 = vmatprep.subr.mxu0 0.0
    %87 = vmatpush1.msra.mxu0 %v58
    %88 = vmatprep.subr.mxu0 0.0
    %89 = vmatpush1.msra.mxu0 %v59
    %90 = vmatprep.subr.mxu0 0.0
    %91 = vmatpush1.msra.mxu0 %v60
    %92 = vmatprep.subr.mxu0 0.0
    %93 = vmatpush1.msra.mxu0 %v61
    %94 = vmatprep.subr.mxu0 0.0
    %95 = vmatpush1.msra.mxu0 %v62
    %96 = vmatprep.subr.mxu0 0.0
    %97 = vmatpush1.msra.mxu0 %v63
    %98 = vmatprep.subr.mxu0 0.0
    %99 = vmatpush1.msra.mxu0 0.0
    %100 = vmatprep.subr.mxu0 0.0
    %101 = vmatpush1.msra.mxu0 0.0
    %102 = vmatprep.subr.mxu0 0.0
    %103 = vmatpush1.msra.mxu0 0.0
    %104 = vmatprep.subr.mxu0 0.0
    %105 = vmatpush1.msra.mxu0 0.0
    %106 = vmatprep.subr.mxu0 0.0
    %107 = vmatpush1.msra.mxu0 0.0
    %108 = vmatprep.subr.mxu0 0.0
    %109 = vmatpush1.msra.mxu0 0.0
    %110 = vmatprep.subr.mxu0 0.0
    %111 = vmatpush1.msra.mxu0 0.0
    %112 = vmatprep.subr.mxu0 0.0
    %113 = vmatpush1.msra.mxu0 0.0
    %114 = vmatprep.subr.mxu0 0.0
    %115 = vmatpush1.msra.mxu0 0.0
    %116 = vmatprep.subr.mxu0 0.0
    %117 = vmatpush1.msra.mxu0 0.0
    %118 = vmatprep.subr.mxu0 0.0
    %119 = vmatpush1.msra.mxu0 0.0
    %120 = vmatprep.subr.mxu0 0.0
    %121 = vmatpush1.msra.mxu0 0.0
    %122 = vmatprep.subr.mxu0 0.0
    %123 = vmatpush1.msra.mxu0 0.0
    %124 = vmatprep.subr.mxu0 0.0
    %125 = vmatpush1.msra.mxu0 0.0
    %126 = vmatprep.subr.mxu0 0.0
    %127 = vmatpush1.msra.mxu0 0.0
    %128 = vmatprep.subr.mxu0 0.0
    %129 = vmatpush1.msra.mxu0 0.0
    %130 = vmatprep.mubr.f32.mxu0 0.0
    %131 = vmatmul.mubr.f32.gmra.mrb[0].mxu0 %v46
    %v132 = vpop.f32.mrb[0].mxu0
    %v133 = vadd.f32 %v64, %v132
    %v134 = vpop.f32.mrb[0].mxu0
    %135 = vmatprep.mubr.f32.mxu0 0.0
    %136 = vmatmul.mubr.f32.gmra.mrb[0].mxu0 %v47
    %v137 = vpop.f32.mrb[0].mxu0
    %v138 = vadd.f32 %v64, %v137
    %v139 = vpop.f32.mrb[0].mxu0
    %140 = vdwg.mxu0
    %v141 = vlaneseq
    %v142 = vshrl.u32 %v141, 7
    %v143 = vsub.s32 0, %v142
    %v144 = vrot.slane %v65, %v143
    %v145 = vadd.f32 %v133, %v144
    %v146 = vadd.f32 %v138, %v144
    %v147 = vld [vmem:[#allocation2 + $0x98] sm:$0x1]
    %v148 = vld [vmem:[#allocation2 + $0xa0] sm:$0x1]
    %vm149 = vcmask 261120
    %v150 = vsel %vm149, %v145, 0.0
    %151 = vadd.xlane.f32.xlu0 %v150
    %v152 = vpop.xlane.xlu0 %151
    %v153 = vsel %vm149, %v146, 0.0
    %154 = vadd.xlane.f32.xlu0 %v153
    %v155 = vpop.xlane.xlu0 %154
    %v156 = vrcp.pop 32.0
    %v157 = vmul.f32 %v152, %v156
    %v158 = vmul.f32 %v155, %v156
    %v159 = vsub.f32 %v145, %v157
    %v160 = vsub.f32 %v146, %v158
    %v161 = vmul.f32 %v159, %v159
    %v162 = vmul.f32 %v160, %v160
    %v163 = vsel %vm149, %v161, 0.0
    %164 = vadd.xlane.f32.xlu0 %v163
    %v165 = vpop.xlane.xlu0 %164
    %v166 = vsel %vm149, %v162, 0.0
    %167 = vadd.xlane.f32.xlu0 %v166
    %v168 = vpop.xlane.xlu0 %167
    %v169 = vmul.f32 %v165, %v156
    %v170 = vmul.f32 %v168, %v156
    %v171 = vadd.f32 %v169, 1e-12
    %v172 = vadd.f32 %v170, 1e-12
    %v173 = vrsqrt.pop %v171
    %v174 = vrsqrt.pop %v172
    %v175 = vmul.f32 %v159, %v173
    %v176 = vmul.f32 %v160, %v174
    %v177 = vlaneseq
    %v178 = vshrl.u32 %v177, 7
    %v179 = vsub.s32 0, %v178
    %v180 = vrot.slane %v147, %v179
    %v181 = vmul.f32 %v175, %v180
    %v182 = vmul.f32 %v176, %v180
    %v183 = vlaneseq
    %v184 = vshrl.u32 %v183, 7
    %v185 = vsub.s32 0, %v184
    %v186 = vrot.slane %v148, %v185
    %v187 = vadd.f32 %v181, %v186
    %v188 = vadd.f32 %v182, %v186
    %v189 = vld [vmem:[%s1] sm:$0x3]
    %v190 = vcvt.s32.f32 %v189
    %v191 = vsub.f32 1.0, %v190
    %v192 = vmul.f32 %v191, -10000.0
    %v195 = vunpack.c.l.s4 1966171168
    %v196 = vunpack.c.0.s8 %v195
    %v197 = vlaneseq
    %v198 = vshrl.u32 %v197, 7
    %v199 = vsub.s32 %v196, %v198
    %v200 = vrot.slane %v192, %v199
    %v201 = vcombine.high %v200, %v200
    %v203 = vunpack.c.l.s4 1966171168
    %v204 = vunpack.c.0.s8 %v203
    %v205 = vlaneseq
    %v206 = vshrl.u32 %v205, 7
    %v207 = vsub.s32 %v204, %v206
    %v208 = vrot.slane %v200, %v207
    %v210 = vunpack.c.l.s4 1966171168
    %v211 = vunpack.c.0.s8 %v210
    %v212 = vlaneseq
    %v213 = vshrl.u32 %v212, 7
    %v214 = vsub.s32 %v211, %v213
    %v215 = vrot.slane %v201, %v214
    %v216 = vld [vmem:[#allocation2 + $0xa8] sm:$0xff]
    %v217 = vld [vmem:[#allocation2 + $0xb0] sm:$0xff]
    %v218 = vld [vmem:[#allocation2 + $0xb8] sm:$0xff]
    %v219 = vld [vmem:[#allocation2 + $0xc0] sm:$0xff]
    %v220 = vld [vmem:[#allocation2 + $0xc8] sm:$0x1]
    %v221 = vlaneseq
    %v222 = vshrl.u32 %v221, 7
    %v223 = vsub.s32 0, %v222
    %v224 = vrot.slane %v220, %v223
    %v226 = vsel %vm149, %v187, 0
    %v229 = vsel %vm149, %v188, 0
    %231 = vmatprep.subr.mxu0 0.0
    %232 = vmatpush1.msra.mxu0 %v216
    %233 = vmatprep.subr.mxu0 0.0
    %234 = vmatpush1.msra.mxu0 %v217
    %235 = vmatprep.subr.mxu0 0.0
    %236 = vmatpush1.msra.mxu0 %v218
    %237 = vmatprep.subr.mxu0 0.0
    %238 = vmatpush1.msra.mxu0 %v219
    %239 = vmatprep.subr.mxu0 0.0
    %240 = vmatpush1.msra.mxu0 0.0
    %241 = vmatprep.subr.mxu0 0.0
    %242 = vmatpush1.msra.mxu0 0.0
    %243 = vmatprep.subr.mxu0 0.0
    %244 = vmatpush1.msra.mxu0 0.0
    %245 = vmatprep.subr.mxu0 0.0
    %246 = vmatpush1.msra.mxu0 0.0
    %247 = vmatprep.subr.mxu0 0.0
    %248 = vmatpush1.msra.mxu0 0.0
    %249 = vmatprep.subr.mxu0 0.0
    %250 = vmatpush1.msra.mxu0 0.0
    %251 = vmatprep.subr.mxu0 0.0
    %252 = vmatpush1.msra.mxu0 0.0
    %253 = vmatprep.subr.mxu0 0.0
    %254 = vmatpush1.msra.mxu0 0.0
    %255 = vmatprep.subr.mxu0 0.0
    %256 = vmatpush1.msra.mxu0 0.0
    %257 = vmatprep.subr.mxu0 0.0
    %258 = vmatpush1.msra.mxu0 0.0
    %259 = vmatprep.subr.mxu0 0.0
    %260 = vmatpush1.msra.mxu0 0.0
    %261 = vmatprep.subr.mxu0 0.0
    %262 = vmatpush1.msra.mxu0 0.0
    %263 = vmatprep.subr.mxu0 0.0
    %264 = vmatpush1.msra.mxu0 0.0
    %265 = vmatprep.subr.mxu0 0.0
    %266 = vmatpush1.msra.mxu0 0.0
    %267 = vmatprep.subr.mxu0 0.0
    %268 = vmatpush1.msra.mxu0 0.0
    %269 = vmatprep.subr.mxu0 0.0
    %270 = vmatpush1.msra.mxu0 0.0
    %271 = vmatprep.subr.mxu0 0.0
    %272 = vmatpush1.msra.mxu0 0.0
    %273 = vmatprep.subr.mxu0 0.0
    %274 = vmatpush1.msra.mxu0 0.0
    %275 = vmatprep.subr.mxu0 0.0
    %276 = vmatpush1.msra.mxu0 0.0
    %277 = vmatprep.subr.mxu0 0.0
    %278 = vmatpush1.msra.mxu0 0.0
    %279 = vmatprep.subr.mxu0 0.0
    %280 = vmatpush1.msra.mxu0 0.0
    %281 = vmatprep.subr.mxu0 0.0
    %282 = vmatpush1.msra.mxu0 0.0
    %283 = vmatprep.subr.mxu0 0.0
    %284 = vmatpush1.msra.mxu0 0.0
    %285 = vmatprep.subr.mxu0 0.0
    %286 = vmatpush1.msra.mxu0 0.0
    %287 = vmatprep.subr.mxu0 0.0
    %288 = vmatpush1.msra.mxu0 0.0
    %289 = vmatprep.subr.mxu0 0.0
    %290 = vmatpush1.msra.mxu0 0.0
    %291 = vmatprep.subr.mxu0 0.0
    %292 = vmatpush1.msra.mxu0 0.0
    %293 = vmatprep.subr.mxu0 0.0
    %294 = vmatpush1.msra.mxu0 0.0
    %295 = vmatprep.mubr.f32.mxu0 0.0
    %296 = vmatmul.mubr.f32.gmra.mrb[0].mxu0 %v226
    %v297 = vpop.f32.mrb[0].mxu0
    %v298 = vadd.f32 %v224, %v297
    %v299 = vpop.f32.mrb[0].mxu0
    %300 = vmatprep.mubr.f32.mxu0 0.0
    %301 = vmatmul.mubr.f32.gmra.mrb[0].mxu0 %v229
    %v302 = vpop.f32.mrb[0].mxu0
    %v303 = vadd.f32 %v224, %v302
    %v304 = vpop.f32.mrb[0].mxu0
    %305 = vdwg.mxu0
    %308 = vrot.lane.b32.xlu0 %v298, 120
    %v309 = vpop.permute.xlu0 %308
    %310 = vrot.lane.b32.xlu0 %v303, 120
    %v311 = vpop.permute.xlu0 %310
    %312 = vrot.lane.b32.xlu0 %v298, 112
    %v313 = vpop.permute.xlu0 %312
    %314 = vrot.lane.b32.xlu0 %v303, 112
    %v315 = vpop.permute.xlu0 %314
    %316 = vrot.lane.b32.xlu0 %v298, 104
    %v317 = vpop.permute.xlu0 %316
    %318 = vrot.lane.b32.xlu0 %v303, 104
    %v319 = vpop.permute.xlu0 %318
    %320 = vrot.lane.b32.xlu0 %v298, 96
    %v321 = vpop.permute.xlu0 %320
    %vm322 = vcmask 64512
    %v323 = vsel %vm322, %v298, 0
    %v325 = vsel %vm322, %v321, 0
    %327 = vmatprep.subr.mxu0 0.0
    %328 = vmatpush1.xpose.msra.mxu0 %v325
    %329 = vmatprep.subr.mxu0 0.0
    %330 = vmatpush1.xpose.msra.mxu0 0.0
    %331 = vmatprep.subr.mxu0 0.0
    %332 = vmatpush1.xpose.msra.mxu0 0.0
    %333 = vmatprep.subr.mxu0 0.0
    %334 = vmatpush1.xpose.msra.mxu0 0.0
    %335 = vmatprep.subr.mxu0 0.0
    %336 = vmatpush1.xpose.msra.mxu0 0.0
    %337 = vmatprep.subr.mxu0 0.0
    %338 = vmatpush1.xpose.msra.mxu0 0.0
    %339 = vmatprep.subr.mxu0 0.0
    %340 = vmatpush1.xpose.msra.mxu0 0.0
    %341 = vmatprep.subr.mxu0 0.0
    %342 = vmatpush1.xpose.msra.mxu0 0.0
    %343 = vmatprep.subr.mxu0 0.0
    %344 = vmatpush1.xpose.msra.mxu0 0.0
    %345 = vmatprep.subr.mxu0 0.0
    %346 = vmatpush1.xpose.msra.mxu0 0.0
    %347 = vmatprep.subr.mxu0 0.0
    %348 = vmatpush1.xpose.msra.mxu0 0.0
    %349 = vmatprep.subr.mxu0 0.0
    %350 = vmatpush1.xpose.msra.mxu0 0.0
    %351 = vmatprep.subr.mxu0 0.0
    %352 = vmatpush1.xpose.msra.mxu0 0.0
    %353 = vmatprep.subr.mxu0 0.0
    %354 = vmatpush1.xpose.msra.mxu0 0.0
    %355 = vmatprep.subr.mxu0 0.0
    %356 = vmatpush1.xpose.msra.mxu0 0.0
    %357 = vmatprep.subr.mxu0 0.0
    %358 = vmatpush1.xpose.msra.mxu0 0.0
    %359 = vmatprep.subr.mxu0 0.0
    %360 = vmatpush1.xpose.msra.mxu0 0.0
    %361 = vmatprep.subr.mxu0 0.0
    %362 = vmatpush1.xpose.msra.mxu0 0.0
    %363 = vmatprep.subr.mxu0 0.0
    %364 = vmatpush1.xpose.msra.mxu0 0.0
    %365 = vmatprep.subr.mxu0 0.0
    %366 = vmatpush1.xpose.msra.mxu0 0.0
    %367 = vmatprep.subr.mxu0 0.0
    %368 = vmatpush1.xpose.msra.mxu0 0.0
    %369 = vmatprep.subr.mxu0 0.0
    %370 = vmatpush1.xpose.msra.mxu0 0.0
    %371 = vmatprep.subr.mxu0 0.0
    %372 = vmatpush1.xpose.msra.mxu0 0.0
    %373 = vmatprep.subr.mxu0 0.0
    %374 = vmatpush1.xpose.msra.mxu0 0.0
    %375 = vmatprep.subr.mxu0 0.0
    %376 = vmatpush1.xpose.msra.mxu0 0.0
    %377 = vmatprep.subr.mxu0 0.0
    %378 = vmatpush1.xpose.msra.mxu0 0.0
    %379 = vmatprep.subr.mxu0 0.0
    %380 = vmatpush1.xpose.msra.mxu0 0.0
    %381 = vmatprep.subr.mxu0 0.0
    %382 = vmatpush1.xpose.msra.mxu0 0.0
    %383 = vmatprep.subr.mxu0 0.0
    %384 = vmatpush1.xpose.msra.mxu0 0.0
    %385 = vmatprep.subr.mxu0 0.0
    %386 = vmatpush1.xpose.msra.mxu0 0.0
    %387 = vmatprep.subr.mxu0 0.0
    %388 = vmatpush1.xpose.msra.mxu0 0.0
    %389 = vmatprep.subr.mxu0 0.0
    %390 = vmatpush1.xpose.msra.mxu0 0.0
    %391 = vmatprep.mubr.f32.mxu0 0.0
    %392 = vmatmul.mubr.f32.gmra.mrb[0].mxu0 %v323
    %v393 = vpop.f32.mrb[0].mxu0
    %v394 = vadd.f32 0.0, %v393
    %v395 = vpop.f32.mrb[0].mxu0
    %396 = vdwg.mxu0
    %397 = vrot.lane.b32.xlu0 %v303, 96
    %v398 = vpop.permute.xlu0 %397
    %v399 = vsel %vm322, %v303, 0
    %v401 = vsel %vm322, %v398, 0
    %403 = vmatprep.subr.mxu0 0.0
    %404 = vmatpush1.xpose.msra.mxu0 %v401
    %405 = vmatprep.subr.mxu0 0.0
    %406 = vmatpush1.xpose.msra.mxu0 0.0
    %407 = vmatprep.subr.mxu0 0.0
    %408 = vmatpush1.xpose.msra.mxu0 0.0
    %409 = vmatprep.subr.mxu0 0.0
    %410 = vmatpush1.xpose.msra.mxu0 0.0
    %411 = vmatprep.subr.mxu0 0.0
    %412 = vmatpush1.xpose.msra.mxu0 0.0
    %413 = vmatprep.subr.mxu0 0.0
    %414 = vmatpush1.xpose.msra.mxu0 0.0
    %415 = vmatprep.subr.mxu0 0.0
    %416 = vmatpush1.xpose.msra.mxu0 0.0
    %417 = vmatprep.subr.mxu0 0.0
    %418 = vmatpush1.xpose.msra.mxu0 0.0
    %419 = vmatprep.subr.mxu0 0.0
    %420 = vmatpush1.xpose.msra.mxu0 0.0
    %421 = vmatprep.subr.mxu0 0.0
    %422 = vmatpush1.xpose.msra.mxu0 0.0
    %423 = vmatprep.subr.mxu0 0.0
    %424 = vmatpush1.xpose.msra.mxu0 0.0
    %425 = vmatprep.subr.mxu0 0.0
    %426 = vmatpush1.xpose.msra.mxu0 0.0
    %427 = vmatprep.subr.mxu0 0.0
    %428 = vmatpush1.xpose.msra.mxu0 0.0
    %429 = vmatprep.subr.mxu0 0.0
    %430 = vmatpush1.xpose.msra.mxu0 0.0
    %431 = vmatprep.subr.mxu0 0.0
    %432 = vmatpush1.xpose.msra.mxu0 0.0
    %433 = vmatprep.subr.mxu0 0.0
    %434 = vmatpush1.xpose.msra.mxu0 0.0
    %435 = vmatprep.subr.mxu0 0.0
    %436 = vmatpush1.xpose.msra.mxu0 0.0
    %437 = vmatprep.subr.mxu0 0.0
    %438 = vmatpush1.xpose.msra.mxu0 0.0
    %439 = vmatprep.subr.mxu0 0.0
    %440 = vmatpush1.xpose.msra.mxu0 0.0
    %441 = vmatprep.subr.mxu0 0.0
    %442 = vmatpush1.xpose.msra.mxu0 0.0
    %443 = vmatprep.subr.mxu0 0.0
    %444 = vmatpush1.xpose.msra.mxu0 0.0
    %445 = vmatprep.subr.mxu0 0.0
    %446 = vmatpush1.xpose.msra.mxu0 0.0
    %447 = vmatprep.subr.mxu0 0.0
    %448 = vmatpush1.xpose.msra.mxu0 0.0
    %449 = vmatprep.subr.mxu0 0.0
    %450 = vmatpush1.xpose.msra.mxu0 0.0
    %451 = vmatprep.subr.mxu0 0.0
    %452 = vmatpush1.xpose.msra.mxu0 0.0
    %453 = vmatprep.subr.mxu0 0.0
    %454 = vmatpush1.xpose.msra.mxu0 0.0
    %455 = vmatprep.subr.mxu0 0.0
    %456 = vmatpush1.xpose.msra.mxu0 0.0
    %457 = vmatprep.subr.mxu0 0.0
    %458 = vmatpush1.xpose.msra.mxu0 0.0
    %459 = vmatprep.subr.mxu0 0.0
    %460 = vmatpush1.xpose.msra.mxu0 0.0
    %461 = vmatprep.subr.mxu0 0.0
    %462 = vmatpush1.xpose.msra.mxu0 0.0
    %463 = vmatprep.subr.mxu0 0.0
    %464 = vmatpush1.xpose.msra.mxu0 0.0
    %465 = vmatprep.subr.mxu0 0.0
    %466 = vmatpush1.xpose.msra.mxu0 0.0
    %467 = vmatprep.mubr.f32.mxu0 0.0
    %468 = vmatmul.mubr.f32.gmra.mrb[0].mxu0 %v399
    %v469 = vpop.f32.mrb[0].mxu0
    %v470 = vadd.f32 0.0, %v469
    %v471 = vpop.f32.mrb[0].mxu0
    %472 = vdwg.mxu0
    %473 = vrot.lane.b32.xlu0 %v309, 96
    %v474 = vpop.permute.xlu0 %473
    %v475 = vsel %vm322, %v309, 0
    %v477 = vsel %vm322, %v474, 0
    %479 = vmatprep.subr.mxu0 0.0
    %480 = vmatpush1.xpose.msra.mxu0 %v477
    %481 = vmatprep.subr.mxu0 0.0
    %482 = vmatpush1.xpose.msra.mxu0 0.0
    %483 = vmatprep.subr.mxu0 0.0
    %484 = vmatpush1.xpose.msra.mxu0 0.0
    %485 = vmatprep.subr.mxu0 0.0
    %486 = vmatpush1.xpose.msra.mxu0 0.0
    %487 = vmatprep.subr.mxu0 0.0
    %488 = vmatpush1.xpose.msra.mxu0 0.0
    %489 = vmatprep.subr.mxu0 0.0
    %490 = vmatpush1.xpose.msra.mxu0 0.0
    %491 = vmatprep.subr.mxu0 0.0
    %492 = vmatpush1.xpose.msra.mxu0 0.0
    %493 = vmatprep.subr.mxu0 0.0
    %494 = vmatpush1.xpose.msra.mxu0 0.0
    %495 = vmatprep.subr.mxu0 0.0
    %496 = vmatpush1.xpose.msra.mxu0 0.0
    %497 = vmatprep.subr.mxu0 0.0
    %498 = vmatpush1.xpose.msra.mxu0 0.0
    %499 = vmatprep.subr.mxu0 0.0
    %500 = vmatpush1.xpose.msra.mxu0 0.0
    %501 = vmatprep.subr.mxu0 0.0
    %502 = vmatpush1.xpose.msra.mxu0 0.0
    %503 = vmatprep.subr.mxu0 0.0
    %504 = vmatpush1.xpose.msra.mxu0 0.0
    %505 = vmatprep.subr.mxu0 0.0
    %506 = vmatpush1.xpose.msra.mxu0 0.0
    %507 = vmatprep.subr.mxu0 0.0
    %508 = vmatpush1.xpose.msra.mxu0 0.0
    %509 = vmatprep.subr.mxu0 0.0
    %510 = vmatpush1.xpose.msra.mxu0 0.0
    %511 = vmatprep.subr.mxu0 0.0
    %512 = vmatpush1.xpose.msra.mxu0 0.0
    %513 = vmatprep.subr.mxu0 0.0
    %514 = vmatpush1.xpose.msra.mxu0 0.0
    %515 = vmatprep.subr.mxu0 0.0
    %516 = vmatpush1.xpose.msra.mxu0 0.0
    %517 = vmatprep.subr.mxu0 0.0
    %518 = vmatpush1.xpose.msra.mxu0 0.0
    %519 = vmatprep.subr.mxu0 0.0
    %520 = vmatpush1.xpose.msra.mxu0 0.0
    %521 = vmatprep.subr.mxu0 0.0
    %522 = vmatpush1.xpose.msra.mxu0 0.0
    %523 = vmatprep.subr.mxu0 0.0
    %524 = vmatpush1.xpose.msra.mxu0 0.0
    %525 = vmatprep.subr.mxu0 0.0
    %526 = vmatpush1.xpose.msra.mxu0 0.0
    %527 = vmatprep.subr.mxu0 0.0
    %528 = vmatpush1.xpose.msra.mxu0 0.0
    %529 = vmatprep.subr.mxu0 0.0
    %530 = vmatpush1.xpose.msra.mxu0 0.0
    %531 = vmatprep.subr.mxu0 0.0
    %532 = vmatpush1.xpose.msra.mxu0 0.0
    %533 = vmatprep.subr.mxu0 0.0
    %534 = vmatpush1.xpose.msra.mxu0 0.0
    %535 = vmatprep.subr.mxu0 0.0
    %536 = vmatpush1.xpose.msra.mxu0 0.0
    %537 = vmatprep.subr.mxu0 0.0
    %538 = vmatpush1.xpose.msra.mxu0 0.0
    %539 = vmatprep.subr.mxu0 0.0
    %540 = vmatpush1.xpose.msra.mxu0 0.0
    %541 = vmatprep.subr.mxu0 0.0
    %542 = vmatpush1.xpose.msra.mxu0 0.0
    %543 = vmatprep.mubr.f32.mxu0 0.0
    %544 = vmatmul.mubr.f32.gmra.mrb[0].mxu0 %v475
    %v545 = vpop.f32.mrb[0].mxu0
    %v546 = vadd.f32 0.0, %v545
    %v547 = vpop.f32.mrb[0].mxu0
    %548 = vdwg.mxu0
    %549 = vrot.lane.b32.xlu0 %v311, 96
    %v550 = vpop.permute.xlu0 %549
    %v551 = vsel %vm322, %v311, 0
    %v553 = vsel %vm322, %v550, 0
    %555 = vmatprep.subr.mxu0 0.0
    %556 = vmatpush1.xpose.msra.mxu0 %v553
    %557 = vmatprep.subr.mxu0 0.0
    %558 = vmatpush1.xpose.msra.mxu0 0.0
    %559 = vmatprep.subr.mxu0 0.0
    %560 = vmatpush1.xpose.msra.mxu0 0.0
    %561 = vmatprep.subr.mxu0 0.0
    %562 = vmatpush1.xpose.msra.mxu0 0.0
    %563 = vmatprep.subr.mxu0 0.0
    %564 = vmatpush1.xpose.msra.mxu0 0.0
    %565 = vmatprep.subr.mxu0 0.0
    %566 = vmatpush1.xpose.msra.mxu0 0.0
    %567 = vmatprep.subr.mxu0 0.0
    %568 = vmatpush1.xpose.msra.mxu0 0.0
    %569 = vmatprep.subr.mxu0 0.0
    %570 = vmatpush1.xpose.msra.mxu0 0.0
    %571 = vmatprep.subr.mxu0 0.0
    %572 = vmatpush1.xpose.msra.mxu0 0.0
    %573 = vmatprep.subr.mxu0 0.0
    %574 = vmatpush1.xpose.msra.mxu0 0.0
    %575 = vmatprep.subr.mxu0 0.0
    %576 = vmatpush1.xpose.msra.mxu0 0.0
    %577 = vmatprep.subr.mxu0 0.0
    %578 = vmatpush1.xpose.msra.mxu0 0.0
    %579 = vmatprep.subr.mxu0 0.0
    %580 = vmatpush1.xpose.msra.mxu0 0.0
    %581 = vmatprep.subr.mxu0 0.0
    %582 = vmatpush1.xpose.msra.mxu0 0.0
    %583 = vmatprep.subr.mxu0 0.0
    %584 = vmatpush1.xpose.msra.mxu0 0.0
    %585 = vmatprep.subr.mxu0 0.0
    %586 = vmatpush1.xpose.msra.mxu0 0.0
    %587 = vmatprep.subr.mxu0 0.0
    %588 = vmatpush1.xpose.msra.mxu0 0.0
    %589 = vmatprep.subr.mxu0 0.0
    %590 = vmatpush1.xpose.msra.mxu0 0.0
    %591 = vmatprep.subr.mxu0 0.0
    %592 = vmatpush1.xpose.msra.mxu0 0.0
    %593 = vmatprep.subr.mxu0 0.0
    %594 = vmatpush1.xpose.msra.mxu0 0.0
    %595 = vmatprep.subr.mxu0 0.0
    %596 = vmatpush1.xpose.msra.mxu0 0.0
    %597 = vmatprep.subr.mxu0 0.0
    %598 = vmatpush1.xpose.msra.mxu0 0.0
    %599 = vmatprep.subr.mxu0 0.0
    %600 = vmatpush1.xpose.msra.mxu0 0.0
    %601 = vmatprep.subr.mxu0 0.0
    %602 = vmatpush1.xpose.msra.mxu0 0.0
    %603 = vmatprep.subr.mxu0 0.0
    %604 = vmatpush1.xpose.msra.mxu0 0.0
    %605 = vmatprep.subr.mxu0 0.0
    %606 = vmatpush1.xpose.msra.mxu0 0.0
    %607 = vmatprep.subr.mxu0 0.0
    %608 = vmatpush1.xpose.msra.mxu0 0.0
    %609 = vmatprep.subr.mxu0 0.0
    %610 = vmatpush1.xpose.msra.mxu0 0.0
    %611 = vmatprep.subr.mxu0 0.0
    %612 = vmatpush1.xpose.msra.mxu0 0.0
    %613 = vmatprep.subr.mxu0 0.0
    %614 = vmatpush1.xpose.msra.mxu0 0.0
    %615 = vmatprep.subr.mxu0 0.0
    %616 = vmatpush1.xpose.msra.mxu0 0.0
    %617 = vmatprep.subr.mxu0 0.0
    %618 = vmatpush1.xpose.msra.mxu0 0.0
    %619 = vmatprep.mubr.f32.mxu0 0.0
    %620 = vmatmul.mubr.f32.gmra.mrb[0].mxu0 %v551
    %v621 = vpop.f32.mrb[0].mxu0
    %v622 = vadd.f32 0.0, %v621
    %v623 = vpop.f32.mrb[0].mxu0
    %624 = vdwg.mxu0
    %625 = vrot.lane.b32.xlu0 %v313, 96
    %v626 = vpop.permute.xlu0 %625
    %v627 = vsel %vm322, %v313, 0
    %v629 = vsel %vm322, %v626, 0
    %631 = vmatprep.subr.mxu0 0.0
    %632 = vmatpush1.xpose.msra.mxu0 %v629
    %633 = vmatprep.subr.mxu0 0.0
    %634 = vmatpush1.xpose.msra.mxu0 0.0
    %635 = vmatprep.subr.mxu0 0.0
    %636 = vmatpush1.xpose.msra.mxu0 0.0
    %637 = vmatprep.subr.mxu0 0.0
    %638 = vmatpush1.xpose.msra.mxu0 0.0
    %639 = vmatprep.subr.mxu0 0.0
    %640 = vmatpush1.xpose.msra.mxu0 0.0
    %641 = vmatprep.subr.mxu0 0.0
    %642 = vmatpush1.xpose.msra.mxu0 0.0
    %643 = vmatprep.subr.mxu0 0.0
    %644 = vmatpush1.xpose.msra.mxu0 0.0
    %645 = vmatprep.subr.mxu0 0.0
    %646 = vmatpush1.xpose.msra.mxu0 0.0
    %647 = vmatprep.subr.mxu0 0.0
    %648 = vmatpush1.xpose.msra.mxu0 0.0
    %649 = vmatprep.subr.mxu0 0.0
    %650 = vmatpush1.xpose.msra.mxu0 0.0
    %651 = vmatprep.subr.mxu0 0.0
    %652 = vmatpush1.xpose.msra.mxu0 0.0
    %653 = vmatprep.subr.mxu0 0.0
    %654 = vmatpush1.xpose.msra.mxu0 0.0
    %655 = vmatprep.subr.mxu0 0.0
    %656 = vmatpush1.xpose.msra.mxu0 0.0
    %657 = vmatprep.subr.mxu0 0.0
    %658 = vmatpush1.xpose.msra.mxu0 0.0
    %659 = vmatprep.subr.mxu0 0.0
    %660 = vmatpush1.xpose.msra.mxu0 0.0
    %661 = vmatprep.subr.mxu0 0.0
    %662 = vmatpush1.xpose.msra.mxu0 0.0
    %663 = vmatprep.subr.mxu0 0.0
    %664 = vmatpush1.xpose.msra.mxu0 0.0
    %665 = vmatprep.subr.mxu0 0.0
    %666 = vmatpush1.xpose.msra.mxu0 0.0
    %667 = vmatprep.subr.mxu0 0.0
    %668 = vmatpush1.xpose.msra.mxu0 0.0
    %669 = vmatprep.subr.mxu0 0.0
    %670 = vmatpush1.xpose.msra.mxu0 0.0
    %671 = vmatprep.subr.mxu0 0.0
    %672 = vmatpush1.xpose.msra.mxu0 0.0
    %673 = vmatprep.subr.mxu0 0.0
    %674 = vmatpush1.xpose.msra.mxu0 0.0
    %675 = vmatprep.subr.mxu0 0.0
    %676 = vmatpush1.xpose.msra.mxu0 0.0
    %677 = vmatprep.subr.mxu0 0.0
    %678 = vmatpush1.xpose.msra.mxu0 0.0
    %679 = vmatprep.subr.mxu0 0.0
    %680 = vmatpush1.xpose.msra.mxu0 0.0
    %681 = vmatprep.subr.mxu0 0.0
    %682 = vmatpush1.xpose.msra.mxu0 0.0
    %683 = vmatprep.subr.mxu0 0.0
    %684 = vmatpush1.xpose.msra.mxu0 0.0
    %685 = vmatprep.subr.mxu0 0.0
    %686 = vmatpush1.xpose.msra.mxu0 0.0
    %687 = vmatprep.subr.mxu0 0.0
    %688 = vmatpush1.xpose.msra.mxu0 0.0
    %689 = vmatprep.subr.mxu0 0.0
    %690 = vmatpush1.xpose.msra.mxu0 0.0
    %691 = vmatprep.subr.mxu0 0.0
    %692 = vmatpush1.xpose.msra.mxu0 0.0
    %693 = vmatprep.subr.mxu0 0.0
    %694 = vmatpush1.xpose.msra.mxu0 0.0
    %695 = vmatprep.mubr.f32.mxu0 0.0
    %696 = vmatmul.mubr.f32.gmra.mrb[0].mxu0 %v627
    %v697 = vpop.f32.mrb[0].mxu0
    %v698 = vadd.f32 0.0, %v697
    %v699 = vpop.f32.mrb[0].mxu0
    %700 = vdwg.mxu0
    %701 = vrot.lane.b32.xlu0 %v315, 96
    %v702 = vpop.permute.xlu0 %701
    %v703 = vsel %vm322, %v315, 0
    %v705 = vsel %vm322, %v702, 0
    %707 = vmatprep.subr.mxu0 0.0
    %708 = vmatpush1.xpose.msra.mxu0 %v705
    %709 = vmatprep.subr.mxu0 0.0
    %710 = vmatpush1.xpose.msra.mxu0 0.0
    %711 = vmatprep.subr.mxu0 0.0
    %712 = vmatpush1.xpose.msra.mxu0 0.0
    %713 = vmatprep.subr.mxu0 0.0
    %714 = vmatpush1.xpose.msra.mxu0 0.0
    %715 = vmatprep.subr.mxu0 0.0
    %716 = vmatpush1.xpose.msra.mxu0 0.0
    %717 = vmatprep.subr.mxu0 0.0
    %718 = vmatpush1.xpose.msra.mxu0 0.0
    %719 = vmatprep.subr.mxu0 0.0
    %720 = vmatpush1.xpose.msra.mxu0 0.0
    %721 = vmatprep.subr.mxu0 0.0
    %722 = vmatpush1.xpose.msra.mxu0 0.0
    %723 = vmatprep.subr.mxu0 0.0
    %724 = vmatpush1.xpose.msra.mxu0 0.0
    %725 = vmatprep.subr.mxu0 0.0
    %726 = vmatpush1.xpose.msra.mxu0 0.0
    %727 = vmatprep.subr.mxu0 0.0
    %728 = vmatpush1.xpose.msra.mxu0 0.0
    %729 = vmatprep.subr.mxu0 0.0
    %730 = vmatpush1.xpose.msra.mxu0 0.0
    %731 = vmatprep.subr.mxu0 0.0
    %732 = vmatpush1.xpose.msra.mxu0 0.0
    %733 = vmatprep.subr.mxu0 0.0
    %734 = vmatpush1.xpose.msra.mxu0 0.0
    %735 = vmatprep.subr.mxu0 0.0
    %736 = vmatpush1.xpose.msra.mxu0 0.0
    %737 = vmatprep.subr.mxu0 0.0
    %738 = vmatpush1.xpose.msra.mxu0 0.0
    %739 = vmatprep.subr.mxu0 0.0
    %740 = vmatpush1.xpose.msra.mxu0 0.0
    %741 = vmatprep.subr.mxu0 0.0
    %742 = vmatpush1.xpose.msra.mxu0 0.0
    %743 = vmatprep.subr.mxu0 0.0
    %744 = vmatpush1.xpose.msra.mxu0 0.0
    %745 = vmatprep.subr.mxu0 0.0
    %746 = vmatpush1.xpose.msra.mxu0 0.0
    %747 = vmatprep.subr.mxu0 0.0
    %748 = vmatpush1.xpose.msra.mxu0 0.0
    %749 = vmatprep.subr.mxu0 0.0
    %750 = vmatpush1.xpose.msra.mxu0 0.0
    %751 = vmatprep.subr.mxu0 0.0
    %752 = vmatpush1.xpose.msra.mxu0 0.0
    %753 = vmatprep.subr.mxu0 0.0
    %754 = vmatpush1.xpose.msra.mxu0 0.0
    %755 = vmatprep.subr.mxu0 0.0
    %756 = vmatpush1.xpose.msra.mxu0 0.0
    %757 = vmatprep.subr.mxu0 0.0
    %758 = vmatpush1.xpose.msra.mxu0 0.0
    %759 = vmatprep.subr.mxu0 0.0
    %760 = vmatpush1.xpose.msra.mxu0 0.0
    %761 = vmatprep.subr.mxu0 0.0
    %762 = vmatpush1.xpose.msra.mxu0 0.0
    %763 = vmatprep.subr.mxu0 0.0
    %764 = vmatpush1.xpose.msra.mxu0 0.0
    %765 = vmatprep.subr.mxu0 0.0
    %766 = vmatpush1.xpose.msra.mxu0 0.0
    %767 = vmatprep.subr.mxu0 0.0
    %768 = vmatpush1.xpose.msra.mxu0 0.0
    %769 = vmatprep.subr.mxu0 0.0
    %770 = vmatpush1.xpose.msra.mxu0 0.0
    %771 = vmatprep.mubr.f32.mxu0 0.0
    %772 = vmatmul.mubr.f32.gmra.mrb[0].mxu0 %v703
    %v773 = vpop.f32.mrb[0].mxu0
    %v774 = vadd.f32 0.0, %v773
    %v775 = vpop.f32.mrb[0].mxu0
    %776 = vdwg.mxu0
    %777 = vrot.lane.b32.xlu0 %v317, 96
    %v778 = vpop.permute.xlu0 %777
    %v779 = vsel %vm322, %v317, 0
    %v781 = vsel %vm322, %v778, 0
    %783 = vmatprep.subr.mxu0 0.0
    %784 = vmatpush1.xpose.msra.mxu0 %v781
    %785 = vmatprep.subr.mxu0 0.0
    %786 = vmatpush1.xpose.msra.mxu0 0.0
    %787 = vmatprep.subr.mxu0 0.0
    %788 = vmatpush1.xpose.msra.mxu0 0.0
    %789 = vmatprep.subr.mxu0 0.0
    %790 = vmatpush1.xpose.msra.mxu0 0.0
    %791 = vmatprep.subr.mxu0 0.0
    %792 = vmatpush1.xpose.msra.mxu0 0.0
    %793 = vmatprep.subr.mxu0 0.0
    %794 = vmatpush1.xpose.msra.mxu0 0.0
    %795 = vmatprep.subr.mxu0 0.0
    %796 = vmatpush1.xpose.msra.mxu0 0.0
    %797 = vmatprep.subr.mxu0 0.0
    %798 = vmatpush1.xpose.msra.mxu0 0.0
    %799 = vmatprep.subr.mxu0 0.0
    %800 = vmatpush1.xpose.msra.mxu0 0.0
    %801 = vmatprep.subr.mxu0 0.0
    %802 = vmatpush1.xpose.msra.mxu0 0.0
    %803 = vmatprep.subr.mxu0 0.0
    %804 = vmatpush1.xpose.msra.mxu0 0.0
    %805 = vmatprep.subr.mxu0 0.0
    %806 = vmatpush1.xpose.msra.mxu0 0.0
    %807 = vmatprep.subr.mxu0 0.0
    %808 = vmatpush1.xpose.msra.mxu0 0.0
    %809 = vmatprep.subr.mxu0 0.0
    %810 = vmatpush1.xpose.msra.mxu0 0.0
    %811 = vmatprep.subr.mxu0 0.0
    %812 = vmatpush1.xpose.msra.mxu0 0.0
    %813 = vmatprep.subr.mxu0 0.0
    %814 = vmatpush1.xpose.msra.mxu0 0.0
    %815 = vmatprep.subr.mxu0 0.0
    %816 = vmatpush1.xpose.msra.mxu0 0.0
    %817 = vmatprep.subr.mxu0 0.0
    %818 = vmatpush1.xpose.msra.mxu0 0.0
    %819 = vmatprep.subr.mxu0 0.0
    %820 = vmatpush1.xpose.msra.mxu0 0.0
    %821 = vmatprep.subr.mxu0 0.0
    %822 = vmatpush1.xpose.msra.mxu0 0.0
    %823 = vmatprep.subr.mxu0 0.0
    %824 = vmatpush1.xpose.msra.mxu0 0.0
    %825 = vmatprep.subr.mxu0 0.0
    %826 = vmatpush1.xpose.msra.mxu0 0.0
    %827 = vmatprep.subr.mxu0 0.0
    %828 = vmatpush1.xpose.msra.mxu0 0.0
    %829 = vmatprep.subr.mxu0 0.0
    %830 = vmatpush1.xpose.msra.mxu0 0.0
    %831 = vmatprep.subr.mxu0 0.0
    %832 = vmatpush1.xpose.msra.mxu0 0.0
    %833 = vmatprep.subr.mxu0 0.0
    %834 = vmatpush1.xpose.msra.mxu0 0.0
    %835 = vmatprep.subr.mxu0 0.0
    %836 = vmatpush1.xpose.msra.mxu0 0.0
    %837 = vmatprep.subr.mxu0 0.0
    %838 = vmatpush1.xpose.msra.mxu0 0.0
    %839 = vmatprep.subr.mxu0 0.0
    %840 = vmatpush1.xpose.msra.mxu0 0.0
    %841 = vmatprep.subr.mxu0 0.0
    %842 = vmatpush1.xpose.msra.mxu0 0.0
    %843 = vmatprep.subr.mxu0 0.0
    %844 = vmatpush1.xpose.msra.mxu0 0.0
    %845 = vmatprep.subr.mxu0 0.0
    %846 = vmatpush1.xpose.msra.mxu0 0.0
    %847 = vmatprep.mubr.f32.mxu0 0.0
    %848 = vmatmul.mubr.f32.gmra.mrb[0].mxu0 %v779
    %v849 = vpop.f32.mrb[0].mxu0
    %v850 = vadd.f32 0.0, %v849
    %v851 = vpop.f32.mrb[0].mxu0
    %852 = vdwg.mxu0
    %853 = vrot.lane.b32.xlu0 %v319, 96
    %v854 = vpop.permute.xlu0 %853
    %v855 = vsel %vm322, %v319, 0
    %v857 = vsel %vm322, %v854, 0
    %859 = vmatprep.subr.mxu0 0.0
    %860 = vmatpush1.xpose.msra.mxu0 %v857
    %861 = vmatprep.subr.mxu0 0.0
    %862 = vmatpush1.xpose.msra.mxu0 0.0
    %863 = vmatprep.subr.mxu0 0.0
    %864 = vmatpush1.xpose.msra.mxu0 0.0
    %865 = vmatprep.subr.mxu0 0.0
    %866 = vmatpush1.xpose.msra.mxu0 0.0
    %867 = vmatprep.subr.mxu0 0.0
    %868 = vmatpush1.xpose.msra.mxu0 0.0
    %869 = vmatprep.subr.mxu0 0.0
    %870 = vmatpush1.xpose.msra.mxu0 0.0
    %871 = vmatprep.subr.mxu0 0.0
    %872 = vmatpush1.xpose.msra.mxu0 0.0
    %873 = vmatprep.subr.mxu0 0.0
    %874 = vmatpush1.xpose.msra.mxu0 0.0
    %875 = vmatprep.subr.mxu0 0.0
    %876 = vmatpush1.xpose.msra.mxu0 0.0
    %877 = vmatprep.subr.mxu0 0.0
    %878 = vmatpush1.xpose.msra.mxu0 0.0
    %879 = vmatprep.subr.mxu0 0.0
    %880 = vmatpush1.xpose.msra.mxu0 0.0
    %881 = vmatprep.subr.mxu0 0.0
    %882 = vmatpush1.xpose.msra.mxu0 0.0
    %883 = vmatprep.subr.mxu0 0.0
    %884 = vmatpush1.xpose.msra.mxu0 0.0
    %885 = vmatprep.subr.mxu0 0.0
    %886 = vmatpush1.xpose.msra.mxu0 0.0
    %887 = vmatprep.subr.mxu0 0.0
    %888 = vmatpush1.xpose.msra.mxu0 0.0
    %889 = vmatprep.subr.mxu0 0.0
    %890 = vmatpush1.xpose.msra.mxu0 0.0
    %891 = vmatprep.subr.mxu0 0.0
    %892 = vmatpush1.xpose.msra.mxu0 0.0
    %893 = vmatprep.subr.mxu0 0.0
    %894 = vmatpush1.xpose.msra.mxu0 0.0
    %895 = vmatprep.subr.mxu0 0.0
    %896 = vmatpush1.xpose.msra.mxu0 0.0
    %897 = vmatprep.subr.mxu0 0.0
    %898 = vmatpush1.xpose.msra.mxu0 0.0
    %899 = vmatprep.subr.mxu0 0.0
    %900 = vmatpush1.xpose.msra.mxu0 0.0
    %901 = vmatprep.subr.mxu0 0.0
    %902 = vmatpush1.xpose.msra.mxu0 0.0
    %903 = vmatprep.subr.mxu0 0.0
    %904 = vmatpush1.xpose.msra.mxu0 0.0
    %905 = vmatprep.subr.mxu0 0.0
    %906 = vmatpush1.xpose.msra.mxu0 0.0
    %907 = vmatprep.subr.mxu0 0.0
    %908 = vmatpush1.xpose.msra.mxu0 0.0
    %909 = vmatprep.subr.mxu0 0.0
    %910 = vmatpush1.xpose.msra.mxu0 0.0
    %911 = vmatprep.subr.mxu0 0.0
    %912 = vmatpush1.xpose.msra.mxu0 0.0
    %913 = vmatprep.subr.mxu0 0.0
    %914 = vmatpush1.xpose.msra.mxu0 0.0
    %915 = vmatprep.subr.mxu0 0.0
    %916 = vmatpush1.xpose.msra.mxu0 0.0
    %917 = vmatprep.subr.mxu0 0.0
    %918 = vmatpush1.xpose.msra.mxu0 0.0
    %919 = vmatprep.subr.mxu0 0.0
    %920 = vmatpush1.xpose.msra.mxu0 0.0
    %921 = vmatprep.subr.mxu0 0.0
    %922 = vmatpush1.xpose.msra.mxu0 0.0
    %923 = vmatprep.mubr.f32.mxu0 0.0
    %924 = vmatmul.mubr.f32.gmra.mrb[0].mxu0 %v855
    %v925 = vpop.f32.mrb[0].mxu0
    %v926 = vadd.f32 0.0, %v925
    %v927 = vpop.f32.mrb[0].mxu0
    %928 = vdwg.mxu0
    %v929 = vmul.f32 %v394, 0.35355338
    %v930 = vmul.f32 %v470, 0.35355338
    %v931 = vmul.f32 %v546, 0.35355338
    %v932 = vmul.f32 %v622, 0.35355338
    %v933 = vmul.f32 %v698, 0.35355338
    %v934 = vmul.f32 %v774, 0.35355338
    %v935 = vmul.f32 %v850, 0.35355338
    %v936 = vmul.f32 %v926, 0.35355338
    %v937 = vlaneseq
    %v938 = vshrl.u32 %v937, 7
    %v939 = vsub.s32 0, %v938
    %v940 = vrot.slane %v208, %v939
    %v941 = vlaneseq
    %v942 = vshrl.u32 %v941, 7
    %v943 = vsub.s32 0, %v942
    %v944 = vrot.slane %v215, %v943
    %v947 = vadd.f32 %v929, %v940
    %v948 = vadd.f32 %v930, %v944
    %v949 = vadd.f32 %v931, %v940
    %v950 = vadd.f32 %v932, %v944
    %v951 = vadd.f32 %v933, %v940
    %v952 = vadd.f32 %v934, %v944
    %v953 = vadd.f32 %v935, %v940
    %v954 = vadd.f32 %v936, %v944
    %v955 = vsel %vm322, %v947, -inf
    %956 = vmax.xlane.f32.xlu0 %v955
    %v957 = vpop.xlane.xlu0 %956
    %v958 = vsel %vm322, %v948, -inf
    %959 = vmax.xlane.f32.xlu0 %v958
    %v960 = vpop.xlane.xlu0 %959
    %v961 = vsel %vm322, %v949, -inf
    %962 = vmax.xlane.f32.xlu0 %v961
    %v963 = vpop.xlane.xlu0 %962
    %v964 = vsel %vm322, %v950, -inf
    %965 = vmax.xlane.f32.xlu0 %v964
    %v966 = vpop.xlane.xlu0 %965
    %v967 = vsel %vm322, %v951, -inf
    %968 = vmax.xlane.f32.xlu0 %v967
    %v969 = vpop.xlane.xlu0 %968
    %v970 = vsel %vm322, %v952, -inf
    %971 = vmax.xlane.f32.xlu0 %v970
    %v972 = vpop.xlane.xlu0 %971
    %v973 = vsel %vm322, %v953, -inf
    %974 = vmax.xlane.f32.xlu0 %v973
    %v975 = vpop.xlane.xlu0 %974
    %v976 = vsel %vm322, %v954, -inf
    %977 = vmax.xlane.f32.xlu0 %v976
    %v978 = vpop.xlane.xlu0 %977
    %v979 = vsub.f32 %v947, %v957
    %v980 = vsub.f32 %v948, %v960
    %v981 = vsub.f32 %v949, %v963
    %v982 = vsub.f32 %v950, %v966
    %v983 = vsub.f32 %v951, %v969
    %v984 = vsub.f32 %v952, %v972
    %v985 = vsub.f32 %v953, %v975
    %v986 = vsub.f32 %v954, %v978
    %v987 = vmul.f32 %v979, 1.442695
    %v988 = vpow.pop %v987
    %v989 = vmul.f32 %v980, 1.442695
    %v990 = vpow.pop %v989
    %v991 = vmul.f32 %v981, 1.442695
    %v992 = vpow.pop %v991
    %v993 = vmul.f32 %v982, 1.442695
    %v994 = vpow.pop %v993
    %v995 = vmul.f32 %v983, 1.442695
    %v996 = vpow.pop %v995
    %v997 = vmul.f32 %v984, 1.442695
    %v998 = vpow.pop %v997
    %v999 = vmul.f32 %v985, 1.442695
    %v1000 = vpow.pop %v999
    %v1001 = vmul.f32 %v986, 1.442695
    %v1002 = vpow.pop %v1001
    %v1003 = vsel %vm322, %v988, 0.0
    %1004 = vadd.xlane.f32.xlu0 %v1003
    %v1005 = vpop.xlane.xlu0 %1004
    %v1006 = vsel %vm322, %v990, 0.0
    %1007 = vadd.xlane.f32.xlu0 %v1006
    %v1008 = vpop.xlane.xlu0 %1007
    %v1009 = vsel %vm322, %v992, 0.0
    %1010 = vadd.xlane.f32.xlu0 %v1009
    %v1011 = vpop.xlane.xlu0 %1010
    %v1012 = vsel %vm322, %v994, 0.0
    %1013 = vadd.xlane.f32.xlu0 %v1012
    %v1014 = vpop.xlane.xlu0 %1013
    %v1015 = vsel %vm322, %v996, 0.0
    %1016 = vadd.xlane.f32.xlu0 %v1015
    %v1017 = vpop.xlane.xlu0 %1016
    %v1018 = vsel %vm322, %v998, 0.0
    %1019 = vadd.xlane.f32.xlu0 %v1018
    %v1020 = vpop.xlane.xlu0 %1019
    %v1021 = vsel %vm322, %v1000, 0.0
    %1022 = vadd.xlane.f32.xlu0 %v1021
    %v1023 = vpop.xlane.xlu0 %1022
    %v1024 = vsel %vm322, %v1002, 0.0
    %1025 = vadd.xlane.f32.xlu0 %v1024
    %v1026 = vpop.xlane.xlu0 %1025
    %v1027 = vrcp.pop %v1005
    %v1028 = vrcp.pop %v1008
    %v1029 = vrcp.pop %v1011
    %v1030 = vrcp.pop %v1014
    %v1031 = vrcp.pop %v1017
    %v1032 = vrcp.pop %v1020
    %v1033 = vrcp.pop %v1023
    %v1034 = vrcp.pop %v1026
    %v1035 = vmul.f32 %v988, %v1027
    %v1036 = vmul.f32 %v990, %v1028
    %v1037 = vmul.f32 %v992, %v1029
    %v1038 = vmul.f32 %v994, %v1030
    %v1039 = vmul.f32 %v996, %v1031
    %v1040 = vmul.f32 %v998, %v1032
    %v1041 = vmul.f32 %v1000, %v1033
    %v1042 = vmul.f32 %v1002, %v1034
    %1043 = vrot.lane.b32.xlu0 %v298, 64
    %v1044 = vpop.permute.xlu0 %1043
    %v1047 = vsel %vm322, %v1035, 0
    %1049 = vmatprep.subr.mxu0 0.0
    %1050 = vmatpush1.msra.mxu0 %v1044
    %1051 = vmatprep.subr.mxu0 0.0
    %1052 = vmatpush1.msra.mxu0 0.0
    %1053 = vmatprep.subr.mxu0 0.0
    %1054 = vmatpush1.msra.mxu0 0.0
    %1055 = vmatprep.subr.mxu0 0.0
    %1056 = vmatpush1.msra.mxu0 0.0
    %1057 = vmatprep.subr.mxu0 0.0
    %1058 = vmatpush1.msra.mxu0 0.0
    %1059 = vmatprep.subr.mxu0 0.0
    %1060 = vmatpush1.msra.mxu0 0.0
    %1061 = vmatprep.subr.mxu0 0.0
    %1062 = vmatpush1.msra.mxu0 0.0
    %1063 = vmatprep.subr.mxu0 0.0
    %1064 = vmatpush1.msra.mxu0 0.0
    %1065 = vmatprep.subr.mxu0 0.0
    %1066 = vmatpush1.msra.mxu0 0.0
    %1067 = vmatprep.subr.mxu0 0.0
    %1068 = vmatpush1.msra.mxu0 0.0
    %1069 = vmatprep.subr.mxu0 0.0
    %1070 = vmatpush1.msra.mxu0 0.0
    %1071 = vmatprep.subr.mxu0 0.0
    %1072 = vmatpush1.msra.mxu0 0.0
    %1073 = vmatprep.subr.mxu0 0.0
    %1074 = vmatpush1.msra.mxu0 0.0
    %1075 = vmatprep.subr.mxu0 0.0
    %1076 = vmatpush1.msra.mxu0 0.0
    %1077 = vmatprep.subr.mxu0 0.0
    %1078 = vmatpush1.msra.mxu0 0.0
    %1079 = vmatprep.subr.mxu0 0.0
    %1080 = vmatpush1.msra.mxu0 0.0
    %1081 = vmatprep.subr.mxu0 0.0
    %1082 = vmatpush1.msra.mxu0 0.0
    %1083 = vmatprep.subr.mxu0 0.0
    %1084 = vmatpush1.msra.mxu0 0.0
    %1085 = vmatprep.subr.mxu0 0.0
    %1086 = vmatpush1.msra.mxu0 0.0
    %1087 = vmatprep.subr.mxu0 0.0
    %1088 = vmatpush1.msra.mxu0 0.0
    %1089 = vmatprep.subr.mxu0 0.0
    %1090 = vmatpush1.msra.mxu0 0.0
    %1091 = vmatprep.subr.mxu0 0.0
    %1092 = vmatpush1.msra.mxu0 0.0
    %1093 = vmatprep.subr.mxu0 0.0
    %1094 = vmatpush1.msra.mxu0 0.0
    %1095 = vmatprep.subr.mxu0 0.0
    %1096 = vmatpush1.msra.mxu0 0.0
    %1097 = vmatprep.subr.mxu0 0.0
    %1098 = vmatpush1.msra.mxu0 0.0
    %1099 = vmatprep.subr.mxu0 0.0
    %1100 = vmatpush1.msra.mxu0 0.0
    %1101 = vmatprep.subr.mxu0 0.0
    %1102 = vmatpush1.msra.mxu0 0.0
    %1103 = vmatprep.subr.mxu0 0.0
    %1104 = vmatpush1.msra.mxu0 0.0
    %1105 = vmatprep.subr.mxu0 0.0
    %1106 = vmatpush1.msra.mxu0 0.0
    %1107 = vmatprep.subr.mxu0 0.0
    %1108 = vmatpush1.msra.mxu0 0.0
    %1109 = vmatprep.subr.mxu0 0.0
    %1110 = vmatpush1.msra.mxu0 0.0
    %1111 = vmatprep.subr.mxu0 0.0
    %1112 = vmatpush1.msra.mxu0 0.0
    %1113 = vmatprep.mubr.f32.mxu0 0.0
    %1114 = vmatmul.mubr.f32.gmra.mrb[0].mxu0 %v1047
    %v1115 = vpop.f32.mrb[0].mxu0
    %v1116 = vadd.f32 0.0, %v1115
    %v1117 = vpop.f32.mrb[0].mxu0
    %1118 = vdwg.mxu0
    %1119 = vrot.lane.b32.xlu0 %v303, 64
    %v1120 = vpop.permute.xlu0 %1119
    %v1123 = vsel %vm322, %v1036, 0
    %1125 = vmatprep.subr.mxu0 0.0
    %1126 = vmatpush1.msra.mxu0 %v1120
    %1127 = vmatprep.subr.mxu0 0.0
    %1128 = vmatpush1.msra.mxu0 0.0
    %1129 = vmatprep.subr.mxu0 0.0
    %1130 = vmatpush1.msra.mxu0 0.0
    %1131 = vmatprep.subr.mxu0 0.0
    %1132 = vmatpush1.msra.mxu0 0.0
    %1133 = vmatprep.subr.mxu0 0.0
    %1134 = vmatpush1.msra.mxu0 0.0
    %1135 = vmatprep.subr.mxu0 0.0
    %1136 = vmatpush1.msra.mxu0 0.0
    %1137 = vmatprep.subr.mxu0 0.0
    %1138 = vmatpush1.msra.mxu0 0.0
    %1139 = vmatprep.subr.mxu0 0.0
    %1140 = vmatpush1.msra.mxu0 0.0
    %1141 = vmatprep.subr.mxu0 0.0
    %1142 = vmatpush1.msra.mxu0 0.0
    %1143 = vmatprep.subr.mxu0 0.0
    %1144 = vmatpush1.msra.mxu0 0.0
    %1145 = vmatprep.subr.mxu0 0.0
    %1146 = vmatpush1.msra.mxu0 0.0
    %1147 = vmatprep.subr.mxu0 0.0
    %1148 = vmatpush1.msra.mxu0 0.0
    %1149 = vmatprep.subr.mxu0 0.0
    %1150 = vmatpush1.msra.mxu0 0.0
    %1151 = vmatprep.subr.mxu0 0.0
    %1152 = vmatpush1.msra.mxu0 0.0
    %1153 = vmatprep.subr.mxu0 0.0
    %1154 = vmatpush1.msra.mxu0 0.0
    %1155 = vmatprep.subr.mxu0 0.0
    %1156 = vmatpush1.msra.mxu0 0.0
    %1157 = vmatprep.subr.mxu0 0.0
    %1158 = vmatpush1.msra.mxu0 0.0
    %1159 = vmatprep.subr.mxu0 0.0
    %1160 = vmatpush1.msra.mxu0 0.0
    %1161 = vmatprep.subr.mxu0 0.0
    %1162 = vmatpush1.msra.mxu0 0.0
    %1163 = vmatprep.subr.mxu0 0.0
    %1164 = vmatpush1.msra.mxu0 0.0
    %1165 = vmatprep.subr.mxu0 0.0
    %1166 = vmatpush1.msra.mxu0 0.0
    %1167 = vmatprep.subr.mxu0 0.0
    %1168 = vmatpush1.msra.mxu0 0.0
    %1169 = vmatprep.subr.mxu0 0.0
    %1170 = vmatpush1.msra.mxu0 0.0
    %1171 = vmatprep.subr.mxu0 0.0
    %1172 = vmatpush1.msra.mxu0 0.0
    %1173 = vmatprep.subr.mxu0 0.0
    %1174 = vmatpush1.msra.mxu0 0.0
    %1175 = vmatprep.subr.mxu0 0.0
    %1176 = vmatpush1.msra.mxu0 0.0
    %1177 = vmatprep.subr.mxu0 0.0
    %1178 = vmatpush1.msra.mxu0 0.0
    %1179 = vmatprep.subr.mxu0 0.0
    %1180 = vmatpush1.msra.mxu0 0.0
    %1181 = vmatprep.subr.mxu0 0.0
    %1182 = vmatpush1.msra.mxu0 0.0
    %1183 = vmatprep.subr.mxu0 0.0
    %1184 = vmatpush1.msra.mxu0 0.0
    %1185 = vmatprep.subr.mxu0 0.0
    %1186 = vmatpush1.msra.mxu0 0.0
    %1187 = vmatprep.subr.mxu0 0.0
    %1188 = vmatpush1.msra.mxu0 0.0
    %1189 = vmatprep.mubr.f32.mxu0 0.0
    %1190 = vmatmul.mubr.f32.gmra.mrb[0].mxu0 %v1123
    %v1191 = vpop.f32.mrb[0].mxu0
    %v1192 = vadd.f32 0.0, %v1191
    %v1193 = vpop.f32.mrb[0].mxu0
    %1194 = vdwg.mxu0
    %1195 = vrot.lane.b32.xlu0 %v309, 64
    %v1196 = vpop.permute.xlu0 %1195
    %v1199 = vsel %vm322, %v1037, 0
    %1201 = vmatprep.subr.mxu0 0.0
    %1202 = vmatpush1.msra.mxu0 %v1196
    %1203 = vmatprep.subr.mxu0 0.0
    %1204 = vmatpush1.msra.mxu0 0.0
    %1205 = vmatprep.subr.mxu0 0.0
    %1206 = vmatpush1.msra.mxu0 0.0
    %1207 = vmatprep.subr.mxu0 0.0
    %1208 = vmatpush1.msra.mxu0 0.0
    %1209 = vmatprep.subr.mxu0 0.0
    %1210 = vmatpush1.msra.mxu0 0.0
    %1211 = vmatprep.subr.mxu0 0.0
    %1212 = vmatpush1.msra.mxu0 0.0
    %1213 = vmatprep.subr.mxu0 0.0
    %1214 = vmatpush1.msra.mxu0 0.0
    %1215 = vmatprep.subr.mxu0 0.0
    %1216 = vmatpush1.msra.mxu0 0.0
    %1217 = vmatprep.subr.mxu0 0.0
    %1218 = vmatpush1.msra.mxu0 0.0
    %1219 = vmatprep.subr.mxu0 0.0
    %1220 = vmatpush1.msra.mxu0 0.0
    %1221 = vmatprep.subr.mxu0 0.0
    %1222 = vmatpush1.msra.mxu0 0.0
    %1223 = vmatprep.subr.mxu0 0.0
    %1224 = vmatpush1.msra.mxu0 0.0
    %1225 = vmatprep.subr.mxu0 0.0
    %1226 = vmatpush1.msra.mxu0 0.0
    %1227 = vmatprep.subr.mxu0 0.0
    %1228 = vmatpush1.msra.mxu0 0.0
    %1229 = vmatprep.subr.mxu0 0.0
    %1230 = vmatpush1.msra.mxu0 0.0
    %1231 = vmatprep.subr.mxu0 0.0
    %1232 = vmatpush1.msra.mxu0 0.0
    %1233 = vmatprep.subr.mxu0 0.0
    %1234 = vmatpush1.msra.mxu0 0.0
    %1235 = vmatprep.subr.mxu0 0.0
    %1236 = vmatpush1.msra.mxu0 0.0
    %1237 = vmatprep.subr.mxu0 0.0
    %1238 = vmatpush1.msra.mxu0 0.0
    %1239 = vmatprep.subr.mxu0 0.0
    %1240 = vmatpush1.msra.mxu0 0.0
    %1241 = vmatprep.subr.mxu0 0.0
    %1242 = vmatpush1.msra.mxu0 0.0
    %1243 = vmatprep.subr.mxu0 0.0
    %1244 = vmatpush1.msra.mxu0 0.0
    %1245 = vmatprep.subr.mxu0 0.0
    %1246 = vmatpush1.msra.mxu0 0.0
    %1247 = vmatprep.subr.mxu0 0.0
    %1248 = vmatpush1.msra.mxu0 0.0
    %1249 = vmatprep.subr.mxu0 0.0
    %1250 = vmatpush1.msra.mxu0 0.0
    %1251 = vmatprep.subr.mxu0 0.0
    %1252 = vmatpush1.msra.mxu0 0.0
    %1253 = vmatprep.subr.mxu0 0.0
    %1254 = vmatpush1.msra.mxu0 0.0
    %1255 = vmatprep.subr.mxu0 0.0
    %1256 = vmatpush1.msra.mxu0 0.0
    %1257 = vmatprep.subr.mxu0 0.0
    %1258 = vmatpush1.msra.mxu0 0.0
    %1259 = vmatprep.subr.mxu0 0.0
    %1260 = vmatpush1.msra.mxu0 0.0
    %1261 = vmatprep.subr.mxu0 0.0
    %1262 = vmatpush1.msra.mxu0 0.0
    %1263 = vmatprep.subr.mxu0 0.0
    %1264 = vmatpush1.msra.mxu0 0.0
    %1265 = vmatprep.mubr.f32.mxu0 0.0
    %1266 = vmatmul.mubr.f32.gmra.mrb[0].mxu0 %v1199
    %v1267 = vpop.f32.mrb[0].mxu0
    %v1268 = vadd.f32 0.0, %v1267
    %v1269 = vpop.f32.mrb[0].mxu0
    %1270 = vdwg.mxu0
    %1271 = vrot.lane.b32.xlu0 %v311, 64
    %v1272 = vpop.permute.xlu0 %1271
    %v1275 = vsel %vm322, %v1038, 0
    %1277 = vmatprep.subr.mxu0 0.0
    %1278 = vmatpush1.msra.mxu0 %v1272
    %1279 = vmatprep.subr.mxu0 0.0
    %1280 = vmatpush1.msra.mxu0 0.0
    %1281 = vmatprep.subr.mxu0 0.0
    %1282 = vmatpush1.msra.mxu0 0.0
    %1283 = vmatprep.subr.mxu0 0.0
    %1284 = vmatpush1.msra.mxu0 0.0
    %1285 = vmatprep.subr.mxu0 0.0
    %1286 = vmatpush1.msra.mxu0 0.0
    %1287 = vmatprep.subr.mxu0 0.0
    %1288 = vmatpush1.msra.mxu0 0.0
    %1289 = vmatprep.subr.mxu0 0.0
    %1290 = vmatpush1.msra.mxu0 0.0
    %1291 = vmatprep.subr.mxu0 0.0
    %1292 = vmatpush1.msra.mxu0 0.0
    %1293 = vmatprep.subr.mxu0 0.0
    %1294 = vmatpush1.msra.mxu0 0.0
    %1295 = vmatprep.subr.mxu0 0.0
    %1296 = vmatpush1.msra.mxu0 0.0
    %1297 = vmatprep.subr.mxu0 0.0
    %1298 = vmatpush1.msra.mxu0 0.0
    %1299 = vmatprep.subr.mxu0 0.0
    %1300 = vmatpush1.msra.mxu0 0.0
    %1301 = vmatprep.subr.mxu0 0.0
    %1302 = vmatpush1.msra.mxu0 0.0
    %1303 = vmatprep.subr.mxu0 0.0
    %1304 = vmatpush1.msra.mxu0 0.0
    %1305 = vmatprep.subr.mxu0 0.0
    %1306 = vmatpush1.msra.mxu0 0.0
    %1307 = vmatprep.subr.mxu0 0.0
    %1308 = vmatpush1.msra.mxu0 0.0
    %1309 = vmatprep.subr.mxu0 0.0
    %1310 = vmatpush1.msra.mxu0 0.0
    %1311 = vmatprep.subr.mxu0 0.0
    %1312 = vmatpush1.msra.mxu0 0.0
    %1313 = vmatprep.subr.mxu0 0.0
    %1314 = vmatpush1.msra.mxu0 0.0
    %1315 = vmatprep.subr.mxu0 0.0
    %1316 = vmatpush1.msra.mxu0 0.0
    %1317 = vmatprep.subr.mxu0 0.0
    %1318 = vmatpush1.msra.mxu0 0.0
    %1319 = vmatprep.subr.mxu0 0.0
    %1320 = vmatpush1.msra.mxu0 0.0
    %1321 = vmatprep.subr.mxu0 0.0
    %1322 = vmatpush1.msra.mxu0 0.0
    %1323 = vmatprep.subr.mxu0 0.0
    %1324 = vmatpush1.msra.mxu0 0.0
    %1325 = vmatprep.subr.mxu0 0.0
    %1326 = vmatpush1.msra.mxu0 0.0
    %1327 = vmatprep.subr.mxu0 0.0
    %1328 = vmatpush1.msra.mxu0 0.0
    %1329 = vmatprep.subr.mxu0 0.0
    %1330 = vmatpush1.msra.mxu0 0.0
    %1331 = vmatprep.subr.mxu0 0.0
    %1332 = vmatpush1.msra.mxu0 0.0
    %1333 = vmatprep.subr.mxu0 0.0
    %1334 = vmatpush1.msra.mxu0 0.0
    %1335 = vmatprep.subr.mxu0 0.0
    %1336 = vmatpush1.msra.mxu0 0.0
    %1337 = vmatprep.subr.mxu0 0.0
    %1338 = vmatpush1.msra.mxu0 0.0
    %1339 = vmatprep.subr.mxu0 0.0
    %1340 = vmatpush1.msra.mxu0 0.0
    %1341 = vmatprep.mubr.f32.mxu0 0.0
    %1342 = vmatmul.mubr.f32.gmra.mrb[0].mxu0 %v1275
    %v1343 = vpop.f32.mrb[0].mxu0
    %v1344 = vadd.f32 0.0, %v1343
    %v1345 = vpop.f32.mrb[0].mxu0
    %1346 = vdwg.mxu0
    %1347 = vrot.lane.b32.xlu0 %v313, 64
    %v1348 = vpop.permute.xlu0 %1347
    %v1351 = vsel %vm322, %v1039, 0
    %1353 = vmatprep.subr.mxu0 0.0
    %1354 = vmatpush1.msra.mxu0 %v1348
    %1355 = vmatprep.subr.mxu0 0.0
    %1356 = vmatpush1.msra.mxu0 0.0
    %1357 = vmatprep.subr.mxu0 0.0
    %1358 = vmatpush1.msra.mxu0 0.0
    %1359 = vmatprep.subr.mxu0 0.0
    %1360 = vmatpush1.msra.mxu0 0.0
    %1361 = vmatprep.subr.mxu0 0.0
    %1362 = vmatpush1.msra.mxu0 0.0
    %1363 = vmatprep.subr.mxu0 0.0
    %1364 = vmatpush1.msra.mxu0 0.0
    %1365 = vmatprep.subr.mxu0 0.0
    %1366 = vmatpush1.msra.mxu0 0.0
    %1367 = vmatprep.subr.mxu0 0.0
    %1368 = vmatpush1.msra.mxu0 0.0
    %1369 = vmatprep.subr.mxu0 0.0
    %1370 = vmatpush1.msra.mxu0 0.0
    %1371 = vmatprep.subr.mxu0 0.0
    %1372 = vmatpush1.msra.mxu0 0.0
    %1373 = vmatprep.subr.mxu0 0.0
    %1374 = vmatpush1.msra.mxu0 0.0
    %1375 = vmatprep.subr.mxu0 0.0
    %1376 = vmatpush1.msra.mxu0 0.0
    %1377 = vmatprep.subr.mxu0 0.0
    %1378 = vmatpush1.msra.mxu0 0.0
    %1379 = vmatprep.subr.mxu0 0.0
    %1380 = vmatpush1.msra.mxu0 0.0
    %1381 = vmatprep.subr.mxu0 0.0
    %1382 = vmatpush1.msra.mxu0 0.0
    %1383 = vmatprep.subr.mxu0 0.0
    %1384 = vmatpush1.msra.mxu0 0.0
    %1385 = vmatprep.subr.mxu0 0.0
    %1386 = vmatpush1.msra.mxu0 0.0
    %1387 = vmatprep.subr.mxu0 0.0
    %1388 = vmatpush1.msra.mxu0 0.0
    %1389 = vmatprep.subr.mxu0 0.0
    %1390 = vmatpush1.msra.mxu0 0.0
    %1391 = vmatprep.subr.mxu0 0.0
    %1392 = vmatpush1.msra.mxu0 0.0
    %1393 = vmatprep.subr.mxu0 0.0
    %1394 = vmatpush1.msra.mxu0 0.0
    %1395 = vmatprep.subr.mxu0 0.0
    %1396 = vmatpush1.msra.mxu0 0.0
    %1397 = vmatprep.subr.mxu0 0.0
    %1398 = vmatpush1.msra.mxu0 0.0
    %1399 = vmatprep.subr.mxu0 0.0
    %1400 = vmatpush1.msra.mxu0 0.0
    %1401 = vmatprep.subr.mxu0 0.0
    %1402 = vmatpush1.msra.mxu0 0.0
    %1403 = vmatprep.subr.mxu0 0.0
    %1404 = vmatpush1.msra.mxu0 0.0
    %1405 = vmatprep.subr.mxu0 0.0
    %1406 = vmatpush1.msra.mxu0 0.0
    %1407 = vmatprep.subr.mxu0 0.0
    %1408 = vmatpush1.msra.mxu0 0.0
    %1409 = vmatprep.subr.mxu0 0.0
    %1410 = vmatpush1.msra.mxu0 0.0
    %1411 = vmatprep.subr.mxu0 0.0
    %1412 = vmatpush1.msra.mxu0 0.0
    %1413 = vmatprep.subr.mxu0 0.0
    %1414 = vmatpush1.msra.mxu0 0.0
    %1415 = vmatprep.subr.mxu0 0.0
    %1416 = vmatpush1.msra.mxu0 0.0
    %1417 = vmatprep.mubr.f32.mxu0 0.0
    %1418 = vmatmul.mubr.f32.gmra.mrb[0].mxu0 %v1351
    %v1419 = vpop.f32.mrb[0].mxu0
    %v1420 = vadd.f32 0.0, %v1419
    %v1421 = vpop.f32.mrb[0].mxu0
    %1422 = vdwg.mxu0
    %1423 = vrot.lane.b32.xlu0 %v315, 64
    %v1424 = vpop.permute.xlu0 %1423
    %v1427 = vsel %vm322, %v1040, 0
    %1429 = vmatprep.subr.mxu0 0.0
    %1430 = vmatpush1.msra.mxu0 %v1424
    %1431 = vmatprep.subr.mxu0 0.0
    %1432 = vmatpush1.msra.mxu0 0.0
    %1433 = vmatprep.subr.mxu0 0.0
    %1434 = vmatpush1.msra.mxu0 0.0
    %1435 = vmatprep.subr.mxu0 0.0
    %1436 = vmatpush1.msra.mxu0 0.0
    %1437 = vmatprep.subr.mxu0 0.0
    %1438 = vmatpush1.msra.mxu0 0.0
    %1439 = vmatprep.subr.mxu0 0.0
    %1440 = vmatpush1.msra.mxu0 0.0
    %1441 = vmatprep.subr.mxu0 0.0
    %1442 = vmatpush1.msra.mxu0 0.0
    %1443 = vmatprep.subr.mxu0 0.0
    %1444 = vmatpush1.msra.mxu0 0.0
    %1445 = vmatprep.subr.mxu0 0.0
    %1446 = vmatpush1.msra.mxu0 0.0
    %1447 = vmatprep.subr.mxu0 0.0
    %1448 = vmatpush1.msra.mxu0 0.0
    %1449 = vmatprep.subr.mxu0 0.0
    %1450 = vmatpush1.msra.mxu0 0.0
    %1451 = vmatprep.subr.mxu0 0.0
    %1452 = vmatpush1.msra.mxu0 0.0
    %1453 = vmatprep.subr.mxu0 0.0
    %1454 = vmatpush1.msra.mxu0 0.0
    %1455 = vmatprep.subr.mxu0 0.0
    %1456 = vmatpush1.msra.mxu0 0.0
    %1457 = vmatprep.subr.mxu0 0.0
    %1458 = vmatpush1.msra.mxu0 0.0
    %1459 = vmatprep.subr.mxu0 0.0
    %1460 = vmatpush1.msra.mxu0 0.0
    %1461 = vmatprep.subr.mxu0 0.0
    %1462 = vmatpush1.msra.mxu0 0.0
    %1463 = vmatprep.subr.mxu0 0.0
    %1464 = vmatpush1.msra.mxu0 0.0
    %1465 = vmatprep.subr.mxu0 0.0
    %1466 = vmatpush1.msra.mxu0 0.0
    %1467 = vmatprep.subr.mxu0 0.0
    %1468 = vmatpush1.msra.mxu0 0.0
    %1469 = vmatprep.subr.mxu0 0.0
    %1470 = vmatpush1.msra.mxu0 0.0
    %1471 = vmatprep.subr.mxu0 0.0
    %1472 = vmatpush1.msra.mxu0 0.0
    %1473 = vmatprep.subr.mxu0 0.0
    %1474 = vmatpush1.msra.mxu0 0.0
    %1475 = vmatprep.subr.mxu0 0.0
    %1476 = vmatpush1.msra.mxu0 0.0
    %1477 = vmatprep.subr.mxu0 0.0
    %1478 = vmatpush1.msra.mxu0 0.0
    %1479 = vmatprep.subr.mxu0 0.0
    %1480 = vmatpush1.msra.mxu0 0.0
    %1481 = vmatprep.subr.mxu0 0.0
    %1482 = vmatpush1.msra.mxu0 0.0
    %1483 = vmatprep.subr.mxu0 0.0
    %1484 = vmatpush1.msra.mxu0 0.0
    %1485 = vmatprep.subr.mxu0 0.0
    %1486 = vmatpush1.msra.mxu0 0.0
    %1487 = vmatprep.subr.mxu0 0.0
    %1488 = vmatpush1.msra.mxu0 0.0
    %1489 = vmatprep.subr.mxu0 0.0
    %1490 = vmatpush1.msra.mxu0 0.0
    %1491 = vmatprep.subr.mxu0 0.0
    %1492 = vmatpush1.msra.mxu0 0.0
    %1493 = vmatprep.mubr.f32.mxu0 0.0
    %1494 = vmatmul.mubr.f32.gmra.mrb[0].mxu0 %v1427
    %v1495 = vpop.f32.mrb[0].mxu0
    %v1496 = vadd.f32 0.0, %v1495
    %v1497 = vpop.f32.mrb[0].mxu0
    %1498 = vdwg.mxu0
    %1499 = vrot.lane.b32.xlu0 %v317, 64
    %v1500 = vpop.permute.xlu0 %1499
    %v1503 = vsel %vm322, %v1041, 0
    %1505 = vmatprep.subr.mxu0 0.0
    %1506 = vmatpush1.msra.mxu0 %v1500
    %1507 = vmatprep.subr.mxu0 0.0
    %1508 = vmatpush1.msra.mxu0 0.0
    %1509 = vmatprep.subr.mxu0 0.0
    %1510 = vmatpush1.msra.mxu0 0.0
    %1511 = vmatprep.subr.mxu0 0.0
    %1512 = vmatpush1.msra.mxu0 0.0
    %1513 = vmatprep.subr.mxu0 0.0
    %1514 = vmatpush1.msra.mxu0 0.0
    %1515 = vmatprep.subr.mxu0 0.0
    %1516 = vmatpush1.msra.mxu0 0.0
    %1517 = vmatprep.subr.mxu0 0.0
    %1518 = vmatpush1.msra.mxu0 0.0
    %1519 = vmatprep.subr.mxu0 0.0
    %1520 = vmatpush1.msra.mxu0 0.0
    %1521 = vmatprep.subr.mxu0 0.0
    %1522 = vmatpush1.msra.mxu0 0.0
    %1523 = vmatprep.subr.mxu0 0.0
    %1524 = vmatpush1.msra.mxu0 0.0
    %1525 = vmatprep.subr.mxu0 0.0
    %1526 = vmatpush1.msra.mxu0 0.0
    %1527 = vmatprep.subr.mxu0 0.0
    %1528 = vmatpush1.msra.mxu0 0.0
    %1529 = vmatprep.subr.mxu0 0.0
    %1530 = vmatpush1.msra.mxu0 0.0
    %1531 = vmatprep.subr.mxu0 0.0
    %1532 = vmatpush1.msra.mxu0 0.0
    %1533 = vmatprep.subr.mxu0 0.0
    %1534 = vmatpush1.msra.mxu0 0.0
    %1535 = vmatprep.subr.mxu0 0.0
    %1536 = vmatpush1.msra.mxu0 0.0
    %1537 = vmatprep.subr.mxu0 0.0
    %1538 = vmatpush1.msra.mxu0 0.0
    %1539 = vmatprep.subr.mxu0 0.0
    %1540 = vmatpush1.msra.mxu0 0.0
    %1541 = vmatprep.subr.mxu0 0.0
    %1542 = vmatpush1.msra.mxu0 0.0
    %1543 = vmatprep.subr.mxu0 0.0
    %1544 = vmatpush1.msra.mxu0 0.0
    %1545 = vmatprep.subr.mxu0 0.0
    %1546 = vmatpush1.msra.mxu0 0.0
    %1547 = vmatprep.subr.mxu0 0.0
    %1548 = vmatpush1.msra.mxu0 0.0
    %1549 = vmatprep.subr.mxu0 0.0
    %1550 = vmatpush1.msra.mxu0 0.0
    %1551 = vmatprep.subr.mxu0 0.0
    %1552 = vmatpush1.msra.mxu0 0.0
    %1553 = vmatprep.subr.mxu0 0.0
    %1554 = vmatpush1.msra.mxu0 0.0
    %1555 = vmatprep.subr.mxu0 0.0
    %1556 = vmatpush1.msra.mxu0 0.0
    %1557 = vmatprep.subr.mxu0 0.0
    %1558 = vmatpush1.msra.mxu0 0.0
    %1559 = vmatprep.subr.mxu0 0.0
    %1560 = vmatpush1.msra.mxu0 0.0
    %1561 = vmatprep.subr.mxu0 0.0
    %1562 = vmatpush1.msra.mxu0 0.0
    %1563 = vmatprep.subr.mxu0 0.0
    %1564 = vmatpush1.msra.mxu0 0.0
    %1565 = vmatprep.subr.mxu0 0.0
    %1566 = vmatpush1.msra.mxu0 0.0
    %1567 = vmatprep.subr.mxu0 0.0
    %1568 = vmatpush1.msra.mxu0 0.0
    %1569 = vmatprep.mubr.f32.mxu0 0.0
    %1570 = vmatmul.mubr.f32.gmra.mrb[0].mxu0 %v1503
    %v1571 = vpop.f32.mrb[0].mxu0
    %v1572 = vadd.f32 0.0, %v1571
    %v1573 = vpop.f32.mrb[0].mxu0
    %1574 = vdwg.mxu0
    %1575 = vrot.lane.b32.xlu0 %v319, 64
    %v1576 = vpop.permute.xlu0 %1575
    %v1579 = vsel %vm322, %v1042, 0
    %1581 = vmatprep.subr.mxu0 0.0
    %1582 = vmatpush1.msra.mxu0 %v1576
    %1583 = vmatprep.subr.mxu0 0.0
    %1584 = vmatpush1.msra.mxu0 0.0
    %1585 = vmatprep.subr.mxu0 0.0
    %1586 = vmatpush1.msra.mxu0 0.0
    %1587 = vmatprep.subr.mxu0 0.0
    %1588 = vmatpush1.msra.mxu0 0.0
    %1589 = vmatprep.subr.mxu0 0.0
    %1590 = vmatpush1.msra.mxu0 0.0
    %1591 = vmatprep.subr.mxu0 0.0
    %1592 = vmatpush1.msra.mxu0 0.0
    %1593 = vmatprep.subr.mxu0 0.0
    %1594 = vmatpush1.msra.mxu0 0.0
    %1595 = vmatprep.subr.mxu0 0.0
    %1596 = vmatpush1.msra.mxu0 0.0
    %1597 = vmatprep.subr.mxu0 0.0
    %1598 = vmatpush1.msra.mxu0 0.0
    %1599 = vmatprep.subr.mxu0 0.0
    %1600 = vmatpush1.msra.mxu0 0.0
    %1601 = vmatprep.subr.mxu0 0.0
    %1602 = vmatpush1.msra.mxu0 0.0
    %1603 = vmatprep.subr.mxu0 0.0
    %1604 = vmatpush1.msra.mxu0 0.0
    %1605 = vmatprep.subr.mxu0 0.0
    %1606 = vmatpush1.msra.mxu0 0.0
    %1607 = vmatprep.subr.mxu0 0.0
    %1608 = vmatpush1.msra.mxu0 0.0
    %1609 = vmatprep.subr.mxu0 0.0
    %1610 = vmatpush1.msra.mxu0 0.0
    %1611 = vmatprep.subr.mxu0 0.0
    %1612 = vmatpush1.msra.mxu0 0.0
    %1613 = vmatprep.subr.mxu0 0.0
    %1614 = vmatpush1.msra.mxu0 0.0
    %1615 = vmatprep.subr.mxu0 0.0
    %1616 = vmatpush1.msra.mxu0 0.0
    %1617 = vmatprep.subr.mxu0 0.0
    %1618 = vmatpush1.msra.mxu0 0.0
    %1619 = vmatprep.subr.mxu0 0.0
    %1620 = vmatpush1.msra.mxu0 0.0
    %1621 = vmatprep.subr.mxu0 0.0
    %1622 = vmatpush1.msra.mxu0 0.0
    %1623 = vmatprep.subr.mxu0 0.0
    %1624 = vmatpush1.msra.mxu0 0.0
    %1625 = vmatprep.subr.mxu0 0.0
    %1626 = vmatpush1.msra.mxu0 0.0
    %1627 = vmatprep.subr.mxu0 0.0
    %1628 = vmatpush1.msra.mxu0 0.0
    %1629 = vmatprep.subr.mxu0 0.0
    %1630 = vmatpush1.msra.mxu0 0.0
    %1631 = vmatprep.subr.mxu0 0.0
    %1632 = vmatpush1.msra.mxu0 0.0
    %1633 = vmatprep.subr.mxu0 0.0
    %1634 = vmatpush1.msra.mxu0 0.0
    %1635 = vmatprep.subr.mxu0 0.0
    %1636 = vmatpush1.msra.mxu0 0.0
    %1637 = vmatprep.subr.mxu0 0.0
    %1638 = vmatpush1.msra.mxu0 0.0
    %1639 = vmatprep.subr.mxu0 0.0
    %1640 = vmatpush1.msra.mxu0 0.0
    %1641 = vmatprep.subr.mxu0 0.0
    %1642 = vmatpush1.msra.mxu0 0.0
    %1643 = vmatprep.subr.mxu0 0.0
    %1644 = vmatpush1.msra.mxu0 0.0
    %1645 = vmatprep.mubr.f32.mxu0 0.0
    %1646 = vmatmul.mubr.f32.gmra.mrb[0].mxu0 %v1579
    %v1647 = vpop.f32.mrb[0].mxu0
    %v1648 = vadd.f32 0.0, %v1647
    %v1649 = vpop.f32.mrb[0].mxu0
    %1650 = vdwg.mxu0
    %1653 = vrot.lane.b32.xlu0 %v1268, 8
    %v1654 = vpop.permute.xlu0 %1653
    %1655 = vrot.lane.b32.xlu0 %v1344, 8
    %v1656 = vpop.permute.xlu0 %1655
    %1661 = vrot.lane.b32.xlu0 %v1420, 16
    %v1662 = vpop.permute.xlu0 %1661
    %1663 = vrot.lane.b32.xlu0 %v1496, 16
    %v1664 = vpop.permute.xlu0 %1663
    %1669 = vrot.lane.b32.xlu0 %v1572, 24
    %v1670 = vpop.permute.xlu0 %1669
    %1671 = vrot.lane.b32.xlu0 %v1648, 24
    %v1672 = vpop.permute.xlu0 %1671
    %v1675 = vsel %vm322, %v1116, %v1654
    %v1676 = vsel %vm322, %v1192, %v1656
    %vm1677 = vcmask 130048
    %v1678 = vsel %vm1677, %v1675, %v1662
    %v1679 = vsel %vm1677, %v1676, %v1664
    %vm1680 = vcmask 195584
    %v1681 = vsel %vm1680, %v1678, %v1670
    %v1682 = vsel %vm1680, %v1679, %v1672
    %v1683 = vld [vmem:[#allocation2 + $0xd0] sm:$0xff]
    %v1684 = vld [vmem:[#allocation2 + $0xd8] sm:$0xff]
    %v1685 = vld [vmem:[#allocation2 + $0xe0] sm:$0xff]
    %v1686 = vld [vmem:[#allocation2 + $0xe8] sm:$0xff]
    %v1687 = vld [vmem:[#allocation2 + $0xf0] sm:$0x1]
    %v1688 = vlaneseq
    %v1689 = vshrl.u32 %v1688, 7
    %v1690 = vsub.s32 0, %v1689
    %v1691 = vrot.slane %v1687, %v1690
    %v1693 = vsel %vm149, %v1681, 0
    %v1696 = vsel %vm149, %v1682, 0
    %1698 = vmatprep.subr.mxu0 0.0
    %1699 = vmatpush1.msra.mxu0 %v1683
    %1700 = vmatprep.subr.mxu0 0.0
    %1701 = vmatpush1.msra.mxu0 %v1684
    %1702 = vmatprep.subr.mxu0 0.0
    %1703 = vmatpush1.msra.mxu0 %v1685
    %1704 = vmatprep.subr.mxu0 0.0
    %1705 = vmatpush1.msra.mxu0 %v1686
    %1706 = vmatprep.subr.mxu0 0.0
    %1707 = vmatpush1.msra.mxu0 0.0
    %1708 = vmatprep.subr.mxu0 0.0
    %1709 = vmatpush1.msra.mxu0 0.0
    %1710 = vmatprep.subr.mxu0 0.0
    %1711 = vmatpush1.msra.mxu0 0.0
    %1712 = vmatprep.subr.mxu0 0.0
    %1713 = vmatpush1.msra.mxu0 0.0
    %1714 = vmatprep.subr.mxu0 0.0
    %1715 = vmatpush1.msra.mxu0 0.0
    %1716 = vmatprep.subr.mxu0 0.0
    %1717 = vmatpush1.msra.mxu0 0.0
    %1718 = vmatprep.subr.mxu0 0.0
    %1719 = vmatpush1.msra.mxu0 0.0
    %1720 = vmatprep.subr.mxu0 0.0
    %1721 = vmatpush1.msra.mxu0 0.0
    %1722 = vmatprep.subr.mxu0 0.0
    %1723 = vmatpush1.msra.mxu0 0.0
    %1724 = vmatprep.subr.mxu0 0.0
    %1725 = vmatpush1.msra.mxu0 0.0
    %1726 = vmatprep.subr.mxu0 0.0
    %1727 = vmatpush1.msra.mxu0 0.0
    %1728 = vmatprep.subr.mxu0 0.0
    %1729 = vmatpush1.msra.mxu0 0.0
    %1730 = vmatprep.subr.mxu0 0.0
    %1731 = vmatpush1.msra.mxu0 0.0
    %1732 = vmatprep.subr.mxu0 0.0
    %1733 = vmatpush1.msra.mxu0 0.0
    %1734 = vmatprep.subr.mxu0 0.0
    %1735 = vmatpush1.msra.mxu0 0.0
    %1736 = vmatprep.subr.mxu0 0.0
    %1737 = vmatpush1.msra.mxu0 0.0
    %1738 = vmatprep.subr.mxu0 0.0
    %1739 = vmatpush1.msra.mxu0 0.0
    %1740 = vmatprep.subr.mxu0 0.0
    %1741 = vmatpush1.msra.mxu0 0.0
    %1742 = vmatprep.subr.mxu0 0.0
    %1743 = vmatpush1.msra.mxu0 0.0
    %1744 = vmatprep.subr.mxu0 0.0
    %1745 = vmatpush1.msra.mxu0 0.0
    %1746 = vmatprep.subr.mxu0 0.0
    %1747 = vmatpush1.msra.mxu0 0.0
    %1748 = vmatprep.subr.mxu0 0.0
    %1749 = vmatpush1.msra.mxu0 0.0
    %1750 = vmatprep.subr.mxu0 0.0
    %1751 = vmatpush1.msra.mxu0 0.0
    %1752 = vmatprep.subr.mxu0 0.0
    %1753 = vmatpush1.msra.mxu0 0.0
    %1754 = vmatprep.subr.mxu0 0.0
    %1755 = vmatpush1.msra.mxu0 0.0
    %1756 = vmatprep.subr.mxu0 0.0
    %1757 = vmatpush1.msra.mxu0 0.0
    %1758 = vmatprep.subr.mxu0 0.0
    %1759 = vmatpush1.msra.mxu0 0.0
    %1760 = vmatprep.subr.mxu0 0.0
    %1761 = vmatpush1.msra.mxu0 0.0
    %1762 = vmatprep.mubr.f32.mxu0 0.0
    %1763 = vmatmul.mubr.f32.gmra.mrb[0].mxu0 %v1693
    %v1764 = vpop.f32.mrb[0].mxu0
    %v1765 = vadd.f32 %v1691, %v1764
    %v1766 = vpop.f32.mrb[0].mxu0
    %1767 = vmatprep.mubr.f32.mxu0 0.0
    %1768 = vmatmul.mubr.f32.gmra.mrb[0].mxu0 %v1696
    %v1769 = vpop.f32.mrb[0].mxu0
    %v1770 = vadd.f32 %v1691, %v1769
    %v1771 = vpop.f32.mrb[0].mxu0
    %1772 = vdwg.mxu0
    %v1773 = vadd.f32 %v1765, %v187
    %v1774 = vadd.f32 %v1770, %v188
    %v1775 = vld [vmem:[#allocation2 + $0xf8] sm:$0x1]
    %v1776 = vld [vmem:[#allocation2 + $0x100] sm:$0x1]
    %v1777 = vsel %vm149, %v1773, 0.0
    %1778 = vadd.xlane.f32.xlu0 %v1777
    %v1779 = vpop.xlane.xlu0 %1778
    %v1780 = vsel %vm149, %v1774, 0.0
    %1781 = vadd.xlane.f32.xlu0 %v1780
    %v1782 = vpop.xlane.xlu0 %1781
    %v1783 = vmul.f32 %v1779, %v156
    %v1784 = vmul.f32 %v1782, %v156
    %v1785 = vsub.f32 %v1773, %v1783
    %v1786 = vsub.f32 %v1774, %v1784
    %v1787 = vmul.f32 %v1785, %v1785
    %v1788 = vmul.f32 %v1786, %v1786
    %v1789 = vsel %vm149, %v1787, 0.0
    %1790 = vadd.xlane.f32.xlu0 %v1789
    %v1791 = vpop.xlane.xlu0 %1790
    %v1792 = vsel %vm149, %v1788, 0.0
    %1793 = vadd.xlane.f32.xlu0 %v1792
    %v1794 = vpop.xlane.xlu0 %1793
    %v1795 = vmul.f32 %v1791, %v156
    %v1796 = vmul.f32 %v1794, %v156
    %v1797 = vadd.f32 %v1795, 1e-12
    %v1798 = vadd.f32 %v1796, 1e-12
    %v1799 = vrsqrt.pop %v1797
    %v1800 = vrsqrt.pop %v1798
    %v1801 = vmul.f32 %v1785, %v1799
    %v1802 = vmul.f32 %v1786, %v1800
    %v1803 = vlaneseq
    %v1804 = vshrl.u32 %v1803, 7
    %v1805 = vsub.s32 0, %v1804
    %v1806 = vrot.slane %v1775, %v1805
    %v1807 = vmul.f32 %v1801, %v1806
    %v1808 = vmul.f32 %v1802, %v1806
    %v1809 = vlaneseq
    %v1810 = vshrl.u32 %v1809, 7
    %v1811 = vsub.s32 0, %v1810
    %v1812 = vrot.slane %v1776, %v1811
    %v1813 = vadd.f32 %v1807, %v1812
    %v1814 = vadd.f32 %v1808, %v1812
    %v1815 = vld [vmem:[#allocation2 + $0x108] sm:$0xff]
    %v1816 = vld [vmem:[#allocation2 + $0x110] sm:$0xff]
    %v1817 = vld [vmem:[#allocation2 + $0x118] sm:$0xff]
    %v1818 = vld [vmem:[#allocation2 + $0x120] sm:$0xff]
    %v1819 = vld [vmem:[#allocation2 + $0x128] sm:$0x1]
    %v1820 = vlaneseq
    %v1821 = vshrl.u32 %v1820, 7
    %v1822 = vsub.s32 0, %v1821
    %v1823 = vrot.slane %v1819, %v1822
    %v1825 = vsel %vm149, %v1813, 0
    %v1828 = vsel %vm149, %v1814, 0
    %1830 = vmatprep.subr.mxu0 0.0
    %1831 = vmatpush1.msra.mxu0 %v1815
    %1832 = vmatprep.subr.mxu0 0.0
    %1833 = vmatpush1.msra.mxu0 %v1816
    %1834 = vmatprep.subr.mxu0 0.0
    %1835 = vmatpush1.msra.mxu0 %v1817
    %1836 = vmatprep.subr.mxu0 0.0
    %1837 = vmatpush1.msra.mxu0 %v1818
    %1838 = vmatprep.subr.mxu0 0.0
    %1839 = vmatpush1.msra.mxu0 0.0
    %1840 = vmatprep.subr.mxu0 0.0
    %1841 = vmatpush1.msra.mxu0 0.0
    %1842 = vmatprep.subr.mxu0 0.0
    %1843 = vmatpush1.msra.mxu0 0.0
    %1844 = vmatprep.subr.mxu0 0.0
    %1845 = vmatpush1.msra.mxu0 0.0
    %1846 = vmatprep.subr.mxu0 0.0
    %1847 = vmatpush1.msra.mxu0 0.0
    %1848 = vmatprep.subr.mxu0 0.0
    %1849 = vmatpush1.msra.mxu0 0.0
    %1850 = vmatprep.subr.mxu0 0.0
    %1851 = vmatpush1.msra.mxu0 0.0
    %1852 = vmatprep.subr.mxu0 0.0
    %1853 = vmatpush1.msra.mxu0 0.0
    %1854 = vmatprep.subr.mxu0 0.0
    %1855 = vmatpush1.msra.mxu0 0.0
    %1856 = vmatprep.subr.mxu0 0.0
    %1857 = vmatpush1.msra.mxu0 0.0
    %1858 = vmatprep.subr.mxu0 0.0
    %1859 = vmatpush1.msra.mxu0 0.0
    %1860 = vmatprep.subr.mxu0 0.0
    %1861 = vmatpush1.msra.mxu0 0.0
    %1862 = vmatprep.subr.mxu0 0.0
    %1863 = vmatpush1.msra.mxu0 0.0
    %1864 = vmatprep.subr.mxu0 0.0
    %1865 = vmatpush1.msra.mxu0 0.0
    %1866 = vmatprep.subr.mxu0 0.0
    %1867 = vmatpush1.msra.mxu0 0.0
    %1868 = vmatprep.subr.mxu0 0.0
    %1869 = vmatpush1.msra.mxu0 0.0
    %1870 = vmatprep.subr.mxu0 0.0
    %1871 = vmatpush1.msra.mxu0 0.0
    %1872 = vmatprep.subr.mxu0 0.0
    %1873 = vmatpush1.msra.mxu0 0.0
    %1874 = vmatprep.subr.mxu0 0.0
    %1875 = vmatpush1.msra.mxu0 0.0
    %1876 = vmatprep.subr.mxu0 0.0
    %1877 = vmatpush1.msra.mxu0 0.0
    %1878 = vmatprep.subr.mxu0 0.0
    %1879 = vmatpush1.msra.mxu0 0.0
    %1880 = vmatprep.subr.mxu0 0.0
    %1881 = vmatpush1.msra.mxu0 0.0
    %1882 = vmatprep.subr.mxu0 0.0
    %1883 = vmatpush1.msra.mxu0 0.0
    %1884 = vmatprep.subr.mxu0 0.0
    %1885 = vmatpush1.msra.mxu0 0.0
    %1886 = vmatprep.subr.mxu0 0.0
    %1887 = vmatpush1.msra.mxu0 0.0
    %1888 = vmatprep.subr.mxu0 0.0
    %1889 = vmatpush1.msra.mxu0 0.0
    %1890 = vmatprep.subr.mxu0 0.0
    %1891 = vmatpush1.msra.mxu0 0.0
    %1892 = vmatprep.subr.mxu0 0.0
    %1893 = vmatpush1.msra.mxu0 0.0
    %1894 = vmatprep.mubr.f32.mxu0 0.0
    %1895 = vmatmul.mubr.f32.gmra.mrb[0].mxu0 %v1825
    %v1896 = vpop.f32.mrb[0].mxu0
    %v1897 = vadd.f32 %v1823, %v1896
    %v1898 = vpop.f32.mrb[0].mxu0
    %1899 = vmatprep.mubr.f32.mxu0 0.0
    %1900 = vmatmul.mubr.f32.gmra.mrb[0].mxu0 %v1828
    %v1901 = vpop.f32.mrb[0].mxu0
    %v1902 = vadd.f32 %v1823, %v1901
    %v1903 = vpop.f32.mrb[0].mxu0
    %1904 = vdwg.mxu0
    %v1905 = vmul.f32 %v1897, 0.5
    %v1906 = vmul.f32 %v1902, 0.5
    %v1907 = vmul.f32 %v1897, 0.044715
    %v1908 = vmul.f32 %v1902, 0.044715
    %v1909 = vmul.f32 %v1907, %v1897
    %v1910 = vmul.f32 %v1908, %v1902
    %v1911 = vmul.f32 %v1909, %v1897
    %v1912 = vmul.f32 %v1910, %v1902
    %v1913 = vadd.f32 %v1897, %v1911
    %v1914 = vadd.f32 %v1902, %v1912
    %v1915 = vmul.f32 %v1913, 0.7978846
    %v1916 = vmul.f32 %v1914, 0.7978846
    %v1917 = vtanh.pop %v1915
    %v1918 = vtanh.pop %v1916
    %v1919 = vadd.f32 %v1917, 1.0
    %v1920 = vadd.f32 %v1918, 1.0
    %v1921 = vmul.f32 %v1905, %v1919
    %v1922 = vmul.f32 %v1906, %v1920
    %v1923 = vld [vmem:[#allocation2 + $0x130] sm:$0xff]
    %v1924 = vld [vmem:[#allocation2 + $0x138] sm:$0xff]
    %v1925 = vld [vmem:[#allocation2 + $0x140] sm:$0xff]
    %v1926 = vld [vmem:[#allocation2 + $0x148] sm:$0xff]
    %v1927 = vld [vmem:[#allocation2 + $0x150] sm:$0xff]
    %v1928 = vld [vmem:[#allocation2 + $0x158] sm:$0xff]
    %v1929 = vld [vmem:[#allocation2 + $0x160] sm:$0xff]
    %v1930 = vld [vmem:[#allocation2 + $0x168] sm:$0xff]
    %v1931 = vld [vmem:[#allocation2 + $0x170] sm:$0x1]
    %v1932 = vlaneseq
    %v1933 = vshrl.u32 %v1932, 7
    %v1934 = vsub.s32 0, %v1933
    %v1935 = vrot.slane %v1931, %v1934
    %vm1936 = vcmask 523264
    %v1938 = vsel %vm1936, %v1921, 0
    %v1941 = vsel %vm1936, %v1922, 0
    %1943 = vmatprep.subr.mxu0 0.0
    %1944 = vmatpush1.msra.mxu0 %v1923
    %1945 = vmatprep.subr.mxu0 0.0
    %1946 = vmatpush1.msra.mxu0 %v1924
    %1947 = vmatprep.subr.mxu0 0.0
    %1948 = vmatpush1.msra.mxu0 %v1925
    %1949 = vmatprep.subr.mxu0 0.0
    %1950 = vmatpush1.msra.mxu0 %v1926
    %1951 = vmatprep.subr.mxu0 0.0
    %1952 = vmatpush1.msra.mxu0 %v1927
    %1953 = vmatprep.subr.mxu0 0.0
    %1954 = vmatpush1.msra.mxu0 %v1928
    %1955 = vmatprep.subr.mxu0 0.0
    %1956 = vmatpush1.msra.mxu0 %v1929
    %1957 = vmatprep.subr.mxu0 0.0
    %1958 = vmatpush1.msra.mxu0 %v1930
    %1959 = vmatprep.subr.mxu0 0.0
    %1960 = vmatpush1.msra.mxu0 0.0
    %1961 = vmatprep.subr.mxu0 0.0
    %1962 = vmatpush1.msra.mxu0 0.0
    %1963 = vmatprep.subr.mxu0 0.0
    %1964 = vmatpush1.msra.mxu0 0.0
    %1965 = vmatprep.subr.mxu0 0.0
    %1966 = vmatpush1.msra.mxu0 0.0
    %1967 = vmatprep.subr.mxu0 0.0
    %1968 = vmatpush1.msra.mxu0 0.0
    %1969 = vmatprep.subr.mxu0 0.0
    %1970 = vmatpush1.msra.mxu0 0.0
    %1971 = vmatprep.subr.mxu0 0.0
    %1972 = vmatpush1.msra.mxu0 0.0
    %1973 = vmatprep.subr.mxu0 0.0
    %1974 = vmatpush1.msra.mxu0 0.0
    %1975 = vmatprep.subr.mxu0 0.0
    %1976 = vmatpush1.msra.mxu0 0.0
    %1977 = vmatprep.subr.mxu0 0.0
    %1978 = vmatpush1.msra.mxu0 0.0
    %1979 = vmatprep.subr.mxu0 0.0
    %1980 = vmatpush1.msra.mxu0 0.0
    %1981 = vmatprep.subr.mxu0 0.0
    %1982 = vmatpush1.msra.mxu0 0.0
    %1983 = vmatprep.subr.mxu0 0.0
    %1984 = vmatpush1.msra.mxu0 0.0
    %1985 = vmatprep.subr.mxu0 0.0
    %1986 = vmatpush1.msra.mxu0 0.0
    %1987 = vmatprep.subr.mxu0 0.0
    %1988 = vmatpush1.msra.mxu0 0.0
    %1989 = vmatprep.subr.mxu0 0.0
    %1990 = vmatpush1.msra.mxu0 0.0
    %1991 = vmatprep.subr.mxu0 0.0
    %1992 = vmatpush1.msra.mxu0 0.0
    %1993 = vmatprep.subr.mxu0 0.0
    %1994 = vmatpush1.msra.mxu0 0.0
    %1995 = vmatprep.subr.mxu0 0.0
    %1996 = vmatpush1.msra.mxu0 0.0
    %1997 = vmatprep.subr.mxu0 0.0
    %1998 = vmatpush1.msra.mxu0 0.0
    %1999 = vmatprep.subr.mxu0 0.0
    %2000 = vmatpush1.msra.mxu0 0.0
    %2001 = vmatprep.subr.mxu0 0.0
    %2002 = vmatpush1.msra.mxu0 0.0
    %2003 = vmatprep.subr.mxu0 0.0
    %2004 = vmatpush1.msra.mxu0 0.0
    %2005 = vmatprep.subr.mxu0 0.0
    %2006 = vmatpush1.msra.mxu0 0.0
    %2007 = vmatprep.mubr.f32.mxu0 0.0
    %2008 = vmatmul.mubr.f32.gmra.mrb[0].mxu0 %v1938
    %v2009 = vpop.f32.mrb[0].mxu0
    %v2010 = vadd.f32 %v1935, %v2009
    %v2011 = vpop.f32.mrb[0].mxu0
    %2012 = vmatprep.mubr.f32.mxu0 0.0
    %2013 = vmatmul.mubr.f32.gmra.mrb[0].mxu0 %v1941
    %v2014 = vpop.f32.mrb[0].mxu0
    %v2015 = vadd.f32 %v1935, %v2014
    %v2016 = vpop.f32.mrb[0].mxu0
    %2017 = vdwg.mxu0
    %v2018 = vadd.f32 %v2010, %v1813
    %v2019 = vadd.f32 %v2015, %v1814
    %v2020 = vld [vmem:[#allocation2 + $0x178] sm:$0x1]
    %v2021 = vld [vmem:[#allocation2 + $0x180] sm:$0x1]
    %v2022 = vsel %vm149, %v2018, 0.0
    %2023 = vadd.xlane.f32.xlu0 %v2022
    %v2024 = vpop.xlane.xlu0 %2023
    %v2025 = vsel %vm149, %v2019, 0.0
    %2026 = vadd.xlane.f32.xlu0 %v2025
    %v2027 = vpop.xlane.xlu0 %2026
    %v2028 = vmul.f32 %v2024, %v156
    %v2029 = vmul.f32 %v2027, %v156
    %v2030 = vsub.f32 %v2018, %v2028
    %v2031 = vsub.f32 %v2019, %v2029
    %v2032 = vmul.f32 %v2030, %v2030
    %v2033 = vmul.f32 %v2031, %v2031
    %v2034 = vsel %vm149, %v2032, 0.0
    %2035 = vadd.xlane.f32.xlu0 %v2034
    %v2036 = vpop.xlane.xlu0 %2035
    %v2037 = vsel %vm149, %v2033, 0.0
    %2038 = vadd.xlane.f32.xlu0 %v2037
    %v2039 = vpop.xlane.xlu0 %2038
    %v2040 = vmul.f32 %v2036, %v156
    %v2041 = vmul.f32 %v2039, %v156
    %v2042 = vadd.f32 %v2040, 1e-12
    %v2043 = vadd.f32 %v2041, 1e-12
    %v2044 = vrsqrt.pop %v2042
    %v2045 = vrsqrt.pop %v2043
    %v2046 = vmul.f32 %v2030, %v2044
    %v2047 = vmul.f32 %v2031, %v2045
    %v2048 = vlaneseq
    %v2049 = vshrl.u32 %v2048, 7
    %v2050 = vsub.s32 0, %v2049
    %v2051 = vrot.slane %v2020, %v2050
    %v2052 = vmul.f32 %v2046, %v2051
    %v2053 = vmul.f32 %v2047, %v2051
    %v2054 = vlaneseq
    %v2055 = vshrl.u32 %v2054, 7
    %v2056 = vsub.s32 0, %v2055
    %v2057 = vrot.slane %v2021, %v2056
    %v2058 = vadd.f32 %v2052, %v2057
    %v2059 = vadd.f32 %v2053, %v2057
    %v2060 = vld [vmem:[#allocation2 + $0x188] sm:$0xff]
    %v2061 = vld [vmem:[#allocation2 + $0x190] sm:$0xff]
    %v2062 = vld [vmem:[#allocation2 + $0x198] sm:$0xff]
    %v2063 = vld [vmem:[#allocation2 + $0x1a0] sm:$0xff]
    %v2064 = vld [vmem:[#allocation2 + $0x1a8] sm:$0x1]
    %v2065 = vlaneseq
    %v2066 = vshrl.u32 %v2065, 7
    %v2067 = vsub.s32 0, %v2066
    %v2068 = vrot.slane %v2064, %v2067
    %v2070 = vsel %vm149, %v2058, 0
    %v2073 = vsel %vm149, %v2059, 0
    %2075 = vmatprep.subr.mxu0 0.0
    %2076 = vmatpush1.msra.mxu0 %v2060
    %2077 = vmatprep.subr.mxu0 0.0
    %2078 = vmatpush1.msra.mxu0 %v2061
    %2079 = vmatprep.subr.mxu0 0.0
    %2080 = vmatpush1.msra.mxu0 %v2062
    %2081 = vmatprep.subr.mxu0 0.0
    %2082 = vmatpush1.msra.mxu0 %v2063
    %2083 = vmatprep.subr.mxu0 0.0
    %2084 = vmatpush1.msra.mxu0 0.0
    %2085 = vmatprep.subr.mxu0 0.0
    %2086 = vmatpush1.msra.mxu0 0.0
    %2087 = vmatprep.subr.mxu0 0.0
    %2088 = vmatpush1.msra.mxu0 0.0
    %2089 = vmatprep.subr.mxu0 0.0
    %2090 = vmatpush1.msra.mxu0 0.0
    %2091 = vmatprep.subr.mxu0 0.0
    %2092 = vmatpush1.msra.mxu0 0.0
    %2093 = vmatprep.subr.mxu0 0.0
    %2094 = vmatpush1.msra.mxu0 0.0
    %2095 = vmatprep.subr.mxu0 0.0
    %2096 = vmatpush1.msra.mxu0 0.0
    %2097 = vmatprep.subr.mxu0 0.0
    %2098 = vmatpush1.msra.mxu0 0.0
    %2099 = vmatprep.subr.mxu0 0.0
    %2100 = vmatpush1.msra.mxu0 0.0
    %2101 = vmatprep.subr.mxu0 0.0
    %2102 = vmatpush1.msra.mxu0 0.0
    %2103 = vmatprep.subr.mxu0 0.0
    %2104 = vmatpush1.msra.mxu0 0.0
    %2105 = vmatprep.subr.mxu0 0.0
    %2106 = vmatpush1.msra.mxu0 0.0
    %2107 = vmatprep.subr.mxu0 0.0
    %2108 = vmatpush1.msra.mxu0 0.0
    %2109 = vmatprep.subr.mxu0 0.0
    %2110 = vmatpush1.msra.mxu0 0.0
    %2111 = vmatprep.subr.mxu0 0.0
    %2112 = vmatpush1.msra.mxu0 0.0
    %2113 = vmatprep.subr.mxu0 0.0
    %2114 = vmatpush1.msra.mxu0 0.0
    %2115 = vmatprep.subr.mxu0 0.0
    %2116 = vmatpush1.msra.mxu0 0.0
    %2117 = vmatprep.subr.mxu0 0.0
    %2118 = vmatpush1.msra.mxu0 0.0
    %2119 = vmatprep.subr.mxu0 0.0
    %2120 = vmatpush1.msra.mxu0 0.0
    %2121 = vmatprep.subr.mxu0 0.0
    %2122 = vmatpush1.msra.mxu0 0.0
    %2123 = vmatprep.subr.mxu0 0.0
    %2124 = vmatpush1.msra.mxu0 0.0
    %2125 = vmatprep.subr.mxu0 0.0
    %2126 = vmatpush1.msra.mxu0 0.0
    %2127 = vmatprep.subr.mxu0 0.0
    %2128 = vmatpush1.msra.mxu0 0.0
    %2129 = vmatprep.subr.mxu0 0.0
    %2130 = vmatpush1.msra.mxu0 0.0
    %2131 = vmatprep.subr.mxu0 0.0
    %2132 = vmatpush1.msra.mxu0 0.0
    %2133 = vmatprep.subr.mxu0 0.0
    %2134 = vmatpush1.msra.mxu0 0.0
    %2135 = vmatprep.subr.mxu0 0.0
    %2136 = vmatpush1.msra.mxu0 0.0
    %2137 = vmatprep.subr.mxu0 0.0
    %2138 = vmatpush1.msra.mxu0 0.0
    %2139 = vmatprep.mubr.f32.mxu0 0.0
    %2140 = vmatmul.mubr.f32.gmra.mrb[0].mxu0 %v2070
    %v2141 = vpop.f32.mrb[0].mxu0
    %v2142 = vadd.f32 %v2068, %v2141
    %v2143 = vpop.f32.mrb[0].mxu0
    %2144 = vmatprep.mubr.f32.mxu0 0.0
    %2145 = vmatmul.mubr.f32.gmra.mrb[0].mxu0 %v2073
    %v2146 = vpop.f32.mrb[0].mxu0
    %v2147 = vadd.f32 %v2068, %v2146
    %v2148 = vpop.f32.mrb[0].mxu0
    %2149 = vdwg.mxu0
    %2152 = vrot.lane.b32.xlu0 %v2142, 120
    %v2153 = vpop.permute.xlu0 %2152
    %2154 = vrot.lane.b32.xlu0 %v2147, 120
    %v2155 = vpop.permute.xlu0 %2154
    %2156 = vrot.lane.b32.xlu0 %v2142, 112
    %v2157 = vpop.permute.xlu0 %2156
    %2158 = vrot.lane.b32.xlu0 %v2147, 112
    %v2159 = vpop.permute.xlu0 %2158
    %2160 = vrot.lane.b32.xlu0 %v2142, 104
    %v2161 = vpop.permute.xlu0 %2160
    %2162 = vrot.lane.b32.xlu0 %v2147, 104
    %v2163 = vpop.permute.xlu0 %2162
    %2164 = vrot.lane.b32.xlu0 %v2142, 96
    %v2165 = vpop.permute.xlu0 %2164
    %v2166 = vsel %vm322, %v2142, 0
    %v2168 = vsel %vm322, %v2165, 0
    %2170 = vmatprep.subr.mxu0 0.0
    %2171 = vmatpush1.xpose.msra.mxu0 %v2168
    %2172 = vmatprep.subr.mxu0 0.0
    %2173 = vmatpush1.xpose.msra.mxu0 0.0
    %2174 = vmatprep.subr.mxu0 0.0
    %2175 = vmatpush1.xpose.msra.mxu0 0.0
    %2176 = vmatprep.subr.mxu0 0.0
    %2177 = vmatpush1.xpose.msra.mxu0 0.0
    %2178 = vmatprep.subr.mxu0 0.0
    %2179 = vmatpush1.xpose.msra.mxu0 0.0
    %2180 = vmatprep.subr.mxu0 0.0
    %2181 = vmatpush1.xpose.msra.mxu0 0.0
    %2182 = vmatprep.subr.mxu0 0.0
    %2183 = vmatpush1.xpose.msra.mxu0 0.0
    %2184 = vmatprep.subr.mxu0 0.0
    %2185 = vmatpush1.xpose.msra.mxu0 0.0
    %2186 = vmatprep.subr.mxu0 0.0
    %2187 = vmatpush1.xpose.msra.mxu0 0.0
    %2188 = vmatprep.subr.mxu0 0.0
    %2189 = vmatpush1.xpose.msra.mxu0 0.0
    %2190 = vmatprep.subr.mxu0 0.0
    %2191 = vmatpush1.xpose.msra.mxu0 0.0
    %2192 = vmatprep.subr.mxu0 0.0
    %2193 = vmatpush1.xpose.msra.mxu0 0.0
    %2194 = vmatprep.subr.mxu0 0.0
    %2195 = vmatpush1.xpose.msra.mxu0 0.0
    %2196 = vmatprep.subr.mxu0 0.0
    %2197 = vmatpush1.xpose.msra.mxu0 0.0
    %2198 = vmatprep.subr.mxu0 0.0
    %2199 = vmatpush1.xpose.msra.mxu0 0.0
    %2200 = vmatprep.subr.mxu0 0.0
    %2201 = vmatpush1.xpose.msra.mxu0 0.0
    %2202 = vmatprep.subr.mxu0 0.0
    %2203 = vmatpush1.xpose.msra.mxu0 0.0
    %2204 = vmatprep.subr.mxu0 0.0
    %2205 = vmatpush1.xpose.msra.mxu0 0.0
    %2206 = vmatprep.subr.mxu0 0.0
    %2207 = vmatpush1.xpose.msra.mxu0 0.0
    %2208 = vmatprep.subr.mxu0 0.0
    %2209 = vmatpush1.xpose.msra.mxu0 0.0
    %2210 = vmatprep.subr.mxu0 0.0
    %2211 = vmatpush1.xpose.msra.mxu0 0.0
    %2212 = vmatprep.subr.mxu0 0.0
    %2213 = vmatpush1.xpose.msra.mxu0 0.0
    %2214 = vmatprep.subr.mxu0 0.0
    %2215 = vmatpush1.xpose.msra.mxu0 0.0
    %2216 = vmatprep.subr.mxu0 0.0
    %2217 = vmatpush1.xpose.msra.mxu0 0.0
    %2218 = vmatprep.subr.mxu0 0.0
    %2219 = vmatpush1.xpose.msra.mxu0 0.0
    %2220 = vmatprep.subr.mxu0 0.0
    %2221 = vmatpush1.xpose.msra.mxu0 0.0
    %2222 = vmatprep.subr.mxu0 0.0
    %2223 = vmatpush1.xpose.msra.mxu0 0.0
    %2224 = vmatprep.subr.mxu0 0.0
    %2225 = vmatpush1.xpose.msra.mxu0 0.0
    %2226 = vmatprep.subr.mxu0 0.0
    %2227 = vmatpush1.xpose.msra.mxu0 0.0
    %2228 = vmatprep.subr.mxu0 0.0
    %2229 = vmatpush1.xpose.msra.mxu0 0.0
    %2230 = vmatprep.subr.mxu0 0.0
    %2231 = vmatpush1.xpose.msra.mxu0 0.0
    %2232 = vmatprep.subr.mxu0 0.0
    %2233 = vmatpush1.xpose.msra.mxu0 0.0
    %2234 = vmatprep.mubr.f32.mxu0 0.0
    %2235 = vmatmul.mubr.f32.gmra.mrb[0].mxu0 %v2166
    %v2236 = vpop.f32.mrb[0].mxu0
    %v2237 = vadd.f32 0.0, %v2236
    %v2238 = vpop.f32.mrb[0].mxu0
    %2239 = vdwg.mxu0
    %2240 = vrot.lane.b32.xlu0 %v2147, 96
    %v2241 = vpop.permute.xlu0 %2240
    %v2242 = vsel %vm322, %v2147, 0
    %v2244 = vsel %vm322, %v2241, 0
    %2246 = vmatprep.subr.mxu0 0.0
    %2247 = vmatpush1.xpose.msra.mxu0 %v2244
    %2248 = vmatprep.subr.mxu0 0.0
    %2249 = vmatpush1.xpose.msra.mxu0 0.0
    %2250 = vmatprep.subr.mxu0 0.0
    %2251 = vmatpush1.xpose.msra.mxu0 0.0
    %2252 = vmatprep.subr.mxu0 0.0
    %2253 = vmatpush1.xpose.msra.mxu0 0.0
    %2254 = vmatprep.subr.mxu0 0.0
    %2255 = vmatpush1.xpose.msra.mxu0 0.0
    %2256 = vmatprep.subr.mxu0 0.0
    %2257 = vmatpush1.xpose.msra.mxu0 0.0
    %2258 = vmatprep.subr.mxu0 0.0
    %2259 = vmatpush1.xpose.msra.mxu0 0.0
    %2260 = vmatprep.subr.mxu0 0.0
    %2261 = vmatpush1.xpose.msra.mxu0 0.0
    %2262 = vmatprep.subr.mxu0 0.0
    %2263 = vmatpush1.xpose.msra.mxu0 0.0
    %2264 = vmatprep.subr.mxu0 0.0
    %2265 = vmatpush1.xpose.msra.mxu0 0.0
    %2266 = vmatprep.subr.mxu0 0.0
    %2267 = vmatpush1.xpose.msra.mxu0 0.0
    %2268 = vmatprep.subr.mxu0 0.0
    %2269 = vmatpush1.xpose.msra.mxu0 0.0
    %2270 = vmatprep.subr.mxu0 0.0
    %2271 = vmatpush1.xpose.msra.mxu0 0.0
    %2272 = vmatprep.subr.mxu0 0.0
    %2273 = vmatpush1.xpose.msra.mxu0 0.0
    %2274 = vmatprep.subr.mxu0 0.0
    %2275 = vmatpush1.xpose.msra.mxu0 0.0
    %2276 = vmatprep.subr.mxu0 0.0
    %2277 = vmatpush1.xpose.msra.mxu0 0.0
    %2278 = vmatprep.subr.mxu0 0.0
    %2279 = vmatpush1.xpose.msra.mxu0 0.0
    %2280 = vmatprep.subr.mxu0 0.0
    %2281 = vmatpush1.xpose.msra.mxu0 0.0
    %2282 = vmatprep.subr.mxu0 0.0
    %2283 = vmatpush1.xpose.msra.mxu0 0.0
    %2284 = vmatprep.subr.mxu0 0.0
    %2285 = vmatpush1.xpose.msra.mxu0 0.0
    %2286 = vmatprep.subr.mxu0 0.0
    %2287 = vmatpush1.xpose.msra.mxu0 0.0
    %2288 = vmatprep.subr.mxu0 0.0
    %2289 = vmatpush1.xpose.msra.mxu0 0.0
    %2290 = vmatprep.subr.mxu0 0.0
    %2291 = vmatpush1.xpose.msra.mxu0 0.0
    %2292 = vmatprep.subr.mxu0 0.0
    %2293 = vmatpush1.xpose.msra.mxu0 0.0
    %2294 = vmatprep.subr.mxu0 0.0
    %2295 = vmatpush1.xpose.msra.mxu0 0.0
    %2296 = vmatprep.subr.mxu0 0.0
    %2297 = vmatpush1.xpose.msra.mxu0 0.0
    %2298 = vmatprep.subr.mxu0 0.0
    %2299 = vmatpush1.xpose.msra.mxu0 0.0
    %2300 = vmatprep.subr.mxu0 0.0
    %2301 = vmatpush1.xpose.msra.mxu0 0.0
    %2302 = vmatprep.subr.mxu0 0.0
    %2303 = vmatpush1.xpose.msra.mxu0 0.0
    %2304 = vmatprep.subr.mxu0 0.0
    %2305 = vmatpush1.xpose.msra.mxu0 0.0
    %2306 = vmatprep.subr.mxu0 0.0
    %2307 = vmatpush1.xpose.msra.mxu0 0.0
    %2308 = vmatprep.subr.mxu0 0.0
    %2309 = vmatpush1.xpose.msra.mxu0 0.0
    %2310 = vmatprep.mubr.f32.mxu0 0.0
    %2311 = vmatmul.mubr.f32.gmra.mrb[0].mxu0 %v2242
    %v2312 = vpop.f32.mrb[0].mxu0
    %v2313 = vadd.f32 0.0, %v2312
    %v2314 = vpop.f32.mrb[0].mxu0
    %2315 = vdwg.mxu0
    %2316 = vrot.lane.b32.xlu0 %v2153, 96
    %v2317 = vpop.permute.xlu0 %2316
    %v2318 = vsel %vm322, %v2153, 0
    %v2320 = vsel %vm322, %v2317, 0
    %2322 = vmatprep.subr.mxu0 0.0
    %2323 = vmatpush1.xpose.msra.mxu0 %v2320
    %2324 = vmatprep.subr.mxu0 0.0
    %2325 = vmatpush1.xpose.msra.mxu0 0.0
    %2326 = vmatprep.subr.mxu0 0.0
    %2327 = vmatpush1.xpose.msra.mxu0 0.0
    %2328 = vmatprep.subr.mxu0 0.0
    %2329 = vmatpush1.xpose.msra.mxu0 0.0
    %2330 = vmatprep.subr.mxu0 0.0
    %2331 = vmatpush1.xpose.msra.mxu0 0.0
    %2332 = vmatprep.subr.mxu0 0.0
    %2333 = vmatpush1.xpose.msra.mxu0 0.0
    %2334 = vmatprep.subr.mxu0 0.0
    %2335 = vmatpush1.xpose.msra.mxu0 0.0
    %2336 = vmatprep.subr.mxu0 0.0
    %2337 = vmatpush1.xpose.msra.mxu0 0.0
    %2338 = vmatprep.subr.mxu0 0.0
    %2339 = vmatpush1.xpose.msra.mxu0 0.0
    %2340 = vmatprep.subr.mxu0 0.0
    %2341 = vmatpush1.xpose.msra.mxu0 0.0
    %2342 = vmatprep.subr.mxu0 0.0
    %2343 = vmatpush1.xpose.msra.mxu0 0.0
    %2344 = vmatprep.subr.mxu0 0.0
    %2345 = vmatpush1.xpose.msra.mxu0 0.0
    %2346 = vmatprep.subr.mxu0 0.0
    %2347 = vmatpush1.xpose.msra.mxu0 0.0
    %2348 = vmatprep.subr.mxu0 0.0
    %2349 = vmatpush1.xpose.msra.mxu0 0.0
    %2350 = vmatprep.subr.mxu0 0.0
    %2351 = vmatpush1.xpose.msra.mxu0 0.0
    %2352 = vmatprep.subr.mxu0 0.0
    %2353 = vmatpush1.xpose.msra.mxu0 0.0
    %2354 = vmatprep.subr.mxu0 0.0
    %2355 = vmatpush1.xpose.msra.mxu0 0.0
    %2356 = vmatprep.subr.mxu0 0.0
    %2357 = vmatpush1.xpose.msra.mxu0 0.0
    %2358 = vmatprep.subr.mxu0 0.0
    %2359 = vmatpush1.xpose.msra.mxu0 0.0
    %2360 = vmatprep.subr.mxu0 0.0
    %2361 = vmatpush1.xpose.msra.mxu0 0.0
    %2362 = vmatprep.subr.mxu0 0.0
    %2363 = vmatpush1.xpose.msra.mxu0 0.0
    %2364 = vmatprep.subr.mxu0 0.0
    %2365 = vmatpush1.xpose.msra.mxu0 0.0
    %2366 = vmatprep.subr.mxu0 0.0
    %2367 = vmatpush1.xpose.msra.mxu0 0.0
    %2368 = vmatprep.subr.mxu0 0.0
    %2369 = vmatpush1.xpose.msra.mxu0 0.0
    %2370 = vmatprep.subr.mxu0 0.0
    %2371 = vmatpush1.xpose.msra.mxu0 0.0
    %2372 = vmatprep.subr.mxu0 0.0
    %2373 = vmatpush1.xpose.msra.mxu0 0.0
    %2374 = vmatprep.subr.mxu0 0.0
    %2375 = vmatpush1.xpose.msra.mxu0 0.0
    %2376 = vmatprep.subr.mxu0 0.0
    %2377 = vmatpush1.xpose.msra.mxu0 0.0
    %2378 = vmatprep.subr.mxu0 0.0
    %2379 = vmatpush1.xpose.msra.mxu0 0.0
    %2380 = vmatprep.subr.mxu0 0.0
    %2381 = vmatpush1.xpose.msra.mxu0 0.0
    %2382 = vmatprep.subr.mxu0 0.0
    %2383 = vmatpush1.xpose.msra.mxu0 0.0
    %2384 = vmatprep.subr.mxu0 0.0
    %2385 = vmatpush1.xpose.msra.mxu0 0.0
    %2386 = vmatprep.mubr.f32.mxu0 0.0
    %2387 = vmatmul.mubr.f32.gmra.mrb[0].mxu0 %v2318
    %v2388 = vpop.f32.mrb[0].mxu0
    %v2389 = vadd.f32 0.0, %v2388
    %v2390 = vpop.f32.mrb[0].mxu0
    %2391 = vdwg.mxu0
    %2392 = vrot.lane.b32.xlu0 %v2155, 96
    %v2393 = vpop.permute.xlu0 %2392
    %v2394 = vsel %vm322, %v2155, 0
    %v2396 = vsel %vm322, %v2393, 0
    %2398 = vmatprep.subr.mxu0 0.0
    %2399 = vmatpush1.xpose.msra.mxu0 %v2396
    %2400 = vmatprep.subr.mxu0 0.0
    %2401 = vmatpush1.xpose.msra.mxu0 0.0
    %2402 = vmatprep.subr.mxu0 0.0
    %2403 = vmatpush1.xpose.msra.mxu0 0.0
    %2404 = vmatprep.subr.mxu0 0.0
    %2405 = vmatpush1.xpose.msra.mxu0 0.0
    %2406 = vmatprep.subr.mxu0 0.0
    %2407 = vmatpush1.xpose.msra.mxu0 0.0
    %2408 = vmatprep.subr.mxu0 0.0
    %2409 = vmatpush1.xpose.msra.mxu0 0.0
    %2410 = vmatprep.subr.mxu0 0.0
    %2411 = vmatpush1.xpose.msra.mxu0 0.0
    %2412 = vmatprep.subr.mxu0 0.0
    %2413 = vmatpush1.xpose.msra.mxu0 0.0
    %2414 = vmatprep.subr.mxu0 0.0
    %2415 = vmatpush1.xpose.msra.mxu0 0.0
    %2416 = vmatprep.subr.mxu0 0.0
    %2417 = vmatpush1.xpose.msra.mxu0 0.0
    %2418 = vmatprep.subr.mxu0 0.0
    %2419 = vmatpush1.xpose.msra.mxu0 0.0
    %2420 = vmatprep.subr.mxu0 0.0
    %2421 = vmatpush1.xpose.msra.mxu0 0.0
    %2422 = vmatprep.subr.mxu0 0.0
    %2423 = vmatpush1.xpose.msra.mxu0 0.0
    %2424 = vmatprep.subr.mxu0 0.0
    %2425 = vmatpush1.xpose.msra.mxu0 0.0
    %2426 = vmatprep.subr.mxu0 0.0
    %2427 = vmatpush1.xpose.msra.mxu0 0.0
    %2428 = vmatprep.subr.mxu0 0.0
    %2429 = vmatpush1.xpose.msra.mxu0 0.0
    %2430 = vmatprep.subr.mxu0 0.0
    %2431 = vmatpush1.xpose.msra.mxu0 0.0
    %2432 = vmatprep.subr.mxu0 0.0
    %2433 = vmatpush1.xpose.msra.mxu0 0.0
    %2434 = vmatprep.subr.mxu0 0.0
    %2435 = vmatpush1.xpose.msra.mxu0 0.0
    %2436 = vmatprep.subr.mxu0 0.0
    %2437 = vmatpush1.xpose.msra.mxu0 0.0
    %2438 = vmatprep.subr.mxu0 0.0
    %2439 = vmatpush1.xpose.msra.mxu0 0.0
    %2440 = vmatprep.subr.mxu0 0.0
    %2441 = vmatpush1.xpose.msra.mxu0 0.0
    %2442 = vmatprep.subr.mxu0 0.0
    %2443 = vmatpush1.xpose.msra.mxu0 0.0
    %2444 = vmatprep.subr.mxu0 0.0
    %2445 = vmatpush1.xpose.msra.mxu0 0.0
    %2446 = vmatprep.subr.mxu0 0.0
    %2447 = vmatpush1.xpose.msra.mxu0 0.0
    %2448 = vmatprep.subr.mxu0 0.0
    %2449 = vmatpush1.xpose.msra.mxu0 0.0
    %2450 = vmatprep.subr.mxu0 0.0
    %2451 = vmatpush1.xpose.msra.mxu0 0.0
    %2452 = vmatprep.subr.mxu0 0.0
    %2453 = vmatpush1.xpose.msra.mxu0 0.0
    %2454 = vmatprep.subr.mxu0 0.0
    %2455 = vmatpush1.xpose.msra.mxu0 0.0
    %2456 = vmatprep.subr.mxu0 0.0
    %2457 = vmatpush1.xpose.msra.mxu0 0.0
    %2458 = vmatprep.subr.mxu0 0.0
    %2459 = vmatpush1.xpose.msra.mxu0 0.0
    %2460 = vmatprep.subr.mxu0 0.0
    %2461 = vmatpush1.xpose.msra.mxu0 0.0
    %2462 = vmatprep.mubr.f32.mxu0 0.0
    %2463 = vmatmul.mubr.f32.gmra.mrb[0].mxu0 %v2394
    %v2464 = vpop.f32.mrb[0].mxu0
    %v2465 = vadd.f32 0.0, %v2464
    %v2466 = vpop.f32.mrb[0].mxu0
    %2467 = vdwg.mxu0
    %2468 = vrot.lane.b32.xlu0 %v2157, 96
    %v2469 = vpop.permute.xlu0 %2468
    %v2470 = vsel %vm322, %v2157, 0
    %v2472 = vsel %vm322, %v2469, 0
    %2474 = vmatprep.subr.mxu0 0.0
    %2475 = vmatpush1.xpose.msra.mxu0 %v2472
    %2476 = vmatprep.subr.mxu0 0.0
    %2477 = vmatpush1.xpose.msra.mxu0 0.0
    %2478 = vmatprep.subr.mxu0 0.0
    %2479 = vmatpush1.xpose.msra.mxu0 0.0
    %2480 = vmatprep.subr.mxu0 0.0
    %2481 = vmatpush1.xpose.msra.mxu0 0.0
    %2482 = vmatprep.subr.mxu0 0.0
    %2483 = vmatpush1.xpose.msra.mxu0 0.0
    %2484 = vmatprep.subr.mxu0 0.0
    %2485 = vmatpush1.xpose.msra.mxu0 0.0
    %2486 = vmatprep.subr.mxu0 0.0
    %2487 = vmatpush1.xpose.msra.mxu0 0.0
    %2488 = vmatprep.subr.mxu0 0.0
    %2489 = vmatpush1.xpose.msra.mxu0 0.0
    %2490 = vmatprep.subr.mxu0 0.0
    %2491 = vmatpush1.xpose.msra.mxu0 0.0
    %2492 = vmatprep.subr.mxu0 0.0
    %2493 = vmatpush1.xpose.msra.mxu0 0.0
    %2494 = vmatprep.subr.mxu0 0.0
    %2495 = vmatpush1.xpose.msra.mxu0 0.0
    %2496 = vmatprep.subr.mxu0 0.0
    %2497 = vmatpush1.xpose.msra.mxu0 0.0
    %2498 = vmatprep.subr.mxu0 0.0
    %2499 = vmatpush1.xpose.msra.mxu0 0.0
    %2500 = vmatprep.subr.mxu0 0.0
    %2501 = vmatpush1.xpose.msra.mxu0 0.0
    %2502 = vmatprep.subr.mxu0 0.0
    %2503 = vmatpush1.xpose.msra.mxu0 0.0
    %2504 = vmatprep.subr.mxu0 0.0
    %2505 = vmatpush1.xpose.msra.mxu0 0.0
    %2506 = vmatprep.subr.mxu0 0.0
    %2507 = vmatpush1.xpose.msra.mxu0 0.0
    %2508 = vmatprep.subr.mxu0 0.0
    %2509 = vmatpush1.xpose.msra.mxu0 0.0
    %2510 = vmatprep.subr.mxu0 0.0
    %2511 = vmatpush1.xpose.msra.mxu0 0.0
    %2512 = vmatprep.subr.mxu0 0.0
    %2513 = vmatpush1.xpose.msra.mxu0 0.0
    %2514 = vmatprep.subr.mxu0 0.0
    %2515 = vmatpush1.xpose.msra.mxu0 0.0
    %2516 = vmatprep.subr.mxu0 0.0
    %2517 = vmatpush1.xpose.msra.mxu0 0.0
    %2518 = vmatprep.subr.mxu0 0.0
    %2519 = vmatpush1.xpose.msra.mxu0 0.0
    %2520 = vmatprep.subr.mxu0 0.0
    %2521 = vmatpush1.xpose.msra.mxu0 0.0
    %2522 = vmatprep.subr.mxu0 0.0
    %2523 = vmatpush1.xpose.msra.mxu0 0.0
    %2524 = vmatprep.subr.mxu0 0.0
    %2525 = vmatpush1.xpose.msra.mxu0 0.0
    %2526 = vmatprep.subr.mxu0 0.0
    %2527 = vmatpush1.xpose.msra.mxu0 0.0
    %2528 = vmatprep.subr.mxu0 0.0
    %2529 = vmatpush1.xpose.msra.mxu0 0.0
    %2530 = vmatprep.subr.mxu0 0.0
    %2531 = vmatpush1.xpose.msra.mxu0 0.0
    %2532 = vmatprep.subr.mxu0 0.0
    %2533 = vmatpush1.xpose.msra.mxu0 0.0
    %2534 = vmatprep.subr.mxu0 0.0
    %2535 = vmatpush1.xpose.msra.mxu0 0.0
    %2536 = vmatprep.subr.mxu0 0.0
    %2537 = vmatpush1.xpose.msra.mxu0 0.0
    %2538 = vmatprep.mubr.f32.mxu0 0.0
    %2539 = vmatmul.mubr.f32.gmra.mrb[0].mxu0 %v2470
    %v2540 = vpop.f32.mrb[0].mxu0
    %v2541 = vadd.f32 0.0, %v2540
    %v2542 = vpop.f32.mrb[0].mxu0
    %2543 = vdwg.mxu0
    %2544 = vrot.lane.b32.xlu0 %v2159, 96
    %v2545 = vpop.permute.xlu0 %2544
    %v2546 = vsel %vm322, %v2159, 0
    %v2548 = vsel %vm322, %v2545, 0
    %2550 = vmatprep.subr.mxu0 0.0
    %2551 = vmatpush1.xpose.msra.mxu0 %v2548
    %2552 = vmatprep.subr.mxu0 0.0
    %2553 = vmatpush1.xpose.msra.mxu0 0.0
    %2554 = vmatprep.subr.mxu0 0.0
    %2555 = vmatpush1.xpose.msra.mxu0 0.0
    %2556 = vmatprep.subr.mxu0 0.0
    %2557 = vmatpush1.xpose.msra.mxu0 0.0
    %2558 = vmatprep.subr.mxu0 0.0
    %2559 = vmatpush1.xpose.msra.mxu0 0.0
    %2560 = vmatprep.subr.mxu0 0.0
    %2561 = vmatpush1.xpose.msra.mxu0 0.0
    %2562 = vmatprep.subr.mxu0 0.0
    %2563 = vmatpush1.xpose.msra.mxu0 0.0
    %2564 = vmatprep.subr.mxu0 0.0
    %2565 = vmatpush1.xpose.msra.mxu0 0.0
    %2566 = vmatprep.subr.mxu0 0.0
    %2567 = vmatpush1.xpose.msra.mxu0 0.0
    %2568 = vmatprep.subr.mxu0 0.0
    %2569 = vmatpush1.xpose.msra.mxu0 0.0
    %2570 = vmatprep.subr.mxu0 0.0
    %2571 = vmatpush1.xpose.msra.mxu0 0.0
    %2572 = vmatprep.subr.mxu0 0.0
    %2573 = vmatpush1.xpose.msra.mxu0 0.0
    %2574 = vmatprep.subr.mxu0 0.0
    %2575 = vmatpush1.xpose.msra.mxu0 0.0
    %2576 = vmatprep.subr.mxu0 0.0
    %2577 = vmatpush1.xpose.msra.mxu0 0.0
    %2578 = vmatprep.subr.mxu0 0.0
    %2579 = vmatpush1.xpose.msra.mxu0 0.0
    %2580 = vmatprep.subr.mxu0 0.0
    %2581 = vmatpush1.xpose.msra.mxu0 0.0
    %2582 = vmatprep.subr.mxu0 0.0
    %2583 = vmatpush1.xpose.msra.mxu0 0.0
    %2584 = vmatprep.subr.mxu0 0.0
    %2585 = vmatpush1.xpose.msra.mxu0 0.0
    %2586 = vmatprep.subr.mxu0 0.0
    %2587 = vmatpush1.xpose.msra.mxu0 0.0
    %2588 = vmatprep.subr.mxu0 0.0
    %2589 = vmatpush1.xpose.msra.mxu0 0.0
    %2590 = vmatprep.subr.mxu0 0.0
    %2591 = vmatpush1.xpose.msra.mxu0 0.0
    %2592 = vmatprep.subr.mxu0 0.0
    %2593 = vmatpush1.xpose.msra.mxu0 0.0
    %2594 = vmatprep.subr.mxu0 0.0
    %2595 = vmatpush1.xpose.msra.mxu0 0.0
    %2596 = vmatprep.subr.mxu0 0.0
    %2597 = vmatpush1.xpose.msra.mxu0 0.0
    %2598 = vmatprep.subr.mxu0 0.0
    %2599 = vmatpush1.xpose.msra.mxu0 0.0
    %2600 = vmatprep.subr.mxu0 0.0
    %2601 = vmatpush1.xpose.msra.mxu0 0.0
    %2602 = vmatprep.subr.mxu0 0.0
    %2603 = vmatpush1.xpose.msra.mxu0 0.0
    %2604 = vmatprep.subr.mxu0 0.0
    %2605 = vmatpush1.xpose.msra.mxu0 0.0
    %2606 = vmatprep.subr.mxu0 0.0
    %2607 = vmatpush1.xpose.msra.mxu0 0.0
    %2608 = vmatprep.subr.mxu0 0.0
    %2609 = vmatpush1.xpose.msra.mxu0 0.0
    %2610 = vmatprep.subr.mxu0 0.0
    %2611 = vmatpush1.xpose.msra.mxu0 0.0
    %2612 = vmatprep.subr.mxu0 0.0
    %2613 = vmatpush1.xpose.msra.mxu0 0.0
    %2614 = vmatprep.mubr.f32.mxu0 0.0
    %2615 = vmatmul.mubr.f32.gmra.mrb[0].mxu0 %v2546
    %v2616 = vpop.f32.mrb[0].mxu0
    %v2617 = vadd.f32 0.0, %v2616
    %v2618 = vpop.f32.mrb[0].mxu0
    %2619 = vdwg.mxu0
    %2620 = vrot.lane.b32.xlu0 %v2161, 96
    %v2621 = vpop.permute.xlu0 %2620
    %v2622 = vsel %vm322, %v2161, 0
    %v2624 = vsel %vm322, %v2621, 0
    %2626 = vmatprep.subr.mxu0 0.0
    %2627 = vmatpush1.xpose.msra.mxu0 %v2624
    %2628 = vmatprep.subr.mxu0 0.0
    %2629 = vmatpush1.xpose.msra.mxu0 0.0
    %2630 = vmatprep.subr.mxu0 0.0
    %2631 = vmatpush1.xpose.msra.mxu0 0.0
    %2632 = vmatprep.subr.mxu0 0.0
    %2633 = vmatpush1.xpose.msra.mxu0 0.0
    %2634 = vmatprep.subr.mxu0 0.0
    %2635 = vmatpush1.xpose.msra.mxu0 0.0
    %2636 = vmatprep.subr.mxu0 0.0
    %2637 = vmatpush1.xpose.msra.mxu0 0.0
    %2638 = vmatprep.subr.mxu0 0.0
    %2639 = vmatpush1.xpose.msra.mxu0 0.0
    %2640 = vmatprep.subr.mxu0 0.0
    %2641 = vmatpush1.xpose.msra.mxu0 0.0
    %2642 = vmatprep.subr.mxu0 0.0
    %2643 = vmatpush1.xpose.msra.mxu0 0.0
    %2644 = vmatprep.subr.mxu0 0.0
    %2645 = vmatpush1.xpose.msra.mxu0 0.0
    %2646 = vmatprep.subr.mxu0 0.0
    %2647 = vmatpush1.xpose.msra.mxu0 0.0
    %2648 = vmatprep.subr.mxu0 0.0
    %2649 = vmatpush1.xpose.msra.mxu0 0.0
    %2650 = vmatprep.subr.mxu0 0.0
    %2651 = vmatpush1.xpose.msra.mxu0 0.0
    %2652 = vmatprep.subr.mxu0 0.0
    %2653 = vmatpush1.xpose.msra.mxu0 0.0
    %2654 = vmatprep.subr.mxu0 0.0
    %2655 = vmatpush1.xpose.msra.mxu0 0.0
    %2656 = vmatprep.subr.mxu0 0.0
    %2657 = vmatpush1.xpose.msra.mxu0 0.0
    %2658 = vmatprep.subr.mxu0 0.0
    %2659 = vmatpush1.xpose.msra.mxu0 0.0
    %2660 = vmatprep.subr.mxu0 0.0
    %2661 = vmatpush1.xpose.msra.mxu0 0.0
    %2662 = vmatprep.subr.mxu0 0.0
    %2663 = vmatpush1.xpose.msra.mxu0 0.0
    %2664 = vmatprep.subr.mxu0 0.0
    %2665 = vmatpush1.xpose.msra.mxu0 0.0
    %2666 = vmatprep.subr.mxu0 0.0
    %2667 = vmatpush1.xpose.msra.mxu0 0.0
    %2668 = vmatprep.subr.mxu0 0.0
    %2669 = vmatpush1.xpose.msra.mxu0 0.0
    %2670 = vmatprep.subr.mxu0 0.0
    %2671 = vmatpush1.xpose.msra.mxu0 0.0
    %2672 = vmatprep.subr.mxu0 0.0
    %2673 = vmatpush1.xpose.msra.mxu0 0.0
    %2674 = vmatprep.subr.mxu0 0.0
    %2675 = vmatpush1.xpose.msra.mxu0 0.0
    %2676 = vmatprep.subr.mxu0 0.0
    %2677 = vmatpush1.xpose.msra.mxu0 0.0
    %2678 = vmatprep.subr.mxu0 0.0
    %2679 = vmatpush1.xpose.msra.mxu0 0.0
    %2680 = vmatprep.subr.mxu0 0.0
    %2681 = vmatpush1.xpose.msra.mxu0 0.0
    %2682 = vmatprep.subr.mxu0 0.0
    %2683 = vmatpush1.xpose.msra.mxu0 0.0
    %2684 = vmatprep.subr.mxu0 0.0
    %2685 = vmatpush1.xpose.msra.mxu0 0.0
    %2686 = vmatprep.subr.mxu0 0.0
    %2687 = vmatpush1.xpose.msra.mxu0 0.0
    %2688 = vmatprep.subr.mxu0 0.0
    %2689 = vmatpush1.xpose.msra.mxu0 0.0
    %2690 = vmatprep.mubr.f32.mxu0 0.0
    %2691 = vmatmul.mubr.f32.gmra.mrb[0].mxu0 %v2622
    %v2692 = vpop.f32.mrb[0].mxu0
    %v2693 = vadd.f32 0.0, %v2692
    %v2694 = vpop.f32.mrb[0].mxu0
    %2695 = vdwg.mxu0
    %2696 = vrot.lane.b32.xlu0 %v2163, 96
    %v2697 = vpop.permute.xlu0 %2696
    %v2698 = vsel %vm322, %v2163, 0
    %v2700 = vsel %vm322, %v2697, 0
    %2702 = vmatprep.subr.mxu0 0.0
    %2703 = vmatpush1.xpose.msra.mxu0 %v2700
    %2704 = vmatprep.subr.mxu0 0.0
    %2705 = vmatpush1.xpose.msra.mxu0 0.0
    %2706 = vmatprep.subr.mxu0 0.0
    %2707 = vmatpush1.xpose.msra.mxu0 0.0
    %2708 = vmatprep.subr.mxu0 0.0
    %2709 = vmatpush1.xpose.msra.mxu0 0.0
    %2710 = vmatprep.subr.mxu0 0.0
    %2711 = vmatpush1.xpose.msra.mxu0 0.0
    %2712 = vmatprep.subr.mxu0 0.0
    %2713 = vmatpush1.xpose.msra.mxu0 0.0
    %2714 = vmatprep.subr.mxu0 0.0
    %2715 = vmatpush1.xpose.msra.mxu0 0.0
    %2716 = vmatprep.subr.mxu0 0.0
    %2717 = vmatpush1.xpose.msra.mxu0 0.0
    %2718 = vmatprep.subr.mxu0 0.0
    %2719 = vmatpush1.xpose.msra.mxu0 0.0
    %2720 = vmatprep.subr.mxu0 0.0
    %2721 = vmatpush1.xpose.msra.mxu0 0.0
    %2722 = vmatprep.subr.mxu0 0.0
    %2723 = vmatpush1.xpose.msra.mxu0 0.0
    %2724 = vmatprep.subr.mxu0 0.0
    %2725 = vmatpush1.xpose.msra.mxu0 0.0
    %2726 = vmatprep.subr.mxu0 0.0
    %2727 = vmatpush1.xpose.msra.mxu0 0.0
    %2728 = vmatprep.subr.mxu0 0.0
    %2729 = vmatpush1.xpose.msra.mxu0 0.0
    %2730 = vmatprep.subr.mxu0 0.0
    %2731 = vmatpush1.xpose.msra.mxu0 0.0
    %2732 = vmatprep.subr.mxu0 0.0
    %2733 = vmatpush1.xpose.msra.mxu0 0.0
    %2734 = vmatprep.subr.mxu0 0.0
    %2735 = vmatpush1.xpose.msra.mxu0 0.0
    %2736 = vmatprep.subr.mxu0 0.0
    %2737 = vmatpush1.xpose.msra.mxu0 0.0
    %2738 = vmatprep.subr.mxu0 0.0
    %2739 = vmatpush1.xpose.msra.mxu0 0.0
    %2740 = vmatprep.subr.mxu0 0.0
    %2741 = vmatpush1.xpose.msra.mxu0 0.0
    %2742 = vmatprep.subr.mxu0 0.0
    %2743 = vmatpush1.xpose.msra.mxu0 0.0
    %2744 = vmatprep.subr.mxu0 0.0
    %2745 = vmatpush1.xpose.msra.mxu0 0.0
    %2746 = vmatprep.subr.mxu0 0.0
    %2747 = vmatpush1.xpose.msra.mxu0 0.0
    %2748 = vmatprep.subr.mxu0 0.0
    %2749 = vmatpush1.xpose.msra.mxu0 0.0
    %2750 = vmatprep.subr.mxu0 0.0
    %2751 = vmatpush1.xpose.msra.mxu0 0.0
    %2752 = vmatprep.subr.mxu0 0.0
    %2753 = vmatpush1.xpose.msra.mxu0 0.0
    %2754 = vmatprep.subr.mxu0 0.0
    %2755 = vmatpush1.xpose.msra.mxu0 0.0
    %2756 = vmatprep.subr.mxu0 0.0
    %2757 = vmatpush1.xpose.msra.mxu0 0.0
    %2758 = vmatprep.subr.mxu0 0.0
    %2759 = vmatpush1.xpose.msra.mxu0 0.0
    %2760 = vmatprep.subr.mxu0 0.0
    %2761 = vmatpush1.xpose.msra.mxu0 0.0
    %2762 = vmatprep.subr.mxu0 0.0
    %2763 = vmatpush1.xpose.msra.mxu0 0.0
    %2764 = vmatprep.subr.mxu0 0.0
    %2765 = vmatpush1.xpose.msra.mxu0 0.0
    %2766 = vmatprep.mubr.f32.mxu0 0.0
    %2767 = vmatmul.mubr.f32.gmra.mrb[0].mxu0 %v2698
    %v2768 = vpop.f32.mrb[0].mxu0
    %v2769 = vadd.f32 0.0, %v2768
    %v2770 = vpop.f32.mrb[0].mxu0
    %2771 = vdwg.mxu0
    %v2772 = vmul.f32 %v2237, 0.35355338
    %v2773 = vmul.f32 %v2313, 0.35355338
    %v2774 = vmul.f32 %v2389, 0.35355338
    %v2775 = vmul.f32 %v2465, 0.35355338
    %v2776 = vmul.f32 %v2541, 0.35355338
    %v2777 = vmul.f32 %v2617, 0.35355338
    %v2778 = vmul.f32 %v2693, 0.35355338
    %v2779 = vmul.f32 %v2769, 0.35355338
    %v2780 = vadd.f32 %v2772, %v940
    %v2781 = vadd.f32 %v2773, %v944
    %v2782 = vadd.f32 %v2774, %v940
    %v2783 = vadd.f32 %v2775, %v944
    %v2784 = vadd.f32 %v2776, %v940
    %v2785 = vadd.f32 %v2777, %v944
    %v2786 = vadd.f32 %v2778, %v940
    %v2787 = vadd.f32 %v2779, %v944
    %v2788 = vsel %vm322, %v2780, -inf
    %2789 = vmax.xlane.f32.xlu0 %v2788
    %v2790 = vpop.xlane.xlu0 %2789
    %v2791 = vsel %vm322, %v2781, -inf
    %2792 = vmax.xlane.f32.xlu0 %v2791
    %v2793 = vpop.xlane.xlu0 %2792
    %v2794 = vsel %vm322, %v2782, -inf
    %2795 = vmax.xlane.f32.xlu0 %v2794
    %v2796 = vpop.xlane.xlu0 %2795
    %v2797 = vsel %vm322, %v2783, -inf
    %2798 = vmax.xlane.f32.xlu0 %v2797
    %v2799 = vpop.xlane.xlu0 %2798
    %v2800 = vsel %vm322, %v2784, -inf
    %2801 = vmax.xlane.f32.xlu0 %v2800
    %v2802 = vpop.xlane.xlu0 %2801
    %v2803 = vsel %vm322, %v2785, -inf
    %2804 = vmax.xlane.f32.xlu0 %v2803
    %v2805 = vpop.xlane.xlu0 %2804
    %v2806 = vsel %vm322, %v2786, -inf
    %2807 = vmax.xlane.f32.xlu0 %v2806
    %v2808 = vpop.xlane.xlu0 %2807
    %v2809 = vsel %vm322, %v2787, -inf
    %2810 = vmax.xlane.f32.xlu0 %v2809
    %v2811 = vpop.xlane.xlu0 %2810
    %v2812 = vsub.f32 %v2780, %v2790
    %v2813 = vsub.f32 %v2781, %v2793
    %v2814 = vsub.f32 %v2782, %v2796
    %v2815 = vsub.f32 %v2783, %v2799
    %v2816 = vsub.f32 %v2784, %v2802
    %v2817 = vsub.f32 %v2785, %v2805
    %v2818 = vsub.f32 %v2786, %v2808
    %v2819 = vsub.f32 %v2787, %v2811
    %v2820 = vmul.f32 %v2812, 1.442695
    %v2821 = vpow.pop %v2820
    %v2822 = vmul.f32 %v2813, 1.442695
    %v2823 = vpow.pop %v2822
    %v2824 = vmul.f32 %v2814, 1.442695
    %v2825 = vpow.pop %v2824
    %v2826 = vmul.f32 %v2815, 1.442695
    %v2827 = vpow.pop %v2826
    %v2828 = vmul.f32 %v2816, 1.442695
    %v2829 = vpow.pop %v2828
    %v2830 = vmul.f32 %v2817, 1.442695
    %v2831 = vpow.pop %v2830
    %v2832 = vmul.f32 %v2818, 1.442695
    %v2833 = vpow.pop %v2832
    %v2834 = vmul.f32 %v2819, 1.442695
    %v2835 = vpow.pop %v2834
    %v2836 = vsel %vm322, %v2821, 0.0
    %2837 = vadd.xlane.f32.xlu0 %v2836
    %v2838 = vpop.xlane.xlu0 %2837
    %v2839 = vsel %vm322, %v2823, 0.0
    %2840 = vadd.xlane.f32.xlu0 %v2839
    %v2841 = vpop.xlane.xlu0 %2840
    %v2842 = vsel %vm322, %v2825, 0.0
    %2843 = vadd.xlane.f32.xlu0 %v2842
    %v2844 = vpop.xlane.xlu0 %2843
    %v2845 = vsel %vm322, %v2827, 0.0
    %2846 = vadd.xlane.f32.xlu0 %v2845
    %v2847 = vpop.xlane.xlu0 %2846
    %v2848 = vsel %vm322, %v2829, 0.0
    %2849 = vadd.xlane.f32.xlu0 %v2848
    %v2850 = vpop.xlane.xlu0 %2849
    %v2851 = vsel %vm322, %v2831, 0.0
    %2852 = vadd.xlane.f32.xlu0 %v2851
    %v2853 = vpop.xlane.xlu0 %2852
    %v2854 = vsel %vm322, %v2833, 0.0
    %2855 = vadd.xlane.f32.xlu0 %v2854
    %v2856 = vpop.xlane.xlu0 %2855
    %v2857 = vsel %vm322, %v2835, 0.0
    %2858 = vadd.xlane.f32.xlu0 %v2857
    %v2859 = vpop.xlane.xlu0 %2858
    %v2860 = vrcp.pop %v2838
    %v2861 = vrcp.pop %v2841
    %v2862 = vrcp.pop %v2844
    %v2863 = vrcp.pop %v2847
    %v2864 = vrcp.pop %v2850
    %v2865 = vrcp.pop %v2853
    %v2866 = vrcp.pop %v2856
    %v2867 = vrcp.pop %v2859
    %v2868 = vmul.f32 %v2821, %v2860
    %v2869 = vmul.f32 %v2823, %v2861
    %v2870 = vmul.f32 %v2825, %v2862
    %v2871 = vmul.f32 %v2827, %v2863
    %v2872 = vmul.f32 %v2829, %v2864
    %v2873 = vmul.f32 %v2831, %v2865
    %v2874 = vmul.f32 %v2833, %v2866
    %v2875 = vmul.f32 %v2835, %v2867
    %2876 = vrot.lane.b32.xlu0 %v2142, 64
    %v2877 = vpop.permute.xlu0 %2876
    %v2880 = vsel %vm322, %v2868, 0
    %2882 = vmatprep.subr.mxu0 0.0
    %2883 = vmatpush1.msra.mxu0 %v2877
    %2884 = vmatprep.subr.mxu0 0.0
    %2885 = vmatpush1.msra.mxu0 0.0
    %2886 = vmatprep.subr.mxu0 0.0
    %2887 = vmatpush1.msra.mxu0 0.0
    %2888 = vmatprep.subr.mxu0 0.0
    %2889 = vmatpush1.msra.mxu0 0.0
    %2890 = vmatprep.subr.mxu0 0.0
    %2891 = vmatpush1.msra.mxu0 0.0
    %2892 = vmatprep.subr.mxu0 0.0
    %2893 = vmatpush1.msra.mxu0 0.0
    %2894 = vmatprep.subr.mxu0 0.0
    %2895 = vmatpush1.msra.mxu0 0.0
    %2896 = vmatprep.subr.mxu0 0.0
    %2897 = vmatpush1.msra.mxu0 0.0
    %2898 = vmatprep.subr.mxu0 0.0
    %2899 = vmatpush1.msra.mxu0 0.0
    %2900 = vmatprep.subr.mxu0 0.0
    %2901 = vmatpush1.msra.mxu0 0.0
    %2902 = vmatprep.subr.mxu0 0.0
    %2903 = vmatpush1.msra.mxu0 0.0
    %2904 = vmatprep.subr.mxu0 0.0
    %2905 = vmatpush1.msra.mxu0 0.0
    %2906 = vmatprep.subr.mxu0 0.0
    %2907 = vmatpush1.msra.mxu0 0.0
    %2908 = vmatprep.subr.mxu0 0.0
    %2909 = vmatpush1.msra.mxu0 0.0
    %2910 = vmatprep.subr.mxu0 0.0
    %2911 = vmatpush1.msra.mxu0 0.0
    %2912 = vmatprep.subr.mxu0 0.0
    %2913 = vmatpush1.msra.mxu0 0.0
    %2914 = vmatprep.subr.mxu0 0.0
    %2915 = vmatpush1.msra.mxu0 0.0
    %2916 = vmatprep.subr.mxu0 0.0
    %2917 = vmatpush1.msra.mxu0 0.0
    %2918 = vmatprep.subr.mxu0 0.0
    %2919 = vmatpush1.msra.mxu0 0.0
    %2920 = vmatprep.subr.mxu0 0.0
    %2921 = vmatpush1.msra.mxu0 0.0
    %2922 = vmatprep.subr.mxu0 0.0
    %2923 = vmatpush1.msra.mxu0 0.0
    %2924 = vmatprep.subr.mxu0 0.0
    %2925 = vmatpush1.msra.mxu0 0.0
    %2926 = vmatprep.subr.mxu0 0.0
    %2927 = vmatpush1.msra.mxu0 0.0
    %2928 = vmatprep.subr.mxu0 0.0
    %2929 = vmatpush1.msra.mxu0 0.0
    %2930 = vmatprep.subr.mxu0 0.0
    %2931 = vmatpush1.msra.mxu0 0.0
    %2932 = vmatprep.subr.mxu0 0.0
    %2933 = vmatpush1.msra.mxu0 0.0
    %2934 = vmatprep.subr.mxu0 0.0
    %2935 = vmatpush1.msra.mxu0 0.0
    %2936 = vmatprep.subr.mxu0 0.0
    %2937 = vmatpush1.msra.mxu0 0.0
    %2938 = vmatprep.subr.mxu0 0.0
    %2939 = vmatpush1.msra.mxu0 0.0
    %2940 = vmatprep.subr.mxu0 0.0
    %2941 = vmatpush1.msra.mxu0 0.0
    %2942 = vmatprep.subr.mxu0 0.0
    %2943 = vmatpush1.msra.mxu0 0.0
    %2944 = vmatprep.subr.mxu0 0.0
    %2945 = vmatpush1.msra.mxu0 0.0
    %2946 = vmatprep.mubr.f32.mxu0 0.0
    %2947 = vmatmul.mubr.f32.gmra.mrb[0].mxu0 %v2880
    %v2948 = vpop.f32.mrb[0].mxu0
    %v2949 = vadd.f32 0.0, %v2948
    %v2950 = vpop.f32.mrb[0].mxu0
    %2951 = vdwg.mxu0
    %2952 = vrot.lane.b32.xlu0 %v2147, 64
    %v2953 = vpop.permute.xlu0 %2952
    %v2956 = vsel %vm322, %v2869, 0
    %2958 = vmatprep.subr.mxu0 0.0
    %2959 = vmatpush1.msra.mxu0 %v2953
    %2960 = vmatprep.subr.mxu0 0.0
    %2961 = vmatpush1.msra.mxu0 0.0
    %2962 = vmatprep.subr.mxu0 0.0
    %2963 = vmatpush1.msra.mxu0 0.0
    %2964 = vmatprep.subr.mxu0 0.0
    %2965 = vmatpush1.msra.mxu0 0.0
    %2966 = vmatprep.subr.mxu0 0.0
    %2967 = vmatpush1.msra.mxu0 0.0
    %2968 = vmatprep.subr.mxu0 0.0
    %2969 = vmatpush1.msra.mxu0 0.0
    %2970 = vmatprep.subr.mxu0 0.0
    %2971 = vmatpush1.msra.mxu0 0.0
    %2972 = vmatprep.subr.mxu0 0.0
    %2973 = vmatpush1.msra.mxu0 0.0
    %2974 = vmatprep.subr.mxu0 0.0
    %2975 = vmatpush1.msra.mxu0 0.0
    %2976 = vmatprep.subr.mxu0 0.0
    %2977 = vmatpush1.msra.mxu0 0.0
    %2978 = vmatprep.subr.mxu0 0.0
    %2979 = vmatpush1.msra.mxu0 0.0
    %2980 = vmatprep.subr.mxu0 0.0
    %2981 = vmatpush1.msra.mxu0 0.0
    %2982 = vmatprep.subr.mxu0 0.0
    %2983 = vmatpush1.msra.mxu0 0.0
    %2984 = vmatprep.subr.mxu0 0.0
    %2985 = vmatpush1.msra.mxu0 0.0
    %2986 = vmatprep.subr.mxu0 0.0
    %2987 = vmatpush1.msra.mxu0 0.0
    %2988 = vmatprep.subr.mxu0 0.0
    %2989 = vmatpush1.msra.mxu0 0.0
    %2990 = vmatprep.subr.mxu0 0.0
    %2991 = vmatpush1.msra.mxu0 0.0
    %2992 = vmatprep.subr.mxu0 0.0
    %2993 = vmatpush1.msra.mxu0 0.0
    %2994 = vmatprep.subr.mxu0 0.0
    %2995 = vmatpush1.msra.mxu0 0.0
    %2996 = vmatprep.subr.mxu0 0.0
    %2997 = vmatpush1.msra.mxu0 0.0
    %2998 = vmatprep.subr.mxu0 0.0
    %2999 = vmatpush1.msra.mxu0 0.0
    %3000 = vmatprep.subr.mxu0 0.0
    %3001 = vmatpush1.msra.mxu0 0.0
    %3002 = vmatprep.subr.mxu0 0.0
    %3003 = vmatpush1.msra.mxu0 0.0
    %3004 = vmatprep.subr.mxu0 0.0
    %3005 = vmatpush1.msra.mxu0 0.0
    %3006 = vmatprep.subr.mxu0 0.0
    %3007 = vmatpush1.msra.mxu0 0.0
    %3008 = vmatprep.subr.mxu0 0.0
    %3009 = vmatpush1.msra.mxu0 0.0
    %3010 = vmatprep.subr.mxu0 0.0
    %3011 = vmatpush1.msra.mxu0 0.0
    %3012 = vmatprep.subr.mxu0 0.0
    %3013 = vmatpush1.msra.mxu0 0.0
    %3014 = vmatprep.subr.mxu0 0.0
    %3015 = vmatpush1.msra.mxu0 0.0
    %3016 = vmatprep.subr.mxu0 0.0
    %3017 = vmatpush1.msra.mxu0 0.0
    %3018 = vmatprep.subr.mxu0 0.0
    %3019 = vmatpush1.msra.mxu0 0.0
    %3020 = vmatprep.subr.mxu0 0.0
    %3021 = vmatpush1.msra.mxu0 0.0
    %3022 = vmatprep.mubr.f32.mxu0 0.0
    %3023 = vmatmul.mubr.f32.gmra.mrb[0].mxu0 %v2956
    %v3024 = vpop.f32.mrb[0].mxu0
    %v3025 = vadd.f32 0.0, %v3024
    %v3026 = vpop.f32.mrb[0].mxu0
    %3027 = vdwg.mxu0
    %3028 = vrot.lane.b32.xlu0 %v2153, 64
    %v3029 = vpop.permute.xlu0 %3028
    %v3032 = vsel %vm322, %v2870, 0
    %3034 = vmatprep.subr.mxu0 0.0
    %3035 = vmatpush1.msra.mxu0 %v3029
    %3036 = vmatprep.subr.mxu0 0.0
    %3037 = vmatpush1.msra.mxu0 0.0
    %3038 = vmatprep.subr.mxu0 0.0
    %3039 = vmatpush1.msra.mxu0 0.0
    %3040 = vmatprep.subr.mxu0 0.0
    %3041 = vmatpush1.msra.mxu0 0.0
    %3042 = vmatprep.subr.mxu0 0.0
    %3043 = vmatpush1.msra.mxu0 0.0
    %3044 = vmatprep.subr.mxu0 0.0
    %3045 = vmatpush1.msra.mxu0 0.0
    %3046 = vmatprep.subr.mxu0 0.0
    %3047 = vmatpush1.msra.mxu0 0.0
    %3048 = vmatprep.subr.mxu0 0.0
    %3049 = vmatpush1.msra.mxu0 0.0
    %3050 = vmatprep.subr.mxu0 0.0
    %3051 = vmatpush1.msra.mxu0 0.0
    %3052 = vmatprep.subr.mxu0 0.0
    %3053 = vmatpush1.msra.mxu0 0.0
    %3054 = vmatprep.subr.mxu0 0.0
    %3055 = vmatpush1.msra.mxu0 0.0
    %3056 = vmatprep.subr.mxu0 0.0
    %3057 = vmatpush1.msra.mxu0 0.0
    %3058 = vmatprep.subr.mxu0 0.0
    %3059 = vmatpush1.msra.mxu0 0.0
    %3060 = vmatprep.subr.mxu0 0.0
    %3061 = vmatpush1.msra.mxu0 0.0
    %3062 = vmatprep.subr.mxu0 0.0
    %3063 = vmatpush1.msra.mxu0 0.0
    %3064 = vmatprep.subr.mxu0 0.0
    %3065 = vmatpush1.msra.mxu0 0.0
    %3066 = vmatprep.subr.mxu0 0.0
    %3067 = vmatpush1.msra.mxu0 0.0
    %3068 = vmatprep.subr.mxu0 0.0
    %3069 = vmatpush1.msra.mxu0 0.0
    %3070 = vmatprep.subr.mxu0 0.0
    %3071 = vmatpush1.msra.mxu0 0.0
    %3072 = vmatprep.subr.mxu0 0.0
    %3073 = vmatpush1.msra.mxu0 0.0
    %3074 = vmatprep.subr.mxu0 0.0
    %3075 = vmatpush1.msra.mxu0 0.0
    %3076 = vmatprep.subr.mxu0 0.0
    %3077 = vmatpush1.msra.mxu0 0.0
    %3078 = vmatprep.subr.mxu0 0.0
    %3079 = vmatpush1.msra.mxu0 0.0
    %3080 = vmatprep.subr.mxu0 0.0
    %3081 = vmatpush1.msra.mxu0 0.0
    %3082 = vmatprep.subr.mxu0 0.0
    %3083 = vmatpush1.msra.mxu0 0.0
    %3084 = vmatprep.subr.mxu0 0.0
    %3085 = vmatpush1.msra.mxu0 0.0
    %3086 = vmatprep.subr.mxu0 0.0
    %3087 = vmatpush1.msra.mxu0 0.0
    %3088 = vmatprep.subr.mxu0 0.0
    %3089 = vmatpush1.msra.mxu0 0.0
    %3090 = vmatprep.subr.mxu0 0.0
    %3091 = vmatpush1.msra.mxu0 0.0
    %3092 = vmatprep.subr.mxu0 0.0
    %3093 = vmatpush1.msra.mxu0 0.0
    %3094 = vmatprep.subr.mxu0 0.0
    %3095 = vmatpush1.msra.mxu0 0.0
    %3096 = vmatprep.subr.mxu0 0.0
    %3097 = vmatpush1.msra.mxu0 0.0
    %3098 = vmatprep.mubr.f32.mxu0 0.0
    %3099 = vmatmul.mubr.f32.gmra.mrb[0].mxu0 %v3032
    %v3100 = vpop.f32.mrb[0].mxu0
    %v3101 = vadd.f32 0.0, %v3100
    %v3102 = vpop.f32.mrb[0].mxu0
    %3103 = vdwg.mxu0
    %3104 = vrot.lane.b32.xlu0 %v2155, 64
    %v3105 = vpop.permute.xlu0 %3104
    %v3108 = vsel %vm322, %v2871, 0
    %3110 = vmatprep.subr.mxu0 0.0
    %3111 = vmatpush1.msra.mxu0 %v3105
    %3112 = vmatprep.subr.mxu0 0.0
    %3113 = vmatpush1.msra.mxu0 0.0
    %3114 = vmatprep.subr.mxu0 0.0
    %3115 = vmatpush1.msra.mxu0 0.0
    %3116 = vmatprep.subr.mxu0 0.0
    %3117 = vmatpush1.msra.mxu0 0.0
    %3118 = vmatprep.subr.mxu0 0.0
    %3119 = vmatpush1.msra.mxu0 0.0
    %3120 = vmatprep.subr.mxu0 0.0
    %3121 = vmatpush1.msra.mxu0 0.0
    %3122 = vmatprep.subr.mxu0 0.0
    %3123 = vmatpush1.msra.mxu0 0.0
    %3124 = vmatprep.subr.mxu0 0.0
    %3125 = vmatpush1.msra.mxu0 0.0
    %3126 = vmatprep.subr.mxu0 0.0
    %3127 = vmatpush1.msra.mxu0 0.0
    %3128 = vmatprep.subr.mxu0 0.0
    %3129 = vmatpush1.msra.mxu0 0.0
    %3130 = vmatprep.subr.mxu0 0.0
    %3131 = vmatpush1.msra.mxu0 0.0
    %3132 = vmatprep.subr.mxu0 0.0
    %3133 = vmatpush1.msra.mxu0 0.0
    %3134 = vmatprep.subr.mxu0 0.0
    %3135 = vmatpush1.msra.mxu0 0.0
    %3136 = vmatprep.subr.mxu0 0.0
    %3137 = vmatpush1.msra.mxu0 0.0
    %3138 = vmatprep.subr.mxu0 0.0
    %3139 = vmatpush1.msra.mxu0 0.0
    %3140 = vmatprep.subr.mxu0 0.0
    %3141 = vmatpush1.msra.mxu0 0.0
    %3142 = vmatprep.subr.mxu0 0.0
    %3143 = vmatpush1.msra.mxu0 0.0
    %3144 = vmatprep.subr.mxu0 0.0
    %3145 = vmatpush1.msra.mxu0 0.0
    %3146 = vmatprep.subr.mxu0 0.0
    %3147 = vmatpush1.msra.mxu0 0.0
    %3148 = vmatprep.subr.mxu0 0.0
    %3149 = vmatpush1.msra.mxu0 0.0
    %3150 = vmatprep.subr.mxu0 0.0
    %3151 = vmatpush1.msra.mxu0 0.0
    %3152 = vmatprep.subr.mxu0 0.0
    %3153 = vmatpush1.msra.mxu0 0.0
    %3154 = vmatprep.subr.mxu0 0.0
    %3155 = vmatpush1.msra.mxu0 0.0
    %3156 = vmatprep.subr.mxu0 0.0
    %3157 = vmatpush1.msra.mxu0 0.0
    %3158 = vmatprep.subr.mxu0 0.0
    %3159 = vmatpush1.msra.mxu0 0.0
    %3160 = vmatprep.subr.mxu0 0.0
    %3161 = vmatpush1.msra.mxu0 0.0
    %3162 = vmatprep.subr.mxu0 0.0
    %3163 = vmatpush1.msra.mxu0 0.0
    %3164 = vmatprep.subr.mxu0 0.0
    %3165 = vmatpush1.msra.mxu0 0.0
    %3166 = vmatprep.subr.mxu0 0.0
    %3167 = vmatpush1.msra.mxu0 0.0
    %3168 = vmatprep.subr.mxu0 0.0
    %3169 = vmatpush1.msra.mxu0 0.0
    %3170 = vmatprep.subr.mxu0 0.0
    %3171 = vmatpush1.msra.mxu0 0.0
    %3172 = vmatprep.subr.mxu0 0.0
    %3173 = vmatpush1.msra.mxu0 0.0
    %3174 = vmatprep.mubr.f32.mxu0 0.0
    %3175 = vmatmul.mubr.f32.gmra.mrb[0].mxu0 %v3108
    %v3176 = vpop.f32.mrb[0].mxu0
    %v3177 = vadd.f32 0.0, %v3176
    %v3178 = vpop.f32.mrb[0].mxu0
    %3179 = vdwg.mxu0
    %3180 = vrot.lane.b32.xlu0 %v2157, 64
    %v3181 = vpop.permute.xlu0 %3180
    %v3184 = vsel %vm322, %v2872, 0
    %3186 = vmatprep.subr.mxu0 0.0
    %3187 = vmatpush1.msra.mxu0 %v3181
    %3188 = vmatprep.subr.mxu0 0.0
    %3189 = vmatpush1.msra.mxu0 0.0
    %3190 = vmatprep.subr.mxu0 0.0
    %3191 = vmatpush1.msra.mxu0 0.0
    %3192 = vmatprep.subr.mxu0 0.0
    %3193 = vmatpush1.msra.mxu0 0.0
    %3194 = vmatprep.subr.mxu0 0.0
    %3195 = vmatpush1.msra.mxu0 0.0
    %3196 = vmatprep.subr.mxu0 0.0
    %3197 = vmatpush1.msra.mxu0 0.0
    %3198 = vmatprep.subr.mxu0 0.0
    %3199 = vmatpush1.msra.mxu0 0.0
    %3200 = vmatprep.subr.mxu0 0.0
    %3201 = vmatpush1.msra.mxu0 0.0
    %3202 = vmatprep.subr.mxu0 0.0
    %3203 = vmatpush1.msra.mxu0 0.0
    %3204 = vmatprep.subr.mxu0 0.0
    %3205 = vmatpush1.msra.mxu0 0.0
    %3206 = vmatprep.subr.mxu0 0.0
    %3207 = vmatpush1.msra.mxu0 0.0
    %3208 = vmatprep.subr.mxu0 0.0
    %3209 = vmatpush1.msra.mxu0 0.0
    %3210 = vmatprep.subr.mxu0 0.0
    %3211 = vmatpush1.msra.mxu0 0.0
    %3212 = vmatprep.subr.mxu0 0.0
    %3213 = vmatpush1.msra.mxu0 0.0
    %3214 = vmatprep.subr.mxu0 0.0
    %3215 = vmatpush1.msra.mxu0 0.0
    %3216 = vmatprep.subr.mxu0 0.0
    %3217 = vmatpush1.msra.mxu0 0.0
    %3218 = vmatprep.subr.mxu0 0.0
    %3219 = vmatpush1.msra.mxu0 0.0
    %3220 = vmatprep.subr.mxu0 0.0
    %3221 = vmatpush1.msra.mxu0 0.0
    %3222 = vmatprep.subr.mxu0 0.0
    %3223 = vmatpush1.msra.mxu0 0.0
    %3224 = vmatprep.subr.mxu0 0.0
    %3225 = vmatpush1.msra.mxu0 0.0
    %3226 = vmatprep.subr.mxu0 0.0
    %3227 = vmatpush1.msra.mxu0 0.0
    %3228 = vmatprep.subr.mxu0 0.0
    %3229 = vmatpush1.msra.mxu0 0.0
    %3230 = vmatprep.subr.mxu0 0.0
    %3231 = vmatpush1.msra.mxu0 0.0
    %3232 = vmatprep.subr.mxu0 0.0
    %3233 = vmatpush1.msra.mxu0 0.0
    %3234 = vmatprep.subr.mxu0 0.0
    %3235 = vmatpush1.msra.mxu0 0.0
    %3236 = vmatprep.subr.mxu0 0.0
    %3237 = vmatpush1.msra.mxu0 0.0
    %3238 = vmatprep.subr.mxu0 0.0
    %3239 = vmatpush1.msra.mxu0 0.0
    %3240 = vmatprep.subr.mxu0 0.0
    %3241 = vmatpush1.msra.mxu0 0.0
    %3242 = vmatprep.subr.mxu0 0.0
    %3243 = vmatpush1.msra.mxu0 0.0
    %3244 = vmatprep.subr.mxu0 0.0
    %3245 = vmatpush1.msra.mxu0 0.0
    %3246 = vmatprep.subr.mxu0 0.0
    %3247 = vmatpush1.msra.mxu0 0.0
    %3248 = vmatprep.subr.mxu0 0.0
    %3249 = vmatpush1.msra.mxu0 0.0
    %3250 = vmatprep.mubr.f32.mxu0 0.0
    %3251 = vmatmul.mubr.f32.gmra.mrb[0].mxu0 %v3184
    %v3252 = vpop.f32.mrb[0].mxu0
    %v3253 = vadd.f32 0.0, %v3252
    %v3254 = vpop.f32.mrb[0].mxu0
    %3255 = vdwg.mxu0
    %3256 = vrot.lane.b32.xlu0 %v2159, 64
    %v3257 = vpop.permute.xlu0 %3256
    %v3260 = vsel %vm322, %v2873, 0
    %3262 = vmatprep.subr.mxu0 0.0
    %3263 = vmatpush1.msra.mxu0 %v3257
    %3264 = vmatprep.subr.mxu0 0.0
    %3265 = vmatpush1.msra.mxu0 0.0
    %3266 = vmatprep.subr.mxu0 0.0
    %3267 = vmatpush1.msra.mxu0 0.0
    %3268 = vmatprep.subr.mxu0 0.0
    %3269 = vmatpush1.msra.mxu0 0.0
    %3270 = vmatprep.subr.mxu0 0.0
    %3271 = vmatpush1.msra.mxu0 0.0
    %3272 = vmatprep.subr.mxu0 0.0
    %3273 = vmatpush1.msra.mxu0 0.0
    %3274 = vmatprep.subr.mxu0 0.0
    %3275 = vmatpush1.msra.mxu0 0.0
    %3276 = vmatprep.subr.mxu0 0.0
    %3277 = vmatpush1.msra.mxu0 0.0
    %3278 = vmatprep.subr.mxu0 0.0
    %3279 = vmatpush1.msra.mxu0 0.0
    %3280 = vmatprep.subr.mxu0 0.0
    %3281 = vmatpush1.msra.mxu0 0.0
    %3282 = vmatprep.subr.mxu0 0.0
    %3283 = vmatpush1.msra.mxu0 0.0
    %3284 = vmatprep.subr.mxu0 0.0
    %3285 = vmatpush1.msra.mxu0 0.0
    %3286 = vmatprep.subr.mxu0 0.0
    %3287 = vmatpush1.msra.mxu0 0.0
    %3288 = vmatprep.subr.mxu0 0.0
    %3289 = vmatpush1.msra.mxu0 0.0
    %3290 = vmatprep.subr.mxu0 0.0
    %3291 = vmatpush1.msra.mxu0 0.0
    %3292 = vmatprep.subr.mxu0 0.0
    %3293 = vmatpush1.msra.mxu0 0.0
    %3294 = vmatprep.subr.mxu0 0.0
    %3295 = vmatpush1.msra.mxu0 0.0
    %3296 = vmatprep.subr.mxu0 0.0
    %3297 = vmatpush1.msra.mxu0 0.0
    %3298 = vmatprep.subr.mxu0 0.0
    %3299 = vmatpush1.msra.mxu0 0.0
    %3300 = vmatprep.subr.mxu0 0.0
    %3301 = vmatpush1.msra.mxu0 0.0
    %3302 = vmatprep.subr.mxu0 0.0
    %3303 = vmatpush1.msra.mxu0 0.0
    %3304 = vmatprep.subr.mxu0 0.0
    %3305 = vmatpush1.msra.mxu0 0.0
    %3306 = vmatprep.subr.mxu0 0.0
    %3307 = vmatpush1.msra.mxu0 0.0
    %3308 = vmatprep.subr.mxu0 0.0
    %3309 = vmatpush1.msra.mxu0 0.0
    %3310 = vmatprep.subr.mxu0 0.0
    %3311 = vmatpush1.msra.mxu0 0.0
    %3312 = vmatprep.subr.mxu0 0.0
    %3313 = vmatpush1.msra.mxu0 0.0
    %3314 = vmatprep.subr.mxu0 0.0
    %3315 = vmatpush1.msra.mxu0 0.0
    %3316 = vmatprep.subr.mxu0 0.0
    %3317 = vmatpush1.msra.mxu0 0.0
    %3318 = vmatprep.subr.mxu0 0.0
    %3319 = vmatpush1.msra.mxu0 0.0
    %3320 = vmatprep.subr.mxu0 0.0
    %3321 = vmatpush1.msra.mxu0 0.0
    %3322 = vmatprep.subr.mxu0 0.0
    %3323 = vmatpush1.msra.mxu0 0.0
    %3324 = vmatprep.subr.mxu0 0.0
    %3325 = vmatpush1.msra.mxu0 0.0
    %3326 = vmatprep.mubr.f32.mxu0 0.0
    %3327 = vmatmul.mubr.f32.gmra.mrb[0].mxu0 %v3260
    %v3328 = vpop.f32.mrb[0].mxu0
    %v3329 = vadd.f32 0.0, %v3328
    %v3330 = vpop.f32.mrb[0].mxu0
    %3331 = vdwg.mxu0
    %3332 = vrot.lane.b32.xlu0 %v2161, 64
    %v3333 = vpop.permute.xlu0 %3332
    %v3336 = vsel %vm322, %v2874, 0
    %3338 = vmatprep.subr.mxu0 0.0
    %3339 = vmatpush1.msra.mxu0 %v3333
    %3340 = vmatprep.subr.mxu0 0.0
    %3341 = vmatpush1.msra.mxu0 0.0
    %3342 = vmatprep.subr.mxu0 0.0
    %3343 = vmatpush1.msra.mxu0 0.0
    %3344 = vmatprep.subr.mxu0 0.0
    %3345 = vmatpush1.msra.mxu0 0.0
    %3346 = vmatprep.subr.mxu0 0.0
    %3347 = vmatpush1.msra.mxu0 0.0
    %3348 = vmatprep.subr.mxu0 0.0
    %3349 = vmatpush1.msra.mxu0 0.0
    %3350 = vmatprep.subr.mxu0 0.0
    %3351 = vmatpush1.msra.mxu0 0.0
    %3352 = vmatprep.subr.mxu0 0.0
    %3353 = vmatpush1.msra.mxu0 0.0
    %3354 = vmatprep.subr.mxu0 0.0
    %3355 = vmatpush1.msra.mxu0 0.0
    %3356 = vmatprep.subr.mxu0 0.0
    %3357 = vmatpush1.msra.mxu0 0.0
    %3358 = vmatprep.subr.mxu0 0.0
    %3359 = vmatpush1.msra.mxu0 0.0
    %3360 = vmatprep.subr.mxu0 0.0
    %3361 = vmatpush1.msra.mxu0 0.0
    %3362 = vmatprep.subr.mxu0 0.0
    %3363 = vmatpush1.msra.mxu0 0.0
    %3364 = vmatprep.subr.mxu0 0.0
    %3365 = vmatpush1.msra.mxu0 0.0
    %3366 = vmatprep.subr.mxu0 0.0
    %3367 = vmatpush1.msra.mxu0 0.0
    %3368 = vmatprep.subr.mxu0 0.0
    %3369 = vmatpush1.msra.mxu0 0.0
    %3370 = vmatprep.subr.mxu0 0.0
    %3371 = vmatpush1.msra.mxu0 0.0
    %3372 = vmatprep.subr.mxu0 0.0
    %3373 = vmatpush1.msra.mxu0 0.0
    %3374 = vmatprep.subr.mxu0 0.0
    %3375 = vmatpush1.msra.mxu0 0.0
    %3376 = vmatprep.subr.mxu0 0.0
    %3377 = vmatpush1.msra.mxu0 0.0
    %3378 = vmatprep.subr.mxu0 0.0
    %3379 = vmatpush1.msra.mxu0 0.0
    %3380 = vmatprep.subr.mxu0 0.0
    %3381 = vmatpush1.msra.mxu0 0.0
    %3382 = vmatprep.subr.mxu0 0.0
    %3383 = vmatpush1.msra.mxu0 0.0
    %3384 = vmatprep.subr.mxu0 0.0
    %3385 = vmatpush1.msra.mxu0 0.0
    %3386 = vmatprep.subr.mxu0 0.0
    %3387 = vmatpush1.msra.mxu0 0.0
    %3388 = vmatprep.subr.mxu0 0.0
    %3389 = vmatpush1.msra.mxu0 0.0
    %3390 = vmatprep.subr.mxu0 0.0
    %3391 = vmatpush1.msra.mxu0 0.0
    %3392 = vmatprep.subr.mxu0 0.0
    %3393 = vmatpush1.msra.mxu0 0.0
    %3394 = vmatprep.subr.mxu0 0.0
    %3395 = vmatpush1.msra.mxu0 0.0
    %3396 = vmatprep.subr.mxu0 0.0
    %3397 = vmatpush1.msra.mxu0 0.0
    %3398 = vmatprep.subr.mxu0 0.0
    %3399 = vmatpush1.msra.mxu0 0.0
    %3400 = vmatprep.subr.mxu0 0.0
    %3401 = vmatpush1.msra.mxu0 0.0
    %3402 = vmatprep.mubr.f32.mxu0 0.0
    %3403 = vmatmul.mubr.f32.gmra.mrb[0].mxu0 %v3336
    %v3404 = vpop.f32.mrb[0].mxu0
    %v3405 = vadd.f32 0.0, %v3404
    %v3406 = vpop.f32.mrb[0].mxu0
    %3407 = vdwg.mxu0
    %3408 = vrot.lane.b32.xlu0 %v2163, 64
    %v3409 = vpop.permute.xlu0 %3408
    %v3412 = vsel %vm322, %v2875, 0
    %3414 = vmatprep.subr.mxu0 0.0
    %3415 = vmatpush1.msra.mxu0 %v3409
    %3416 = vmatprep.subr.mxu0 0.0
    %3417 = vmatpush1.msra.mxu0 0.0
    %3418 = vmatprep.subr.mxu0 0.0
    %3419 = vmatpush1.msra.mxu0 0.0
    %3420 = vmatprep.subr.mxu0 0.0
    %3421 = vmatpush1.msra.mxu0 0.0
    %3422 = vmatprep.subr.mxu0 0.0
    %3423 = vmatpush1.msra.mxu0 0.0
    %3424 = vmatprep.subr.mxu0 0.0
    %3425 = vmatpush1.msra.mxu0 0.0
    %3426 = vmatprep.subr.mxu0 0.0
    %3427 = vmatpush1.msra.mxu0 0.0
    %3428 = vmatprep.subr.mxu0 0.0
    %3429 = vmatpush1.msra.mxu0 0.0
    %3430 = vmatprep.subr.mxu0 0.0
    %3431 = vmatpush1.msra.mxu0 0.0
    %3432 = vmatprep.subr.mxu0 0.0
    %3433 = vmatpush1.msra.mxu0 0.0
    %3434 = vmatprep.subr.mxu0 0.0
    %3435 = vmatpush1.msra.mxu0 0.0
    %3436 = vmatprep.subr.mxu0 0.0
    %3437 = vmatpush1.msra.mxu0 0.0
    %3438 = vmatprep.subr.mxu0 0.0
    %3439 = vmatpush1.msra.mxu0 0.0
    %3440 = vmatprep.subr.mxu0 0.0
    %3441 = vmatpush1.msra.mxu0 0.0
    %3442 = vmatprep.subr.mxu0 0.0
    %3443 = vmatpush1.msra.mxu0 0.0
    %3444 = vmatprep.subr.mxu0 0.0
    %3445 = vmatpush1.msra.mxu0 0.0
    %3446 = vmatprep.subr.mxu0 0.0
    %3447 = vmatpush1.msra.mxu0 0.0
    %3448 = vmatprep.subr.mxu0 0.0
    %3449 = vmatpush1.msra.mxu0 0.0
    %3450 = vmatprep.subr.mxu0 0.0
    %3451 = vmatpush1.msra.mxu0 0.0
    %3452 = vmatprep.subr.mxu0 0.0
    %3453 = vmatpush1.msra.mxu0 0.0
    %3454 = vmatprep.subr.mxu0 0.0
    %3455 = vmatpush1.msra.mxu0 0.0
    %3456 = vmatprep.subr.mxu0 0.0
    %3457 = vmatpush1.msra.mxu0 0.0
    %3458 = vmatprep.subr.mxu0 0.0
    %3459 = vmatpush1.msra.mxu0 0.0
    %3460 = vmatprep.subr.mxu0 0.0
    %3461 = vmatpush1.msra.mxu0 0.0
    %3462 = vmatprep.subr.mxu0 0.0
    %3463 = vmatpush1.msra.mxu0 0.0
    %3464 = vmatprep.subr.mxu0 0.0
    %3465 = vmatpush1.msra.mxu0 0.0
    %3466 = vmatprep.subr.mxu0 0.0
    %3467 = vmatpush1.msra.mxu0 0.0
    %3468 = vmatprep.subr.mxu0 0.0
    %3469 = vmatpush1.msra.mxu0 0.0
    %3470 = vmatprep.subr.mxu0 0.0
    %3471 = vmatpush1.msra.mxu0 0.0
    %3472 = vmatprep.subr.mxu0 0.0
    %3473 = vmatpush1.msra.mxu0 0.0
    %3474 = vmatprep.subr.mxu0 0.0
    %3475 = vmatpush1.msra.mxu0 0.0
    %3476 = vmatprep.subr.mxu0 0.0
    %3477 = vmatpush1.msra.mxu0 0.0
    %3478 = vmatprep.mubr.f32.mxu0 0.0
    %3479 = vmatmul.mubr.f32.gmra.mrb[0].mxu0 %v3412
    %v3480 = vpop.f32.mrb[0].mxu0
    %v3481 = vadd.f32 0.0, %v3480
    %v3482 = vpop.f32.mrb[0].mxu0
    %3483 = vdwg.mxu0
    %3486 = vrot.lane.b32.xlu0 %v3101, 8
    %v3487 = vpop.permute.xlu0 %3486
    %3488 = vrot.lane.b32.xlu0 %v3177, 8
    %v3489 = vpop.permute.xlu0 %3488
    %3494 = vrot.lane.b32.xlu0 %v3253, 16
    %v3495 = vpop.permute.xlu0 %3494
    %3496 = vrot.lane.b32.xlu0 %v3329, 16
    %v3497 = vpop.permute.xlu0 %3496
    %3502 = vrot.lane.b32.xlu0 %v3405, 24
    %v3503 = vpop.permute.xlu0 %3502
    %3504 = vrot.lane.b32.xlu0 %v3481, 24
    %v3505 = vpop.permute.xlu0 %3504
    %v3508 = vsel %vm322, %v2949, %v3487
    %v3509 = vsel %vm322, %v3025, %v3489
    %v3510 = vsel %vm1677, %v3508, %v3495
    %v3511 = vsel %vm1677, %v3509, %v3497
    %v3512 = vsel %vm1680, %v3510, %v3503
    %v3513 = vsel %vm1680, %v3511, %v3505
    %v3514 = vld [vmem:[#allocation2 + $0x1b0] sm:$0xff]
    %v3515 = vld [vmem:[#allocation2 + $0x1b8] sm:$0xff]
    %v3516 = vld [vmem:[#allocation2 + $0x1c0] sm:$0xff]
    %v3517 = vld [vmem:[#allocation2 + $0x1c8] sm:$0xff]
    %v3518 = vld [vmem:[#allocation2 + $0x1d0] sm:$0x1]
    %v3519 = vlaneseq
    %v3520 = vshrl.u32 %v3519, 7
    %v3521 = vsub.s32 0, %v3520
    %v3522 = vrot.slane %v3518, %v3521
    %v3524 = vsel %vm149, %v3512, 0
    %v3527 = vsel %vm149, %v3513, 0
    %3529 = vmatprep.subr.mxu0 0.0
    %3530 = vmatpush1.msra.mxu0 %v3514
    %3531 = vmatprep.subr.mxu0 0.0
    %3532 = vmatpush1.msra.mxu0 %v3515
    %3533 = vmatprep.subr.mxu0 0.0
    %3534 = vmatpush1.msra.mxu0 %v3516
    %3535 = vmatprep.subr.mxu0 0.0
    %3536 = vmatpush1.msra.mxu0 %v3517
    %3537 = vmatprep.subr.mxu0 0.0
    %3538 = vmatpush1.msra.mxu0 0.0
    %3539 = vmatprep.subr.mxu0 0.0
    %3540 = vmatpush1.msra.mxu0 0.0
    %3541 = vmatprep.subr.mxu0 0.0
    %3542 = vmatpush1.msra.mxu0 0.0
    %3543 = vmatprep.subr.mxu0 0.0
    %3544 = vmatpush1.msra.mxu0 0.0
    %3545 = vmatprep.subr.mxu0 0.0
    %3546 = vmatpush1.msra.mxu0 0.0
    %3547 = vmatprep.subr.mxu0 0.0
    %3548 = vmatpush1.msra.mxu0 0.0
    %3549 = vmatprep.subr.mxu0 0.0
    %3550 = vmatpush1.msra.mxu0 0.0
    %3551 = vmatprep.subr.mxu0 0.0
    %3552 = vmatpush1.msra.mxu0 0.0
    %3553 = vmatprep.subr.mxu0 0.0
    %3554 = vmatpush1.msra.mxu0 0.0
    %3555 = vmatprep.subr.mxu0 0.0
    %3556 = vmatpush1.msra.mxu0 0.0
    %3557 = vmatprep.subr.mxu0 0.0
    %3558 = vmatpush1.msra.mxu0 0.0
    %3559 = vmatprep.subr.mxu0 0.0
    %3560 = vmatpush1.msra.mxu0 0.0
    %3561 = vmatprep.subr.mxu0 0.0
    %3562 = vmatpush1.msra.mxu0 0.0
    %3563 = vmatprep.subr.mxu0 0.0
    %3564 = vmatpush1.msra.mxu0 0.0
    %3565 = vmatprep.subr.mxu0 0.0
    %3566 = vmatpush1.msra.mxu0 0.0
    %3567 = vmatprep.subr.mxu0 0.0
    %3568 = vmatpush1.msra.mxu0 0.0
    %3569 = vmatprep.subr.mxu0 0.0
    %3570 = vmatpush1.msra.mxu0 0.0
    %3571 = vmatprep.subr.mxu0 0.0
    %3572 = vmatpush1.msra.mxu0 0.0
    %3573 = vmatprep.subr.mxu0 0.0
    %3574 = vmatpush1.msra.mxu0 0.0
    %3575 = vmatprep.subr.mxu0 0.0
    %3576 = vmatpush1.msra.mxu0 0.0
    %3577 = vmatprep.subr.mxu0 0.0
    %3578 = vmatpush1.msra.mxu0 0.0
    %3579 = vmatprep.subr.mxu0 0.0
    %3580 = vmatpush1.msra.mxu0 0.0
    %3581 = vmatprep.subr.mxu0 0.0
    %3582 = vmatpush1.msra.mxu0 0.0
    %3583 = vmatprep.subr.mxu0 0.0
    %3584 = vmatpush1.msra.mxu0 0.0
    %3585 = vmatprep.subr.mxu0 0.0
    %3586 = vmatpush1.msra.mxu0 0.0
    %3587 = vmatprep.subr.mxu0 0.0
    %3588 = vmatpush1.msra.mxu0 0.0
    %3589 = vmatprep.subr.mxu0 0.0
    %3590 = vmatpush1.msra.mxu0 0.0
    %3591 = vmatprep.subr.mxu0 0.0
    %3592 = vmatpush1.msra.mxu0 0.0
    %3593 = vmatprep.mubr.f32.mxu0 0.0
    %3594 = vmatmul.mubr.f32.gmra.mrb[0].mxu0 %v3524
    %v3595 = vpop.f32.mrb[0].mxu0
    %v3596 = vadd.f32 %v3522, %v3595
    %v3597 = vpop.f32.mrb[0].mxu0
    %3598 = vmatprep.mubr.f32.mxu0 0.0
    %3599 = vmatmul.mubr.f32.gmra.mrb[0].mxu0 %v3527
    %v3600 = vpop.f32.mrb[0].mxu0
    %v3601 = vadd.f32 %v3522, %v3600
    %v3602 = vpop.f32.mrb[0].mxu0
    %3603 = vdwg.mxu0
    %v3604 = vadd.f32 %v3596, %v2058
    %v3605 = vadd.f32 %v3601, %v2059
    %v3606 = vld [vmem:[#allocation2 + $0x1d8] sm:$0x1]
    %v3607 = vld [vmem:[#allocation2 + $0x1e0] sm:$0x1]
    %v3608 = vsel %vm149, %v3604, 0.0
    %3609 = vadd.xlane.f32.xlu0 %v3608
    %v3610 = vpop.xlane.xlu0 %3609
    %v3611 = vsel %vm149, %v3605, 0.0
    %3612 = vadd.xlane.f32.xlu0 %v3611
    %v3613 = vpop.xlane.xlu0 %3612
    %v3614 = vmul.f32 %v3610, %v156
    %v3615 = vmul.f32 %v3613, %v156
    %v3616 = vsub.f32 %v3604, %v3614
    %v3617 = vsub.f32 %v3605, %v3615
    %v3618 = vmul.f32 %v3616, %v3616
    %v3619 = vmul.f32 %v3617, %v3617
    %v3620 = vsel %vm149, %v3618, 0.0
    %3621 = vadd.xlane.f32.xlu0 %v3620
    %v3622 = vpop.xlane.xlu0 %3621
    %v3623 = vsel %vm149, %v3619, 0.0
    %3624 = vadd.xlane.f32.xlu0 %v3623
    %v3625 = vpop.xlane.xlu0 %3624
    %v3626 = vmul.f32 %v3622, %v156
    %v3627 = vmul.f32 %v3625, %v156
    %v3628 = vadd.f32 %v3626, 1e-12
    %v3629 = vadd.f32 %v3627, 1e-12
    %v3630 = vrsqrt.pop %v3628
    %v3631 = vrsqrt.pop %v3629
    %v3632 = vmul.f32 %v3616, %v3630
    %v3633 = vmul.f32 %v3617, %v3631
    %v3634 = vlaneseq
    %v3635 = vshrl.u32 %v3634, 7
    %v3636 = vsub.s32 0, %v3635
    %v3637 = vrot.slane %v3606, %v3636
    %v3638 = vmul.f32 %v3632, %v3637
    %v3639 = vmul.f32 %v3633, %v3637
    %v3640 = vlaneseq
    %v3641 = vshrl.u32 %v3640, 7
    %v3642 = vsub.s32 0, %v3641
    %v3643 = vrot.slane %v3607, %v3642
    %v3644 = vadd.f32 %v3638, %v3643
    %v3645 = vadd.f32 %v3639, %v3643
    %v3646 = vld [vmem:[#allocation2 + $0x1e8] sm:$0xff]
    %v3647 = vld [vmem:[#allocation2 + $0x1f0] sm:$0xff]
    %v3648 = vld [vmem:[#allocation2 + $0x1f8] sm:$0xff]
    %v3649 = vld [vmem:[#allocation2 + $0x200] sm:$0xff]
    %v3650 = vld [vmem:[#allocation2 + $0x208] sm:$0x1]
    %v3651 = vlaneseq
    %v3652 = vshrl.u32 %v3651, 7
    %v3653 = vsub.s32 0, %v3652
    %v3654 = vrot.slane %v3650, %v3653
    %v3656 = vsel %vm149, %v3644, 0
    %v3659 = vsel %vm149, %v3645, 0
    %3661 = vmatprep.subr.mxu0 0.0
    %3662 = vmatpush1.msra.mxu0 %v3646
    %3663 = vmatprep.subr.mxu0 0.0
    %3664 = vmatpush1.msra.mxu0 %v3647
    %3665 = vmatprep.subr.mxu0 0.0
    %3666 = vmatpush1.msra.mxu0 %v3648
    %3667 = vmatprep.subr.mxu0 0.0
    %3668 = vmatpush1.msra.mxu0 %v3649
    %3669 = vmatprep.subr.mxu0 0.0
    %3670 = vmatpush1.msra.mxu0 0.0
    %3671 = vmatprep.subr.mxu0 0.0
    %3672 = vmatpush1.msra.mxu0 0.0
    %3673 = vmatprep.subr.mxu0 0.0
    %3674 = vmatpush1.msra.mxu0 0.0
    %3675 = vmatprep.subr.mxu0 0.0
    %3676 = vmatpush1.msra.mxu0 0.0
    %3677 = vmatprep.subr.mxu0 0.0
    %3678 = vmatpush1.msra.mxu0 0.0
    %3679 = vmatprep.subr.mxu0 0.0
    %3680 = vmatpush1.msra.mxu0 0.0
    %3681 = vmatprep.subr.mxu0 0.0
    %3682 = vmatpush1.msra.mxu0 0.0
    %3683 = vmatprep.subr.mxu0 0.0
    %3684 = vmatpush1.msra.mxu0 0.0
    %3685 = vmatprep.subr.mxu0 0.0
    %3686 = vmatpush1.msra.mxu0 0.0
    %3687 = vmatprep.subr.mxu0 0.0
    %3688 = vmatpush1.msra.mxu0 0.0
    %3689 = vmatprep.subr.mxu0 0.0
    %3690 = vmatpush1.msra.mxu0 0.0
    %3691 = vmatprep.subr.mxu0 0.0
    %3692 = vmatpush1.msra.mxu0 0.0
    %3693 = vmatprep.subr.mxu0 0.0
    %3694 = vmatpush1.msra.mxu0 0.0
    %3695 = vmatprep.subr.mxu0 0.0
    %3696 = vmatpush1.msra.mxu0 0.0
    %3697 = vmatprep.subr.mxu0 0.0
    %3698 = vmatpush1.msra.mxu0 0.0
    %3699 = vmatprep.subr.mxu0 0.0
    %3700 = vmatpush1.msra.mxu0 0.0
    %3701 = vmatprep.subr.mxu0 0.0
    %3702 = vmatpush1.msra.mxu0 0.0
    %3703 = vmatprep.subr.mxu0 0.0
    %3704 = vmatpush1.msra.mxu0 0.0
    %3705 = vmatprep.subr.mxu0 0.0
    %3706 = vmatpush1.msra.mxu0 0.0
    %3707 = vmatprep.subr.mxu0 0.0
    %3708 = vmatpush1.msra.mxu0 0.0
    %3709 = vmatprep.subr.mxu0 0.0
    %3710 = vmatpush1.msra.mxu0 0.0
    %3711 = vmatprep.subr.mxu0 0.0
    %3712 = vmatpush1.msra.mxu0 0.0
    %3713 = vmatprep.subr.mxu0 0.0
    %3714 = vmatpush1.msra.mxu0 0.0
    %3715 = vmatprep.subr.mxu0 0.0
    %3716 = vmatpush1.msra.mxu0 0.0
    %3717 = vmatprep.subr.mxu0 0.0
    %3718 = vmatpush1.msra.mxu0 0.0
    %3719 = vmatprep.subr.mxu0 0.0
    %3720 = vmatpush1.msra.mxu0 0.0
    %3721 = vmatprep.subr.mxu0 0.0
    %3722 = vmatpush1.msra.mxu0 0.0
    %3723 = vmatprep.subr.mxu0 0.0
    %3724 = vmatpush1.msra.mxu0 0.0
    %3725 = vmatprep.mubr.f32.mxu0 0.0
    %3726 = vmatmul.mubr.f32.gmra.mrb[0].mxu0 %v3656
    %v3727 = vpop.f32.mrb[0].mxu0
    %v3728 = vadd.f32 %v3654, %v3727
    %v3729 = vpop.f32.mrb[0].mxu0
    %3730 = vmatprep.mubr.f32.mxu0 0.0
    %3731 = vmatmul.mubr.f32.gmra.mrb[0].mxu0 %v3659
    %v3732 = vpop.f32.mrb[0].mxu0
    %v3733 = vadd.f32 %v3654, %v3732
    %v3734 = vpop.f32.mrb[0].mxu0
    %3735 = vdwg.mxu0
    %v3736 = vmul.f32 %v3728, 0.5
    %v3737 = vmul.f32 %v3733, 0.5
    %v3738 = vmul.f32 %v3728, 0.044715
    %v3739 = vmul.f32 %v3733, 0.044715
    %v3740 = vmul.f32 %v3738, %v3728
    %v3741 = vmul.f32 %v3739, %v3733
    %v3742 = vmul.f32 %v3740, %v3728
    %v3743 = vmul.f32 %v3741, %v3733
    %v3744 = vadd.f32 %v3728, %v3742
    %v3745 = vadd.f32 %v3733, %v3743
    %v3746 = vmul.f32 %v3744, 0.7978846
    %v3747 = vmul.f32 %v3745, 0.7978846
    %v3748 = vtanh.pop %v3746
    %v3749 = vtanh.pop %v3747
    %v3750 = vadd.f32 %v3748, 1.0
    %v3751 = vadd.f32 %v3749, 1.0
    %v3752 = vmul.f32 %v3736, %v3750
    %v3753 = vmul.f32 %v3737, %v3751
    %v3754 = vld [vmem:[#allocation2 + $0x210] sm:$0xff]
    %v3755 = vld [vmem:[#allocation2 + $0x218] sm:$0xff]
    %v3756 = vld [vmem:[#allocation2 + $0x220] sm:$0xff]
    %v3757 = vld [vmem:[#allocation2 + $0x228] sm:$0xff]
    %v3758 = vld [vmem:[#allocation2 + $0x230] sm:$0xff]
    %v3759 = vld [vmem:[#allocation2 + $0x238] sm:$0xff]
    %v3760 = vld [vmem:[#allocation2 + $0x240] sm:$0xff]
    %v3761 = vld [vmem:[#allocation2 + $0x248] sm:$0xff]
    %v3762 = vld [vmem:[#allocation2 + $0x250] sm:$0x1]
    %v3763 = vlaneseq
    %v3764 = vshrl.u32 %v3763, 7
    %v3765 = vsub.s32 0, %v3764
    %v3766 = vrot.slane %v3762, %v3765
    %v3768 = vsel %vm1936, %v3752, 0
    %v3771 = vsel %vm1936, %v3753, 0
    %3773 = vmatprep.subr.mxu0 0.0
    %3774 = vmatpush1.msra.mxu0 %v3754
    %3775 = vmatprep.subr.mxu0 0.0
    %3776 = vmatpush1.msra.mxu0 %v3755
    %3777 = vmatprep.subr.mxu0 0.0
    %3778 = vmatpush1.msra.mxu0 %v3756
    %3779 = vmatprep.subr.mxu0 0.0
    %3780 = vmatpush1.msra.mxu0 %v3757
    %3781 = vmatprep.subr.mxu0 0.0
    %3782 = vmatpush1.msra.mxu0 %v3758
    %3783 = vmatprep.subr.mxu0 0.0
    %3784 = vmatpush1.msra.mxu0 %v3759
    %3785 = vmatprep.subr.mxu0 0.0
    %3786 = vmatpush1.msra.mxu0 %v3760
    %3787 = vmatprep.subr.mxu0 0.0
    %3788 = vmatpush1.msra.mxu0 %v3761
    %3789 = vmatprep.subr.mxu0 0.0
    %3790 = vmatpush1.msra.mxu0 0.0
    %3791 = vmatprep.subr.mxu0 0.0
    %3792 = vmatpush1.msra.mxu0 0.0
    %3793 = vmatprep.subr.mxu0 0.0
    %3794 = vmatpush1.msra.mxu0 0.0
    %3795 = vmatprep.subr.mxu0 0.0
    %3796 = vmatpush1.msra.mxu0 0.0
    %3797 = vmatprep.subr.mxu0 0.0
    %3798 = vmatpush1.msra.mxu0 0.0
    %3799 = vmatprep.subr.mxu0 0.0
    %3800 = vmatpush1.msra.mxu0 0.0
    %3801 = vmatprep.subr.mxu0 0.0
    %3802 = vmatpush1.msra.mxu0 0.0
    %3803 = vmatprep.subr.mxu0 0.0
    %3804 = vmatpush1.msra.mxu0 0.0
    %3805 = vmatprep.subr.mxu0 0.0
    %3806 = vmatpush1.msra.mxu0 0.0
    %3807 = vmatprep.subr.mxu0 0.0
    %3808 = vmatpush1.msra.mxu0 0.0
    %3809 = vmatprep.subr.mxu0 0.0
    %3810 = vmatpush1.msra.mxu0 0.0
    %3811 = vmatprep.subr.mxu0 0.0
    %3812 = vmatpush1.msra.mxu0 0.0
    %3813 = vmatprep.subr.mxu0 0.0
    %3814 = vmatpush1.msra.mxu0 0.0
    %3815 = vmatprep.subr.mxu0 0.0
    %3816 = vmatpush1.msra.mxu0 0.0
    %3817 = vmatprep.subr.mxu0 0.0
    %3818 = vmatpush1.msra.mxu0 0.0
    %3819 = vmatprep.subr.mxu0 0.0
    %3820 = vmatpush1.msra.mxu0 0.0
    %3821 = vmatprep.subr.mxu0 0.0
    %3822 = vmatpush1.msra.mxu0 0.0
    %3823 = vmatprep.subr.mxu0 0.0
    %3824 = vmatpush1.msra.mxu0 0.0
    %3825 = vmatprep.subr.mxu0 0.0
    %3826 = vmatpush1.msra.mxu0 0.0
    %3827 = vmatprep.subr.mxu0 0.0
    %3828 = vmatpush1.msra.mxu0 0.0
    %3829 = vmatprep.subr.mxu0 0.0
    %3830 = vmatpush1.msra.mxu0 0.0
    %3831 = vmatprep.subr.mxu0 0.0
    %3832 = vmatpush1.msra.mxu0 0.0
    %3833 = vmatprep.subr.mxu0 0.0
    %3834 = vmatpush1.msra.mxu0 0.0
    %3835 = vmatprep.subr.mxu0 0.0
    %3836 = vmatpush1.msra.mxu0 0.0
    %3837 = vmatprep.mubr.f32.mxu0 0.0
    %3838 = vmatmul.mubr.f32.gmra.mrb[0].mxu0 %v3768
    %v3839 = vpop.f32.mrb[0].mxu0
    %v3840 = vadd.f32 %v3766, %v3839
    %v3841 = vpop.f32.mrb[0].mxu0
    %3842 = vmatprep.mubr.f32.mxu0 0.0
    %3843 = vmatmul.mubr.f32.gmra.mrb[0].mxu0 %v3771
    %v3844 = vpop.f32.mrb[0].mxu0
    %v3845 = vadd.f32 %v3766, %v3844
    %v3846 = vpop.f32.mrb[0].mxu0
    %3847 = vdwg.mxu0
    %v3848 = vadd.f32 %v3840, %v3644
    %v3849 = vadd.f32 %v3845, %v3645
    %v3850 = vld [vmem:[#allocation2 + $0x258] sm:$0x1]
    %v3851 = vld [vmem:[#allocation2 + $0x260] sm:$0x1]
    %v3852 = vsel %vm149, %v3848, 0.0
    %3853 = vadd.xlane.f32.xlu0 %v3852
    %v3854 = vpop.xlane.xlu0 %3853
    %v3855 = vsel %vm149, %v3849, 0.0
    %3856 = vadd.xlane.f32.xlu0 %v3855
    %v3857 = vpop.xlane.xlu0 %3856
    %v3858 = vmul.f32 %v3854, %v156
    %v3859 = vmul.f32 %v3857, %v156
    %v3860 = vsub.f32 %v3848, %v3858
    %v3861 = vsub.f32 %v3849, %v3859
    %v3862 = vmul.f32 %v3860, %v3860
    %v3863 = vmul.f32 %v3861, %v3861
    %v3864 = vsel %vm149, %v3862, 0.0
    %3865 = vadd.xlane.f32.xlu0 %v3864
    %v3866 = vpop.xlane.xlu0 %3865
    %v3867 = vsel %vm149, %v3863, 0.0
    %3868 = vadd.xlane.f32.xlu0 %v3867
    %v3869 = vpop.xlane.xlu0 %3868
    %v3870 = vmul.f32 %v3866, %v156
    %v3871 = vmul.f32 %v3869, %v156
    %v3872 = vadd.f32 %v3870, 1e-12
    %v3873 = vadd.f32 %v3871, 1e-12
    %v3874 = vrsqrt.pop %v3872
    %v3875 = vrsqrt.pop %v3873
    %v3876 = vmul.f32 %v3860, %v3874
    %v3877 = vmul.f32 %v3861, %v3875
    %v3878 = vlaneseq
    %v3879 = vshrl.u32 %v3878, 7
    %v3880 = vsub.s32 0, %v3879
    %v3881 = vrot.slane %v3850, %v3880
    %v3882 = vmul.f32 %v3876, %v3881
    %v3883 = vmul.f32 %v3877, %v3881
    %v3884 = vlaneseq
    %v3885 = vshrl.u32 %v3884, 7
    %v3886 = vsub.s32 0, %v3885
    %v3887 = vrot.slane %v3851, %v3886
    %v3888 = vadd.f32 %v3882, %v3887
    %v3889 = vadd.f32 %v3883, %v3887
    %3890 = vst.msk [vmem:[#allocation5] sm:$0xff] %vm149, %v3888
    %3891 = vst.msk [vmem:[#allocation5 + $0x8] sm:$0xff] %vm149, %v3889
    %v3893 = vrot.slane %v3889, 7
    %vm3895 = vcmask 1040384
    %v3896 = vsel %vm3895, %v3888, %v3893
    %v3897 = vld [vmem:[#allocation2 + $0x268] sm:$0xff]
    %v3898 = vld [vmem:[#allocation2 + $0x270] sm:$0xff]
    %v3899 = vld [vmem:[#allocation2 + $0x278] sm:$0xff]
    %v3900 = vld [vmem:[#allocation2 + $0x280] sm:$0xff]
    %v3901 = vld [vmem:[#allocation2 + $0x288] sm:$0x1]
    %v3902 = vlaneseq
    %v3903 = vshrl.u32 %v3902, 7
    %v3904 = vsub.s32 0, %v3903
    %v3905 = vrot.slane %v3901, %v3904
    %v3907 = vsel %vm149, %v3896, 0
    %3909 = vmatprep.subr.mxu0 0.0
    %3910 = vmatpush1.msra.mxu0 %v3897
    %3911 = vmatprep.subr.mxu0 0.0
    %3912 = vmatpush1.msra.mxu0 %v3898
    %3913 = vmatprep.subr.mxu0 0.0
    %3914 = vmatpush1.msra.mxu0 %v3899
    %3915 = vmatprep.subr.mxu0 0.0
    %3916 = vmatpush1.msra.mxu0 %v3900
    %3917 = vmatprep.subr.mxu0 0.0
    %3918 = vmatpush1.msra.mxu0 0.0
    %3919 = vmatprep.subr.mxu0 0.0
    %3920 = vmatpush1.msra.mxu0 0.0
    %3921 = vmatprep.subr.mxu0 0.0
    %3922 = vmatpush1.msra.mxu0 0.0
    %3923 = vmatprep.subr.mxu0 0.0
    %3924 = vmatpush1.msra.mxu0 0.0
    %3925 = vmatprep.subr.mxu0 0.0
    %3926 = vmatpush1.msra.mxu0 0.0
    %3927 = vmatprep.subr.mxu0 0.0
    %3928 = vmatpush1.msra.mxu0 0.0
    %3929 = vmatprep.subr.mxu0 0.0
    %3930 = vmatpush1.msra.mxu0 0.0
    %3931 = vmatprep.subr.mxu0 0.0
    %3932 = vmatpush1.msra.mxu0 0.0
    %3933 = vmatprep.subr.mxu0 0.0
    %3934 = vmatpush1.msra.mxu0 0.0
    %3935 = vmatprep.subr.mxu0 0.0
    %3936 = vmatpush1.msra.mxu0 0.0
    %3937 = vmatprep.subr.mxu0 0.0
    %3938 = vmatpush1.msra.mxu0 0.0
    %3939 = vmatprep.subr.mxu0 0.0
    %3940 = vmatpush1.msra.mxu0 0.0
    %3941 = vmatprep.subr.mxu0 0.0
    %3942 = vmatpush1.msra.mxu0 0.0
    %3943 = vmatprep.subr.mxu0 0.0
    %3944 = vmatpush1.msra.mxu0 0.0
    %3945 = vmatprep.subr.mxu0 0.0
    %3946 = vmatpush1.msra.mxu0 0.0
    %3947 = vmatprep.subr.mxu0 0.0
    %3948 = vmatpush1.msra.mxu0 0.0
    %3949 = vmatprep.subr.mxu0 0.0
    %3950 = vmatpush1.msra.mxu0 0.0
    %3951 = vmatprep.subr.mxu0 0.0
    %3952 = vmatpush1.msra.mxu0 0.0
    %3953 = vmatprep.subr.mxu0 0.0
    %3954 = vmatpush1.msra.mxu0 0.0
    %3955 = vmatprep.subr.mxu0 0.0
    %3956 = vmatpush1.msra.mxu0 0.0
    %3957 = vmatprep.subr.mxu0 0.0
    %3958 = vmatpush1.msra.mxu0 0.0
    %3959 = vmatprep.subr.mxu0 0.0
    %3960 = vmatpush1.msra.mxu0 0.0
    %3961 = vmatprep.subr.mxu0 0.0
    %3962 = vmatpush1.msra.mxu0 0.0
    %3963 = vmatprep.subr.mxu0 0.0
    %3964 = vmatpush1.msra.mxu0 0.0
    %3965 = vmatprep.subr.mxu0 0.0
    %3966 = vmatpush1.msra.mxu0 0.0
    %3967 = vmatprep.subr.mxu0 0.0
    %3968 = vmatpush1.msra.mxu0 0.0
    %3969 = vmatprep.subr.mxu0 0.0
    %3970 = vmatpush1.msra.mxu0 0.0
    %3971 = vmatprep.subr.mxu0 0.0
    %3972 = vmatpush1.msra.mxu0 0.0
    %3973 = vmatprep.mubr.f32.mxu0 0.0
    %3974 = vmatmul.mubr.f32.gmra.mrb[0].mxu0 %v3907
    %v3975 = vpop.f32.mrb[0].mxu0
    %v3976 = vadd.f32 %v3905, %v3975
    %v3977 = vpop.f32.mrb[0].mxu0
    %3978 = vdwg.mxu0
    %v3979 = vtanh.pop %v3976
    %vm3980 = vcmask 254976
    %3981 = vst.msk [vmem:[#allocation6] sm:$0x3] %vm3980, %v3979
    // Predicated region
    $region18: #{bert_with_pooler_forward.1} parent=1 // pred_check
      _
    $region19: #{bert_with_pooler_forward.1} parent=1 // pred_check_branch
      %3983 = sbr.rel (0) target = $region21
    $region20: #{bert_with_pooler_forward.1} parent=1 // pred_region
      %s3985 = ssub.s32 256, 256
      %3986 = vsyncadd [#allocation4], %s3985
      %s3987 = sshll.u32 [#allocation5], 4
      %s3988 = int_to_ptr.vmem [resolvable:$true] %s3987
      %3993 = dma.vmem_to_hbm [thread:$0]  %s3988, 256, %s3, [#allocation4], 128, 128, 8
    $region21: #{bert_with_pooler_forward.1} parent=1 // pred_fallthru
      _
    // Predicated region
    $region22: #{bert_with_pooler_forward.1} parent=1 // pred_check
      _
    $region23: #{bert_with_pooler_forward.1} parent=1 // pred_check_branch
      %3995 = sbr.rel (0) target = $region25
    $region24: #{bert_with_pooler_forward.1} parent=1 // pred_region
      %s3997 = ssub.s32 32, 32
      %3998 = vsyncadd [#allocation7], %s3997
      %s4000 = sshll.u32 [#allocation6], 4
      %s4001 = int_to_ptr.vmem [resolvable:$true] %s4000
      %4003 = dma.vmem_to_hbm [thread:$0]  %s4001, 32, %s4, [#allocation7]
    $region25: #{bert_with_pooler_forward.1} parent=1 // pred_fallthru
      _
    // Predicated region
    $region26: #{bert_with_pooler_forward.1} parent=1 // pred_check
      _
    $region27: #{bert_with_pooler_forward.1} parent=1 // pred_check_branch
      %4005 = sbr.rel (0) target = $region29
    $region28: #{bert_with_pooler_forward.1} parent=1 // pred_region
      %4006 = dma.done [#allocation4], 256
    $region29: #{bert_with_pooler_forward.1} parent=1 // pred_fallthru
      _
    // Predicated region
    $region30: #{bert_with_pooler_forward.1} parent=1 // pred_check
      _
    $region31: #{bert_with_pooler_forward.1} parent=1 // pred_check_branch
      %4008 = sbr.rel (0) target = $region33
    $region32: #{bert_with_pooler_forward.1} parent=1 // pred_region
      %4009 = dma.done [#allocation7], 32
    $region33: #{bert_with_pooler_forward.1} parent=1 // pred_fallthru
      _
    %4010 = vsyncpa [#allocation3], 1
    %4011 = vsyncpa [#allocation4], 1
    %4012 = vsyncpa [#allocation7], 1

</llo_original>
